<compile_context>
chip_gen: v7x
topology: tpu7x:2x2x1
jax: 0.10.0
libtpu: 0.0.40
codegen_flags: <defaults>
</compile_context>

<pallas_src>
import jax
import jax.numpy as jnp
from jax.experimental import pallas as pl
from jax.experimental.pallas import tpu as pltpu


def _round_up(v, m):
    return ((v + m - 1) // m) * m


def _vmem_capacity_bytes():
    """Physical VMEM per TensorCore (128 MiB v5e/v6e, 64 MiB v7x)."""
    try:
        cap = int(pltpu.get_tpu_info().vmem_capacity_bytes)
        if cap > 0:
            return cap
    except Exception:
        pass
    return 64 * 1024 * 1024  # conservative fallback (v7x-sized)


def _default_fuse_col_parity(C):
    """Column-parity fusion widens matmul N to 2*C: a win only when that fills an
    otherwise half-empty 256-wide MXU (v6e/v7x with C <= 128).  On v5e (128-wide
    MXU) or for C >= 256 it is pure extra FLOPs, so keep it off."""
    if 2 * C > 256:
        return False
    try:
        kind = jax.devices()[0].device_kind.lower()
    except Exception:
        return False
    return ("v6" in kind) or ("v7" in kind)


def _single_buffered_spec(block_shape, index_map):
    """Constant-index operands gain nothing from double buffering; reclaim the
    second VMEM buffer (falls back to a plain spec on older Pallas versions)."""
    try:
        return pl.BlockSpec(block_shape, index_map, pipeline_mode=pl.Buffered(1))
    except (AttributeError, TypeError):
        return pl.BlockSpec(block_shape, index_map)


def _pick_row_tile(N, H, W, C, comp_bytes, out_bytes, fuse, budget_bytes):
    """Largest row tile (divisor of H) whose honest VMEM working set (pipeline
    buffers + in-kernel temporaries, with lane/sublane padding) fits the budget."""
    lane_c = _round_up(C, 128)
    lane_o = _round_up(2 * C, 128)
    sl_wp2 = _round_up(W + 2, 8)
    sl_w = _round_up(W, 8)
    n_taps, w_out_lanes = (12, lane_o) if fuse else (16, lane_c)

    def footprint(th):
        main_in = 2 * th * sl_wp2 * lane_c * comp_bytes            # double-buffered main rows
        halo_in = 2 * 2 * sl_wp2 * lane_c * comp_bytes             # 2 halo rows, double-buffered
        out_buf = 2 * th * 2 * sl_w * lane_o * out_bytes           # double-buffered output tile
        weights = n_taps * lane_c * w_out_lanes * comp_bytes       # single-buffered constants
        shifted = 3 * (th + 2) * sl_w * lane_c * comp_bytes        # column-shifted tile copies
        accs = 2 * _round_up(th * W, 8) * lane_o * 4               # f32 accumulators in flight
        ycast = _round_up(th * W, 8) * lane_o * out_bytes          # cast/store staging
        return main_in + halo_in + out_buf + weights + shifted + accs + ycast

    divisors = [d for d in range(1, H + 1) if H % d == 0]
    fitting = [d for d in divisors if footprint(d) <= budget_bytes] or [divisors[0]]
    th = fitting[-1]
    # Keep >= 2 grid steps when possible so megacore parts have work.
    if N * (H // th) < 2:
        multi = [d for d in fitting if H // d >= 2]
        if multi:
            th = multi[-1]
    return th


def _make_upconv_kernel(fuse_col_parity):
    def kernel(xm_ref, h0_ref, h1_ref, w_ref, b_ref, o_ref):
        # xm_ref: (1, TH, W+2, C)    main rows of the zero-padded original image
        # h0/h1 : (1, 1, W+2, C)     the two halo rows just below the main block
        # w_ref : (12, C, 2C) fused | (16, C, C) unfused   pre-combined parity/tap weights
        # b_ref : (1, 2C) fused | (1, C) unfused           f32 bias
        # o_ref : (1, TH, 2, W, 2C)  row parity as its own dim, column parity in lanes
        th = xm_ref.shape[1]
        w = xm_ref.shape[2] - 2
        c = xm_ref.shape[3]
        n_out = o_ref.shape[4]

        xm = xm_ref[0]                                   # (TH, W+2, C)
        h0 = h0_ref[0]                                   # (1,  W+2, C)
        h1 = h1_ref[0]                                   # (1,  W+2, C)
        bias = b_ref[...].astype(jnp.float32)

        # Three column-shifted copies of the (TH+2)-row tile — the only relayout
        # copies in the kernel.  The 9 row windows below are free outer-dim views
        # (the reshape is a no-op when W % 8 == 0).
        xs = [jnp.concatenate(
                  [xm[:, b0:b0 + w, :], h0[:, b0:b0 + w, :], h1[:, b0:b0 + w, :]],
                  axis=0)
              for b0 in range(3)]                        # 3 x (TH+2, W, C)
        win = [[xs[b0][a:a + th].reshape(th * w, c) for b0 in range(3)]
               for a in range(3)]

        for p in range(2):                               # output-row parity
            if fuse_col_parity:
                # 6 matmuls of (TH*W, C) x (C, 2C): both column parities per push.
                acc = None
                for r in range(2):
                    for b0 in range(3):
                        d = jnp.dot(win[p + r][b0], w_ref[(p * 2 + r) * 3 + b0],
                                    preferred_element_type=jnp.float32)
                        acc = d if acc is None else acc + d
                y = acc + bias                           # (TH*W, 2C)
            else:
                # 8 matmuls of (TH*W, C) x (C, C); lane-concat the two parities.
                halves = []
                for q in range(2):                       # output-col parity
                    acc = None
                    for r in range(2):
                        for s in range(2):
                            d = jnp.dot(win[p + r][q + s],
                                        w_ref[((p * 2 + q) * 2 + r) * 2 + s],
                                        preferred_element_type=jnp.float32)
                            acc = d if acc is None else acc + d
                    halves.append(acc + bias)            # (TH*W, C)
                y = jnp.concatenate(halves, axis=-1)     # (TH*W, 2C)
            o_ref[0, :, p, :, :] = y.astype(o_ref.dtype).reshape(th, w, n_out)

    return kernel


def upsample_block_forward(x_nchw, weight_oihw, bias, *,
                           compute_dtype=jnp.bfloat16, out_dtype=None,
                           row_tile=None, fuse_col_parity=None):
    """UpSampleBlock.forward: nearest-x2 upsample + Conv2d(C, C, 3, 1, 1). NCHW in/out."""
    N, C, H, W = x_nchw.shape
    assert weight_oihw.shape == (C, C, 3, 3), weight_oihw.shape
    if out_dtype is None:
        out_dtype = x_nchw.dtype            # pass bf16 here to halve the 4x output writeback
    if fuse_col_parity is None:
        fuse_col_parity = _default_fuse_col_parity(C)

    comp_b = jnp.dtype(compute_dtype).itemsize
    out_b = jnp.dtype(out_dtype).itemsize
    vmem_cap = _vmem_capacity_bytes()
    if row_tile is None:
        row_tile = _pick_row_tile(N, H, W, C, comp_b, out_b, fuse_col_parity,
                                  budget_bytes=int(0.45 * vmem_cap))
    if H % row_tile != 0:
        raise ValueError(f"row_tile={row_tile} must divide H={H}")
    TH, T = row_tile, H // row_tile

    # ---- weight prep: pre-combine the 3x3 taps into 4 parity phases x 2x2 taps ----
    # A[parity, tap, conv_tap]: which 3x3 row(/col) taps collapse onto each of the
    # two distinct original-image rows(/cols) touched by that output parity.
    A = jnp.array([[[1., 0., 0.], [0., 1., 1.]],
                   [[1., 1., 0.], [0., 0., 1.]]], jnp.float32)
    w_hwio = jnp.transpose(weight_oihw, (2, 3, 1, 0)).astype(jnp.float32)   # (3,3,Cin,Cout)
    wc = jnp.einsum('prh,qsw,hwio->pqrsio', A, A, w_hwio)                   # (2,2,2,2,C,C)
    if fuse_col_parity:
        # Fold column parity q into the matmul N axis: wq[p, r, b][:, q*C:(q+1)*C].
        wq = jnp.zeros((2, 2, 3, C, 2 * C), jnp.float32)
        for p in range(2):
            for r in range(2):
                for b0 in range(3):
                    for q in range(2):
                        s = b0 - q
                        if 0 <= s <= 1:
                            wq = wq.at[p, r, b0, :, q * C:(q + 1) * C].set(wc[p, q, r, s])
        w_in = wq.reshape(12, C, 2 * C).astype(compute_dtype)
        b_in = jnp.concatenate([bias, bias]).astype(jnp.float32).reshape(1, 2 * C)
        n_taps, n_wout = 12, 2 * C
    else:
        w_in = wc.reshape(16, C, C).astype(compute_dtype)
        b_in = bias.astype(jnp.float32).reshape(1, C)
        n_taps, n_wout = 16, C

    # ---- input glue: NCHW -> NHWC + 1px zero 'same' pad (one fused XLA pass). ----
    # No channel padding and no halo gather: the kernel reads this array once via
    # the main blocks, plus 2 re-read halo rows per row tile.
    x = jnp.transpose(x_nchw, (0, 2, 3, 1))
    xp = jnp.pad(x, ((0, 0), (1, 1), (1, 1), (0, 0))).astype(compute_dtype)  # (N,H+2,W+2,C)

    kernel = _make_upconv_kernel(fuse_col_parity)
    out = pl.pallas_call(
        kernel,
        out_shape=jax.ShapeDtypeStruct((N, H, 2, W, 2 * C), out_dtype),
        grid_spec=pltpu.PrefetchScalarGridSpec(
            num_scalar_prefetch=0,
            grid=(N, T),
            in_specs=[
                # main TH rows of the padded image for this (batch, row tile)
                pl.BlockSpec((1, TH, W + 2, C), lambda n, t: (n, t, 0, 0)),
                # the two halo rows just below the main block (1-row blocks =>
                # block index == row index, so overlapping windows need no gather)
                pl.BlockSpec((1, 1, W + 2, C), lambda n, t: (n, (t + 1) * TH, 0, 0)),
                pl.BlockSpec((1, 1, W + 2, C), lambda n, t: (n, (t + 1) * TH + 1, 0, 0)),
                # constant operands: single-buffered
                _single_buffered_spec((n_taps, C, n_wout), lambda n, t: (0, 0, 0)),
                _single_buffered_spec((1, n_wout), lambda n, t: (0, 0)),
            ],
            out_specs=pl.BlockSpec((1, TH, 2, W, 2 * C), lambda n, t: (n, t, 0, 0, 0)),
        ),
        compiler_params=pltpu.CompilerParams(
            dimension_semantics=("parallel", "parallel"),
            vmem_limit_bytes=int(min(vmem_cap, max(32 * 2 ** 20, 0.75 * vmem_cap)))),
    )(xp, xp, xp, w_in, b_in)

    # (N, H, 2, W, 2C) -> (N, 2H, 2W, C) is a contiguous (free) reshape; only the
    # final NCHW transpose touches HBM again.
    out = out.reshape(N, 2 * H, 2 * W, C)
    return jnp.transpose(out, (0, 3, 1, 2))


if __name__ == "__main__":
    key = jax.random.PRNGKey(0)
    N, C, H, W = 2, 4, 16, 16
    kx, kw, kb = jax.random.split(key, 3)

    x = jax.random.normal(kx, (N, C, H, W), jnp.float32)

    # Deterministic parameter init (nn.Conv2d default init scheme shapes).
    fan_in = C * 3 * 3
    bound = 1.0 / (fan_in ** 0.5)
    weight = jax.random.uniform(kw, (C, C, 3, 3), jnp.float32, -bound, bound)  # (Cout,Cin,kh,kw)
    bias = jax.random.uniform(kb, (C,), jnp.float32, -bound, bound)

    # Reference: XLA conv on the explicitly upsampled image (module semantics).
    x_up = jnp.repeat(jnp.repeat(x, 2, axis=2), 2, axis=3)
    y_ref = jax.lax.conv_general_dilated(
        x_up, weight, window_strides=(1, 1), padding="SAME",
        dimension_numbers=("NCHW", "OIHW", "NCHW")) + bias.reshape(1, C, 1, 1)

    # f32-compute path, explicit 2-row-tile grid (exercises the halo blocks), both
    # matmul layouts: tight check of the parity-phase algebra.
    for fuse in (False, True):
        y32 = jax.block_until_ready(upsample_block_forward(
            x, weight, bias, compute_dtype=jnp.float32, row_tile=8,
            fuse_col_parity=fuse))
        assert y32.shape == (N, C, 2 * H, 2 * W), y32.shape
        assert jnp.allclose(y32, y_ref, atol=1e-3, rtol=1e-3), \
            f"f32 path mismatch vs XLA reference (fuse={fuse})"

    # Default bf16-MXU path, auto row tile / auto fusion (looser tolerance: bf16
    # inputs on the MXU, f32 accumulation).
    y16 = jax.block_until_ready(upsample_block_forward(x, weight, bias))
    assert y16.shape == (N, C, 2 * H, 2 * W), y16.shape
    assert jnp.allclose(y16, y_ref, atol=5e-2, rtol=5e-2), \
        "bf16 path mismatch vs XLA reference"

    print("KERNEL_OK")
</pallas_src>

<mosaic_0001>
module attributes {stable_mosaic.version = 11 : i64} {
  func.func @kernel(%arg0: i32, %arg1: i32, %arg2: memref<1x8x18x4xf32, #tpu.memory_space<vmem>>, %arg3: memref<1x1x18x4xf32, #tpu.memory_space<vmem>>, %arg4: memref<1x1x18x4xf32, #tpu.memory_space<vmem>>, %arg5: memref<16x4x4xf32, #tpu.memory_space<vmem>>, %arg6: memref<1x4xf32, #tpu.memory_space<vmem>>, %arg7: memref<1x8x2x16x8xf32, #tpu.memory_space<vmem>>) attributes {dimension_semantics = [#tpu.dimension_semantics<parallel>, #tpu.dimension_semantics<parallel>], iteration_bounds = array<i64: 2, 2>, scalar_prefetch = 0 : i64, scratch_operands = 0 : i64, tpu.core_type = #tpu.core_type<tc>, window_params = [{transform_indices = @transform_0, window_bounds = array<i64: 1, 8, 18, 4>}, {transform_indices = @transform_1, window_bounds = array<i64: 1, 1, 18, 4>}, {transform_indices = @transform_2, window_bounds = array<i64: 1, 1, 18, 4>}, {pipeline_mode = #tpu.pipeline_mode<synchronous>, transform_indices = @transform_3, window_bounds = array<i64: 16, 4, 4>}, {pipeline_mode = #tpu.pipeline_mode<synchronous>, transform_indices = @transform_4, window_bounds = array<i64: 1, 4>}, {transform_indices = @transform_5, window_bounds = array<i64: 1, 8, 2, 16, 8>}]} {
    %c0 = arith.constant 0 : index
    %c0_0 = arith.constant 0 : index
    %c0_1 = arith.constant 0 : index
    %c0_2 = arith.constant 0 : index
    %0 = vector.load %arg2[%c0, %c0_0, %c0_1, %c0_2] : memref<1x8x18x4xf32, #tpu.memory_space<vmem>>, vector<1x8x18x4xf32>
    %1 = vector.shape_cast %0 : vector<1x8x18x4xf32> to vector<8x18x4xf32>
    %c0_3 = arith.constant 0 : index
    %c0_4 = arith.constant 0 : index
    %c0_5 = arith.constant 0 : index
    %c0_6 = arith.constant 0 : index
    %2 = vector.load %arg3[%c0_3, %c0_4, %c0_5, %c0_6] : memref<1x1x18x4xf32, #tpu.memory_space<vmem>>, vector<1x1x18x4xf32>
    %3 = vector.shape_cast %2 : vector<1x1x18x4xf32> to vector<1x18x4xf32>
    %c0_7 = arith.constant 0 : index
    %c0_8 = arith.constant 0 : index
    %c0_9 = arith.constant 0 : index
    %c0_10 = arith.constant 0 : index
    %4 = vector.load %arg4[%c0_7, %c0_8, %c0_9, %c0_10] : memref<1x1x18x4xf32, #tpu.memory_space<vmem>>, vector<1x1x18x4xf32>
    %5 = vector.shape_cast %4 : vector<1x1x18x4xf32> to vector<1x18x4xf32>
    %c0_11 = arith.constant 0 : index
    %c0_12 = arith.constant 0 : index
    %6 = vector.load %arg6[%c0_11, %c0_12] : memref<1x4xf32, #tpu.memory_space<vmem>>, vector<1x4xf32>
    %7 = vector.extract_strided_slice %1 {offsets = [0, 0, 0], sizes = [8, 16, 4], strides = [1, 1, 1]} : vector<8x18x4xf32> to vector<8x16x4xf32>
    %8 = vector.extract_strided_slice %3 {offsets = [0, 0, 0], sizes = [1, 16, 4], strides = [1, 1, 1]} : vector<1x18x4xf32> to vector<1x16x4xf32>
    %9 = vector.extract_strided_slice %5 {offsets = [0, 0, 0], sizes = [1, 16, 4], strides = [1, 1, 1]} : vector<1x18x4xf32> to vector<1x16x4xf32>
    %10 = tpu.concatenate %7, %8, %9 in 0 : vector<8x16x4xf32>, vector<1x16x4xf32>, vector<1x16x4xf32> -> vector<10x16x4xf32>
    %11 = vector.extract_strided_slice %1 {offsets = [0, 1, 0], sizes = [8, 16, 4], strides = [1, 1, 1]} : vector<8x18x4xf32> to vector<8x16x4xf32>
    %12 = vector.extract_strided_slice %3 {offsets = [0, 1, 0], sizes = [1, 16, 4], strides = [1, 1, 1]} : vector<1x18x4xf32> to vector<1x16x4xf32>
    %13 = vector.extract_strided_slice %5 {offsets = [0, 1, 0], sizes = [1, 16, 4], strides = [1, 1, 1]} : vector<1x18x4xf32> to vector<1x16x4xf32>
    %14 = tpu.concatenate %11, %12, %13 in 0 : vector<8x16x4xf32>, vector<1x16x4xf32>, vector<1x16x4xf32> -> vector<10x16x4xf32>
    %15 = vector.extract_strided_slice %1 {offsets = [0, 2, 0], sizes = [8, 16, 4], strides = [1, 1, 1]} : vector<8x18x4xf32> to vector<8x16x4xf32>
    %16 = vector.extract_strided_slice %3 {offsets = [0, 2, 0], sizes = [1, 16, 4], strides = [1, 1, 1]} : vector<1x18x4xf32> to vector<1x16x4xf32>
    %17 = vector.extract_strided_slice %5 {offsets = [0, 2, 0], sizes = [1, 16, 4], strides = [1, 1, 1]} : vector<1x18x4xf32> to vector<1x16x4xf32>
    %18 = tpu.concatenate %15, %16, %17 in 0 : vector<8x16x4xf32>, vector<1x16x4xf32>, vector<1x16x4xf32> -> vector<10x16x4xf32>
    %19 = vector.extract_strided_slice %10 {offsets = [0, 0, 0], sizes = [8, 16, 4], strides = [1, 1, 1]} : vector<10x16x4xf32> to vector<8x16x4xf32>
    %20 = vector.shape_cast %19 : vector<8x16x4xf32> to vector<128x4xf32>
    %21 = vector.extract_strided_slice %14 {offsets = [0, 0, 0], sizes = [8, 16, 4], strides = [1, 1, 1]} : vector<10x16x4xf32> to vector<8x16x4xf32>
    %22 = vector.shape_cast %21 : vector<8x16x4xf32> to vector<128x4xf32>
    %23 = vector.extract_strided_slice %18 {offsets = [0, 0, 0], sizes = [8, 16, 4], strides = [1, 1, 1]} : vector<10x16x4xf32> to vector<8x16x4xf32>
    %24 = vector.shape_cast %23 : vector<8x16x4xf32> to vector<128x4xf32>
    %25 = vector.extract_strided_slice %10 {offsets = [1, 0, 0], sizes = [8, 16, 4], strides = [1, 1, 1]} : vector<10x16x4xf32> to vector<8x16x4xf32>
    %26 = vector.shape_cast %25 : vector<8x16x4xf32> to vector<128x4xf32>
    %27 = vector.extract_strided_slice %14 {offsets = [1, 0, 0], sizes = [8, 16, 4], strides = [1, 1, 1]} : vector<10x16x4xf32> to vector<8x16x4xf32>
    %28 = vector.shape_cast %27 : vector<8x16x4xf32> to vector<128x4xf32>
    %29 = vector.extract_strided_slice %18 {offsets = [1, 0, 0], sizes = [8, 16, 4], strides = [1, 1, 1]} : vector<10x16x4xf32> to vector<8x16x4xf32>
    %30 = vector.shape_cast %29 : vector<8x16x4xf32> to vector<128x4xf32>
    %31 = vector.extract_strided_slice %10 {offsets = [2, 0, 0], sizes = [8, 16, 4], strides = [1, 1, 1]} : vector<10x16x4xf32> to vector<8x16x4xf32>
    %32 = vector.shape_cast %31 : vector<8x16x4xf32> to vector<128x4xf32>
    %33 = vector.extract_strided_slice %14 {offsets = [2, 0, 0], sizes = [8, 16, 4], strides = [1, 1, 1]} : vector<10x16x4xf32> to vector<8x16x4xf32>
    %34 = vector.shape_cast %33 : vector<8x16x4xf32> to vector<128x4xf32>
    %35 = vector.extract_strided_slice %18 {offsets = [2, 0, 0], sizes = [8, 16, 4], strides = [1, 1, 1]} : vector<10x16x4xf32> to vector<8x16x4xf32>
    %36 = vector.shape_cast %35 : vector<8x16x4xf32> to vector<128x4xf32>
    %c0_13 = arith.constant 0 : index
    %c0_14 = arith.constant 0 : index
    %c0_15 = arith.constant 0 : index
    %37 = vector.load %arg5[%c0_13, %c0_14, %c0_15] : memref<16x4x4xf32, #tpu.memory_space<vmem>>, vector<1x4x4xf32>
    %38 = vector.shape_cast %37 : vector<1x4x4xf32> to vector<4x4xf32>
    %cst = arith.constant dense<0.000000e+00> : vector<128x4xf32>
    %39 = tpu.matmul %20, %38, %cst {dimension_numbers = #tpu.dot_dimension_numbers<[1], [0], [0], [1], [0, 0, 1, 1], [], []>} : vector<128x4xf32>, vector<4x4xf32>, vector<128x4xf32> -> vector<128x4xf32>
    %c1 = arith.constant 1 : index
    %c0_16 = arith.constant 0 : index
    %c0_17 = arith.constant 0 : index
    %40 = vector.load %arg5[%c1, %c0_16, %c0_17] : memref<16x4x4xf32, #tpu.memory_space<vmem>>, vector<1x4x4xf32>
    %41 = vector.shape_cast %40 : vector<1x4x4xf32> to vector<4x4xf32>
    %cst_18 = arith.constant dense<0.000000e+00> : vector<128x4xf32>
    %42 = tpu.matmul %22, %41, %cst_18 {dimension_numbers = #tpu.dot_dimension_numbers<[1], [0], [0], [1], [0, 0, 1, 1], [], []>} : vector<128x4xf32>, vector<4x4xf32>, vector<128x4xf32> -> vector<128x4xf32>
    %43 = arith.addf %39, %42 : vector<128x4xf32>
    %c2 = arith.constant 2 : index
    %c0_19 = arith.constant 0 : index
    %c0_20 = arith.constant 0 : index
    %44 = vector.load %arg5[%c2, %c0_19, %c0_20] : memref<16x4x4xf32, #tpu.memory_space<vmem>>, vector<1x4x4xf32>
    %45 = vector.shape_cast %44 : vector<1x4x4xf32> to vector<4x4xf32>
    %cst_21 = arith.constant dense<0.000000e+00> : vector<128x4xf32>
    %46 = tpu.matmul %26, %45, %cst_21 {dimension_numbers = #tpu.dot_dimension_numbers<[1], [0], [0], [1], [0, 0, 1, 1], [], []>} : vector<128x4xf32>, vector<4x4xf32>, vector<128x4xf32> -> vector<128x4xf32>
    %47 = arith.addf %43, %46 : vector<128x4xf32>
    %c3 = arith.constant 3 : index
    %c0_22 = arith.constant 0 : index
    %c0_23 = arith.constant 0 : index
    %48 = vector.load %arg5[%c3, %c0_22, %c0_23] : memref<16x4x4xf32, #tpu.memory_space<vmem>>, vector<1x4x4xf32>
    %49 = vector.shape_cast %48 : vector<1x4x4xf32> to vector<4x4xf32>
    %cst_24 = arith.constant dense<0.000000e+00> : vector<128x4xf32>
    %50 = tpu.matmul %28, %49, %cst_24 {dimension_numbers = #tpu.dot_dimension_numbers<[1], [0], [0], [1], [0, 0, 1, 1], [], []>} : vector<128x4xf32>, vector<4x4xf32>, vector<128x4xf32> -> vector<128x4xf32>
    %51 = arith.addf %47, %50 : vector<128x4xf32>
    %52 = vector.broadcast %6 : vector<1x4xf32> to vector<128x4xf32>
    %53 = arith.addf %51, %52 : vector<128x4xf32>
    %c4 = arith.constant 4 : index
    %c0_25 = arith.constant 0 : index
    %c0_26 = arith.constant 0 : index
    %54 = vector.load %arg5[%c4, %c0_25, %c0_26] : memref<16x4x4xf32, #tpu.memory_space<vmem>>, vector<1x4x4xf32>
    %55 = vector.shape_cast %54 : vector<1x4x4xf32> to vector<4x4xf32>
    %cst_27 = arith.constant dense<0.000000e+00> : vector<128x4xf32>
    %56 = tpu.matmul %22, %55, %cst_27 {dimension_numbers = #tpu.dot_dimension_numbers<[1], [0], [0], [1], [0, 0, 1, 1], [], []>} : vector<128x4xf32>, vector<4x4xf32>, vector<128x4xf32> -> vector<128x4xf32>
    %c5 = arith.constant 5 : index
    %c0_28 = arith.constant 0 : index
    %c0_29 = arith.constant 0 : index
    %57 = vector.load %arg5[%c5, %c0_28, %c0_29] : memref<16x4x4xf32, #tpu.memory_space<vmem>>, vector<1x4x4xf32>
    %58 = vector.shape_cast %57 : vector<1x4x4xf32> to vector<4x4xf32>
    %cst_30 = arith.constant dense<0.000000e+00> : vector<128x4xf32>
    %59 = tpu.matmul %24, %58, %cst_30 {dimension_numbers = #tpu.dot_dimension_numbers<[1], [0], [0], [1], [0, 0, 1, 1], [], []>} : vector<128x4xf32>, vector<4x4xf32>, vector<128x4xf32> -> vector<128x4xf32>
    %60 = arith.addf %56, %59 : vector<128x4xf32>
    %c6 = arith.constant 6 : index
    %c0_31 = arith.constant 0 : index
    %c0_32 = arith.constant 0 : index
    %61 = vector.load %arg5[%c6, %c0_31, %c0_32] : memref<16x4x4xf32, #tpu.memory_space<vmem>>, vector<1x4x4xf32>
    %62 = vector.shape_cast %61 : vector<1x4x4xf32> to vector<4x4xf32>
    %cst_33 = arith.constant dense<0.000000e+00> : vector<128x4xf32>
    %63 = tpu.matmul %28, %62, %cst_33 {dimension_numbers = #tpu.dot_dimension_numbers<[1], [0], [0], [1], [0, 0, 1, 1], [], []>} : vector<128x4xf32>, vector<4x4xf32>, vector<128x4xf32> -> vector<128x4xf32>
    %64 = arith.addf %60, %63 : vector<128x4xf32>
    %c7 = arith.constant 7 : index
    %c0_34 = arith.constant 0 : index
    %c0_35 = arith.constant 0 : index
    %65 = vector.load %arg5[%c7, %c0_34, %c0_35] : memref<16x4x4xf32, #tpu.memory_space<vmem>>, vector<1x4x4xf32>
    %66 = vector.shape_cast %65 : vector<1x4x4xf32> to vector<4x4xf32>
    %cst_36 = arith.constant dense<0.000000e+00> : vector<128x4xf32>
    %67 = tpu.matmul %30, %66, %cst_36 {dimension_numbers = #tpu.dot_dimension_numbers<[1], [0], [0], [1], [0, 0, 1, 1], [], []>} : vector<128x4xf32>, vector<4x4xf32>, vector<128x4xf32> -> vector<128x4xf32>
    %68 = arith.addf %64, %67 : vector<128x4xf32>
    %69 = vector.broadcast %6 : vector<1x4xf32> to vector<128x4xf32>
    %70 = arith.addf %68, %69 : vector<128x4xf32>
    %71 = tpu.concatenate %53, %70 in 1 : vector<128x4xf32>, vector<128x4xf32> -> vector<128x8xf32>
    %72 = vector.shape_cast %71 : vector<128x8xf32> to vector<8x16x8xf32>
    %c0_37 = arith.constant 0 : index
    %c0_38 = arith.constant 0 : index
    %c0_39 = arith.constant 0 : index
    %c0_40 = arith.constant 0 : index
    %c0_41 = arith.constant 0 : index
    %73 = vector.load %arg7[%c0_37, %c0_38, %c0_39, %c0_40, %c0_41] : memref<1x8x2x16x8xf32, #tpu.memory_space<vmem>>, vector<1x8x1x16x8xf32>
    %74 = vector.shape_cast %73 : vector<1x8x1x16x8xf32> to vector<8x16x8xf32>
    %75 = vector.shape_cast %72 : vector<8x16x8xf32> to vector<1x8x1x16x8xf32>
    tpu.vector_store %arg7[%c0_37, %c0_38, %c0_39, %c0_40, %c0_41], %75 {strides = array<i32>} : memref<1x8x2x16x8xf32, #tpu.memory_space<vmem>>, vector<1x8x1x16x8xf32>,
    %c8 = arith.constant 8 : index
    %c0_42 = arith.constant 0 : index
    %c0_43 = arith.constant 0 : index
    %76 = vector.load %arg5[%c8, %c0_42, %c0_43] : memref<16x4x4xf32, #tpu.memory_space<vmem>>, vector<1x4x4xf32>
    %77 = vector.shape_cast %76 : vector<1x4x4xf32> to vector<4x4xf32>
    %cst_44 = arith.constant dense<0.000000e+00> : vector<128x4xf32>
    %78 = tpu.matmul %26, %77, %cst_44 {dimension_numbers = #tpu.dot_dimension_numbers<[1], [0], [0], [1], [0, 0, 1, 1], [], []>} : vector<128x4xf32>, vector<4x4xf32>, vector<128x4xf32> -> vector<128x4xf32>
    %c9 = arith.constant 9 : index
    %c0_45 = arith.constant 0 : index
    %c0_46 = arith.constant 0 : index
    %79 = vector.load %arg5[%c9, %c0_45, %c0_46] : memref<16x4x4xf32, #tpu.memory_space<vmem>>, vector<1x4x4xf32>
    %80 = vector.shape_cast %79 : vector<1x4x4xf32> to vector<4x4xf32>
    %cst_47 = arith.constant dense<0.000000e+00> : vector<128x4xf32>
    %81 = tpu.matmul %28, %80, %cst_47 {dimension_numbers = #tpu.dot_dimension_numbers<[1], [0], [0], [1], [0, 0, 1, 1], [], []>} : vector<128x4xf32>, vector<4x4xf32>, vector<128x4xf32> -> vector<128x4xf32>
    %82 = arith.addf %78, %81 : vector<128x4xf32>
    %c10 = arith.constant 10 : index
    %c0_48 = arith.constant 0 : index
    %c0_49 = arith.constant 0 : index
    %83 = vector.load %arg5[%c10, %c0_48, %c0_49] : memref<16x4x4xf32, #tpu.memory_space<vmem>>, vector<1x4x4xf32>
    %84 = vector.shape_cast %83 : vector<1x4x4xf32> to vector<4x4xf32>
    %cst_50 = arith.constant dense<0.000000e+00> : vector<128x4xf32>
    %85 = tpu.matmul %32, %84, %cst_50 {dimension_numbers = #tpu.dot_dimension_numbers<[1], [0], [0], [1], [0, 0, 1, 1], [], []>} : vector<128x4xf32>, vector<4x4xf32>, vector<128x4xf32> -> vector<128x4xf32>
    %86 = arith.addf %82, %85 : vector<128x4xf32>
    %c11 = arith.constant 11 : index
    %c0_51 = arith.constant 0 : index
    %c0_52 = arith.constant 0 : index
    %87 = vector.load %arg5[%c11, %c0_51, %c0_52] : memref<16x4x4xf32, #tpu.memory_space<vmem>>, vector<1x4x4xf32>
    %88 = vector.shape_cast %87 : vector<1x4x4xf32> to vector<4x4xf32>
    %cst_53 = arith.constant dense<0.000000e+00> : vector<128x4xf32>
    %89 = tpu.matmul %34, %88, %cst_53 {dimension_numbers = #tpu.dot_dimension_numbers<[1], [0], [0], [1], [0, 0, 1, 1], [], []>} : vector<128x4xf32>, vector<4x4xf32>, vector<128x4xf32> -> vector<128x4xf32>
    %90 = arith.addf %86, %89 : vector<128x4xf32>
    %91 = vector.broadcast %6 : vector<1x4xf32> to vector<128x4xf32>
    %92 = arith.addf %90, %91 : vector<128x4xf32>
    %c12 = arith.constant 12 : index
    %c0_54 = arith.constant 0 : index
    %c0_55 = arith.constant 0 : index
    %93 = vector.load %arg5[%c12, %c0_54, %c0_55] : memref<16x4x4xf32, #tpu.memory_space<vmem>>, vector<1x4x4xf32>
    %94 = vector.shape_cast %93 : vector<1x4x4xf32> to vector<4x4xf32>
    %cst_56 = arith.constant dense<0.000000e+00> : vector<128x4xf32>
    %95 = tpu.matmul %28, %94, %cst_56 {dimension_numbers = #tpu.dot_dimension_numbers<[1], [0], [0], [1], [0, 0, 1, 1], [], []>} : vector<128x4xf32>, vector<4x4xf32>, vector<128x4xf32> -> vector<128x4xf32>
    %c13 = arith.constant 13 : index
    %c0_57 = arith.constant 0 : index
    %c0_58 = arith.constant 0 : index
    %96 = vector.load %arg5[%c13, %c0_57, %c0_58] : memref<16x4x4xf32, #tpu.memory_space<vmem>>, vector<1x4x4xf32>
    %97 = vector.shape_cast %96 : vector<1x4x4xf32> to vector<4x4xf32>
    %cst_59 = arith.constant dense<0.000000e+00> : vector<128x4xf32>
    %98 = tpu.matmul %30, %97, %cst_59 {dimension_numbers = #tpu.dot_dimension_numbers<[1], [0], [0], [1], [0, 0, 1, 1], [], []>} : vector<128x4xf32>, vector<4x4xf32>, vector<128x4xf32> -> vector<128x4xf32>
    %99 = arith.addf %95, %98 : vector<128x4xf32>
    %c14 = arith.constant 14 : index
    %c0_60 = arith.constant 0 : index
    %c0_61 = arith.constant 0 : index
    %100 = vector.load %arg5[%c14, %c0_60, %c0_61] : memref<16x4x4xf32, #tpu.memory_space<vmem>>, vector<1x4x4xf32>
    %101 = vector.shape_cast %100 : vector<1x4x4xf32> to vector<4x4xf32>
    %cst_62 = arith.constant dense<0.000000e+00> : vector<128x4xf32>
    %102 = tpu.matmul %34, %101, %cst_62 {dimension_numbers = #tpu.dot_dimension_numbers<[1], [0], [0], [1], [0, 0, 1, 1], [], []>} : vector<128x4xf32>, vector<4x4xf32>, vector<128x4xf32> -> vector<128x4xf32>
    %103 = arith.addf %99, %102 : vector<128x4xf32>
    %c15 = arith.constant 15 : index
    %c0_63 = arith.constant 0 : index
    %c0_64 = arith.constant 0 : index
    %104 = vector.load %arg5[%c15, %c0_63, %c0_64] : memref<16x4x4xf32, #tpu.memory_space<vmem>>, vector<1x4x4xf32>
    %105 = vector.shape_cast %104 : vector<1x4x4xf32> to vector<4x4xf32>
    %cst_65 = arith.constant dense<0.000000e+00> : vector<128x4xf32>
    %106 = tpu.matmul %36, %105, %cst_65 {dimension_numbers = #tpu.dot_dimension_numbers<[1], [0], [0], [1], [0, 0, 1, 1], [], []>} : vector<128x4xf32>, vector<4x4xf32>, vector<128x4xf32> -> vector<128x4xf32>
    %107 = arith.addf %103, %106 : vector<128x4xf32>
    %108 = vector.broadcast %6 : vector<1x4xf32> to vector<128x4xf32>
    %109 = arith.addf %107, %108 : vector<128x4xf32>
    %110 = tpu.concatenate %92, %109 in 1 : vector<128x4xf32>, vector<128x4xf32> -> vector<128x8xf32>
    %111 = vector.shape_cast %110 : vector<128x8xf32> to vector<8x16x8xf32>
    %c0_66 = arith.constant 0 : index
    %c0_67 = arith.constant 0 : index
    %c1_68 = arith.constant 1 : index
    %c0_69 = arith.constant 0 : index
    %c0_70 = arith.constant 0 : index
    %112 = vector.load %arg7[%c0_66, %c0_67, %c1_68, %c0_69, %c0_70] : memref<1x8x2x16x8xf32, #tpu.memory_space<vmem>>, vector<1x8x1x16x8xf32>
    %113 = vector.shape_cast %112 : vector<1x8x1x16x8xf32> to vector<8x16x8xf32>
    %114 = vector.shape_cast %111 : vector<8x16x8xf32> to vector<1x8x1x16x8xf32>
    tpu.vector_store %arg7[%c0_66, %c0_67, %c1_68, %c0_69, %c0_70], %114 {strides = array<i32>} : memref<1x8x2x16x8xf32, #tpu.memory_space<vmem>>, vector<1x8x1x16x8xf32>,
    return
  }
  func.func @transform_0(%arg0: i32, %arg1: i32) -> (i32, i32, i32, i32) {
    %c0_i32 = arith.constant 0 : i32
    %c0_i32_0 = arith.constant 0 : i32
    %c0_i32_1 = arith.constant 0 : i32
    return %arg0, %arg1, %c0_i32, %c0_i32_0 : i32, i32, i32, i32
  }
  func.func @transform_1(%arg0: i32, %arg1: i32) -> (i32, i32, i32, i32) {
    %c1_i32 = arith.constant 1 : i32
    %0 = arith.addi %arg1, %c1_i32 : i32
    %c8_i32 = arith.constant 8 : i32
    %1 = arith.muli %0, %c8_i32 : i32
    %c0_i32 = arith.constant 0 : i32
    %c0_i32_0 = arith.constant 0 : i32
    %c0_i32_1 = arith.constant 0 : i32
    return %arg0, %1, %c0_i32, %c0_i32_0 : i32, i32, i32, i32
  }
  func.func @transform_2(%arg0: i32, %arg1: i32) -> (i32, i32, i32, i32) {
    %c1_i32 = arith.constant 1 : i32
    %0 = arith.addi %arg1, %c1_i32 : i32
    %c8_i32 = arith.constant 8 : i32
    %1 = arith.muli %0, %c8_i32 : i32
    %c1_i32_0 = arith.constant 1 : i32
    %2 = arith.addi %1, %c1_i32_0 : i32
    %c0_i32 = arith.constant 0 : i32
    %c0_i32_1 = arith.constant 0 : i32
    %c0_i32_2 = arith.constant 0 : i32
    return %arg0, %2, %c0_i32, %c0_i32_1 : i32, i32, i32, i32
  }
  func.func @transform_3(%arg0: i32, %arg1: i32) -> (i32, i32, i32) {
    %c0_i32 = arith.constant 0 : i32
    %c0_i32_0 = arith.constant 0 : i32
    %c0_i32_1 = arith.constant 0 : i32
    %c0_i32_2 = arith.constant 0 : i32
    return %c0_i32, %c0_i32_0, %c0_i32_1 : i32, i32, i32
  }
  func.func @transform_4(%arg0: i32, %arg1: i32) -> (i32, i32) {
    %c0_i32 = arith.constant 0 : i32
    %c0_i32_0 = arith.constant 0 : i32
    %c0_i32_1 = arith.constant 0 : i32
    return %c0_i32, %c0_i32_0 : i32, i32
  }
  func.func @transform_5(%arg0: i32, %arg1: i32) -> (i32, i32, i32, i32, i32) {
    %c0_i32 = arith.constant 0 : i32
    %c0_i32_0 = arith.constant 0 : i32
    %c0_i32_1 = arith.constant 0 : i32
    %c0_i32_2 = arith.constant 0 : i32
    return %arg0, %arg1, %c0_i32, %c0_i32_0, %c0_i32_1 : i32, i32, i32, i32, i32
  }
}

</mosaic_0001>

<llo_original>
// kernel: tpu_custom_call.1
$region0: #{tpu_custom_call.1}
  #allocation0 [shape = 'u32[]', space=smem, size = 0x4, offset = 0x4, fixed_abs, tag = 'smem constant byte address 0x4 - core index']
  #allocation1 [shape = 'u32[144,128]{1,0:T(1,128)}', space=vmem, size = 0x12000, scoped, tag = 'internal scratch']
  %s0 = inlined_call_operand.vmem [shape: f32[2,18,18,4], index: 0, kind: input, shape index: {}]
  %s1 = inlined_call_operand.vmem [shape: f32[2,18,18,4], index: 1, kind: input, shape index: {}]
  %s2 = inlined_call_operand.vmem [shape: f32[2,18,18,4], index: 2, kind: input, shape index: {}]
  %s3 = inlined_call_operand.vmem [shape: f32[16,4,4], index: 3, kind: input, shape index: {}]
  %s4 = inlined_call_operand.vmem [shape: f32[1,4], index: 4, kind: input, shape index: {}]
  %s5 = inlined_call_operand.vmem [shape: f32[2,16,2,16,8], index: 5, kind: output, shape index: {}]
  %s6 = sld [smem:[#allocation0]]
  $region53: #{tpu_custom_call.1} parent=0
    _
  %s8 = ssub.s32 1, %s6
  %s9 = scalar_select 0, %s8, %s6
  loop: start=0, step=1, limit=6
  $region2: #{tpu_custom_call.1} parent=0 // loop_pre_header
    _
  $region3: #{tpu_custom_call.1} parent=0 // loop_header
    %s11 = sphi 0, %s15
    %p12 = scmp.ge.s32.totalorder %s11, 6
    %s18 = sphi 0, %s30
    %s19 = sphi 0, %s26
    %s20 = sphi 0, %s18
    %s21 = sphi 0, %s19
    %s22 = sphi 0, %s20
    %s23 = sphi 0, %s21
    %s35 = sphi 0, %s37
    %s38 = sphi 0, %s35
    %s39 = sphi 0, %s38
    %s55 = sphi 0, %s39
    %s67 = sphi 0, %s69
    %s70 = sphi 0, %s67
    %s71 = sphi 0, %s70
    %s87 = sphi 0, %s71
    %s101 = sphi 0, %s103
    %s104 = sphi 0, %s101
    %s105 = sphi 0, %s104
    %s121 = sphi 0, %s105
    %s125 = sphi 0, %s125
    %s127 = sphi 0, %s125
    %s128 = sphi 0, %s127
    %s142 = sphi 0, %s128
    %s146 = sphi 0, %s146
    %s148 = sphi 0, %s146
    %s149 = sphi 0, %s148
    %s163 = sphi 0, %s149
    %s171 = sphi 0, %s173
    %s174 = sphi 0, %s171
    %s175 = sphi 0, %s174
    %s191 = sphi 0, %s175
  $region4: #{tpu_custom_call.1} parent=0 // loop_header_branch
    %14 = sbr.rel (%p12) target = $region8
  $region5: #{tpu_custom_call.1} parent=0 // loop_body
    %s16 = ssub.s32 %s11, 1
    %s17 = ssub.s32 %s11, 2
    %s24 = sadd.s32 1, %s19
    %p25 = scmp.ge.s32.totalorder %s24, 2
    %s26 = scalar_select %p25, 0, %s24
    %s27 = sadd.s32 1, %s18
    %s28 = scalar_select %p25, %s27, %s18
    %p29 = scmp.ge.s32.totalorder %s28, 2
    %s30 = scalar_select %p29, 0, %s28
    %s31 = ssub.s32 %s18, %s30
    %s32 = ssub.s32 %s19, %s26
    %s33 = sor.u32 %s31, %s32
    %p34 = scmp.eq.s32.totalorder %s33, 0
    %s36 = sadd.s32 %s35, 1
    %s37 = scalar_select %p34, %s35, %s36
    %p40 = pneg %p34
    %p41 = scmp.eq.s32.totalorder %s11, 3
    %p42 = por %p40, %p41
    %p43 = scmp.ne.s32.totalorder %s35, %s38
    %p44 = scmp.eq.s32.totalorder %s11, 0
    %p45 = por %p43, %p44
    %p46 = scmp.ne.s32.totalorder %s35, %s38
    %p47 = scmp.eq.s32.totalorder %s16, 3
    %p48 = por %p46, %p47
    %p49 = scmp.ne.s32.totalorder %s38, %s39
    %p50 = scmp.eq.s32.totalorder %s16, 0
    %p51 = por %p49, %p50
    %p52 = scmp.ne.s32.totalorder %s38, %s39
    %p53 = scmp.eq.s32.totalorder %s17, 3
    %p54 = por %p52, %p53
    %p56 = scmp.ne.s32.totalorder %s39, %s55
    %p57 = scmp.eq.s32.totalorder %s17, 0
    %p58 = por %p56, %p57
    %s59 = sadd.s32 %s19, 1
    %s60 = smul.u32 %s59, 8
    %s61 = sadd.s32 %s26, 1
    %s62 = smul.u32 %s61, 8
    %s63 = ssub.s32 %s18, %s30
    %s64 = ssub.s32 %s60, %s62
    %s65 = sor.u32 %s63, %s64
    %p66 = scmp.eq.s32.totalorder %s65, 0
    %s68 = sadd.s32 %s67, 1
    %s69 = scalar_select %p66, %s67, %s68
    %p72 = pneg %p66
    %p73 = scmp.eq.s32.totalorder %s11, 3
    %p74 = por %p72, %p73
    %p75 = scmp.ne.s32.totalorder %s67, %s70
    %p76 = scmp.eq.s32.totalorder %s11, 0
    %p77 = por %p75, %p76
    %p78 = scmp.ne.s32.totalorder %s67, %s70
    %p79 = scmp.eq.s32.totalorder %s16, 3
    %p80 = por %p78, %p79
    %p81 = scmp.ne.s32.totalorder %s70, %s71
    %p82 = scmp.eq.s32.totalorder %s16, 0
    %p83 = por %p81, %p82
    %p84 = scmp.ne.s32.totalorder %s70, %s71
    %p85 = scmp.eq.s32.totalorder %s17, 3
    %p86 = por %p84, %p85
    %p88 = scmp.ne.s32.totalorder %s71, %s87
    %p89 = scmp.eq.s32.totalorder %s17, 0
    %p90 = por %p88, %p89
    %s91 = sadd.s32 %s19, 1
    %s92 = smul.u32 %s91, 8
    %s93 = sadd.s32 %s92, 1
    %s94 = sadd.s32 %s26, 1
    %s95 = smul.u32 %s94, 8
    %s96 = sadd.s32 %s95, 1
    %s97 = ssub.s32 %s18, %s30
    %s98 = ssub.s32 %s93, %s96
    %s99 = sor.u32 %s97, %s98
    %p100 = scmp.eq.s32.totalorder %s99, 0
    %s102 = sadd.s32 %s101, 1
    %s103 = scalar_select %p100, %s101, %s102
    %p106 = pneg %p100
    %p107 = scmp.eq.s32.totalorder %s11, 3
    %p108 = por %p106, %p107
    %p109 = scmp.ne.s32.totalorder %s101, %s104
    %p110 = scmp.eq.s32.totalorder %s11, 0
    %p111 = por %p109, %p110
    %p112 = scmp.ne.s32.totalorder %s101, %s104
    %p113 = scmp.eq.s32.totalorder %s16, 3
    %p114 = por %p112, %p113
    %p115 = scmp.ne.s32.totalorder %s104, %s105
    %p116 = scmp.eq.s32.totalorder %s16, 0
    %p117 = por %p115, %p116
    %p118 = scmp.ne.s32.totalorder %s104, %s105
    %p119 = scmp.eq.s32.totalorder %s17, 3
    %p120 = por %p118, %p119
    %p122 = scmp.ne.s32.totalorder %s105, %s121
    %p123 = scmp.eq.s32.totalorder %s17, 0
    %p124 = por %p122, %p123
    %s126 = sadd.s32 %s125, 1
    %p129 = scmp.eq.s32.totalorder %s11, 3
    %p130 = scmp.ne.s32.totalorder %s125, %s127
    %p131 = scmp.eq.s32.totalorder %s11, 0
    %p132 = por %p130, %p131
    %p133 = scmp.ne.s32.totalorder %s125, %s127
    %p134 = scmp.eq.s32.totalorder %s16, 3
    %p135 = por %p133, %p134
    %p136 = scmp.ne.s32.totalorder %s127, %s128
    %p137 = scmp.eq.s32.totalorder %s16, 0
    %p138 = por %p136, %p137
    %p139 = scmp.ne.s32.totalorder %s127, %s128
    %p140 = scmp.eq.s32.totalorder %s17, 3
    %p141 = por %p139, %p140
    %p143 = scmp.ne.s32.totalorder %s128, %s142
    %p144 = scmp.eq.s32.totalorder %s17, 0
    %p145 = por %p143, %p144
    %s147 = sadd.s32 %s146, 1
    %p150 = scmp.eq.s32.totalorder %s11, 3
    %p151 = scmp.ne.s32.totalorder %s146, %s148
    %p152 = scmp.eq.s32.totalorder %s11, 0
    %p153 = por %p151, %p152
    %p154 = scmp.ne.s32.totalorder %s146, %s148
    %p155 = scmp.eq.s32.totalorder %s16, 3
    %p156 = por %p154, %p155
    %p157 = scmp.ne.s32.totalorder %s148, %s149
    %p158 = scmp.eq.s32.totalorder %s16, 0
    %p159 = por %p157, %p158
    %p160 = scmp.ne.s32.totalorder %s148, %s149
    %p161 = scmp.eq.s32.totalorder %s17, 3
    %p162 = por %p160, %p161
    %p164 = scmp.ne.s32.totalorder %s149, %s163
    %p165 = scmp.eq.s32.totalorder %s17, 0
    %p166 = por %p164, %p165
    %s167 = ssub.s32 %s18, %s30
    %s168 = ssub.s32 %s19, %s26
    %s169 = sor.u32 %s167, %s168
    %p170 = scmp.eq.s32.totalorder %s169, 0
    %s172 = sadd.s32 %s171, 1
    %s173 = scalar_select %p170, %s171, %s172
    %p176 = pneg %p170
    %p177 = scmp.eq.s32.totalorder %s11, 3
    %p178 = por %p176, %p177
    %p179 = scmp.ne.s32.totalorder %s171, %s174
    %p180 = scmp.eq.s32.totalorder %s11, 0
    %p181 = por %p179, %p180
    %p182 = scmp.ne.s32.totalorder %s171, %s174
    %p183 = scmp.eq.s32.totalorder %s16, 3
    %p184 = por %p182, %p183
    %p185 = scmp.ne.s32.totalorder %s174, %s175
    %p186 = scmp.eq.s32.totalorder %s16, 0
    %p187 = por %p185, %p186
    %p188 = scmp.ne.s32.totalorder %s174, %s175
    %p189 = scmp.eq.s32.totalorder %s17, 3
    %p190 = por %p188, %p189
    %p192 = scmp.ne.s32.totalorder %s175, %s191
    %p193 = scmp.eq.s32.totalorder %s17, 0
    %p194 = por %p192, %p193
    %p195 = scmp.le.s32.totalorder 1, %s11
    %p196 = scmp.lt.s32.totalorder %s11, 5
    %p197 = pnand %p195, %p196
    %p198 = pneg %p197
    // Predicated region
    $region9: #{tpu_custom_call.1} parent=5 // pred_check
      _
    $region10: #{tpu_custom_call.1} parent=5 // pred_check_branch
      %200 = sbr.rel (%p197) target = $region12
    $region11: #{tpu_custom_call.1} parent=5 // pred_region
      %s201 = ssub.s32 %s11, 1
      // Predicated region
      $region13: #{tpu_custom_call.1} parent=11 // pred_check
        %p202 = pneg %p138
      $region14: #{tpu_custom_call.1} parent=11 // pred_check_branch
        %204 = sbr.rel (%p202) target = $region16
      $region15: #{tpu_custom_call.1} parent=11 // pred_region
        _
      $region16: #{tpu_custom_call.1} parent=11 // pred_fallthru
        _
      // Predicated region
      $region17: #{tpu_custom_call.1} parent=11 // pred_check
        %p205 = pneg %p159
      $region18: #{tpu_custom_call.1} parent=11 // pred_check_branch
        %207 = sbr.rel (%p205) target = $region20
      $region19: #{tpu_custom_call.1} parent=11 // pred_region
        _
      $region20: #{tpu_custom_call.1} parent=11 // pred_fallthru
        _
    $region12: #{tpu_custom_call.1} parent=5 // pred_fallthru
      _
    %p208 = scmp.lt.s32.totalorder %s11, 4
    // Predicated region
    $region21: #{tpu_custom_call.1} parent=5 // pred_check
      %p209 = pneg %p208
    $region22: #{tpu_custom_call.1} parent=5 // pred_check_branch
      %211 = sbr.rel (%p209) target = $region24
    $region23: #{tpu_custom_call.1} parent=5 // pred_region
      // Predicated region
      $region25: #{tpu_custom_call.1} parent=23 // pred_check
        %p212 = pneg %p45
      $region26: #{tpu_custom_call.1} parent=23 // pred_check_branch
        %214 = sbr.rel (%p212) target = $region28
      $region27: #{tpu_custom_call.1} parent=23 // pred_region
        %s215 = smul.u32 8, %s19
        %s216 = ssub.s32 18, %s215
        %p217 = scmp.lt.s32.totalorder %s216, 8
        %s218 = scalar_select %p217, %s216, 8
        %s219 = smul.u32 128, %s218
        %s220 = smul.u32 %s219, 3
        %p221 = scmp.lt.s32.totalorder %s18, 1
        %s222 = scalar_select %p221, %s18, 1
        %p223 = scmp.lt.s32.totalorder %s215, 17
        %s224 = scalar_select %p223, %s215, 17
        %s225 = smul.addr %s224, 3
        %s226 = smul.addr %s222, 54
        %s227 = sadd.s32 %s225, %s226
        %s228 = smul.addr %s227, 8
        %s229 = scalar_lea.vmem %s0, %s228
        %s230 = smul.u32 8, %s19
        %s231 = ssub.s32 18, %s230
        %p232 = scmp.lt.s32.totalorder %s231, 8
        %s233 = scalar_select %p232, %s231, 8
        %s234 = smul.u32 128, %s233
        %s235 = smul.u32 %s234, 3
      $region28: #{tpu_custom_call.1} parent=23 // pred_fallthru
        _
      // Predicated region
      $region29: #{tpu_custom_call.1} parent=23 // pred_check
        %p236 = pneg %p77
      $region30: #{tpu_custom_call.1} parent=23 // pred_check_branch
        %238 = sbr.rel (%p236) target = $region32
      $region31: #{tpu_custom_call.1} parent=23 // pred_region
        %s239 = sadd.s32 %s19, 1
        %s240 = smul.u32 %s239, 8
        %p241 = scmp.lt.s32.totalorder %s18, 1
        %s242 = scalar_select %p241, %s18, 1
        %p243 = scmp.lt.s32.totalorder %s240, 17
        %s244 = scalar_select %p243, %s240, 17
        %s245 = smul.addr %s244, 3
        %s246 = smul.addr %s242, 54
        %s247 = sadd.s32 %s245, %s246
        %s248 = smul.addr %s247, 8
        %s249 = scalar_lea.vmem %s1, %s248
        %s250 = sadd.s32 %s19, 1
        %s251 = smul.u32 %s250, 8
      $region32: #{tpu_custom_call.1} parent=23 // pred_fallthru
        _
      // Predicated region
      $region33: #{tpu_custom_call.1} parent=23 // pred_check
        %p252 = pneg %p111
      $region34: #{tpu_custom_call.1} parent=23 // pred_check_branch
        %254 = sbr.rel (%p252) target = $region36
      $region35: #{tpu_custom_call.1} parent=23 // pred_region
        %s255 = sadd.s32 %s19, 1
        %s256 = smul.u32 %s255, 8
        %s257 = sadd.s32 %s256, 1
        %p258 = scmp.lt.s32.totalorder %s18, 1
        %s259 = scalar_select %p258, %s18, 1
        %p260 = scmp.lt.s32.totalorder %s257, 17
        %s261 = scalar_select %p260, %s257, 17
        %s262 = smul.addr %s261, 3
        %s263 = smul.addr %s259, 54
        %s264 = sadd.s32 %s262, %s263
        %s265 = smul.addr %s264, 8
        %s266 = scalar_lea.vmem %s2, %s265
        %s267 = sadd.s32 %s19, 1
        %s268 = smul.u32 %s267, 8
        %s269 = sadd.s32 %s268, 1
      $region36: #{tpu_custom_call.1} parent=23 // pred_fallthru
        _
    $region24: #{tpu_custom_call.1} parent=5 // pred_fallthru
      _
    %p270 = scmp.le.s32.totalorder 1, %s11
    %p271 = scmp.lt.s32.totalorder %s11, 5
    %p272 = pnand %p270, %p271
    %p273 = pneg %p272
    // Predicated region
    $region37: #{tpu_custom_call.1} parent=5 // pred_check
      _
    $region38: #{tpu_custom_call.1} parent=5 // pred_check_branch
      %275 = sbr.rel (%p272) target = $region40
    $region39: #{tpu_custom_call.1} parent=5 // pred_region
      %s276 = ssub.s32 %s11, 1
      %s277 = smul.u32 8, %s21
      %s278 = ssub.s32 18, %s277
      %p279 = scmp.lt.s32.totalorder %s278, 8
      %s280 = scalar_select %p279, %s278, 8
      %s281 = smul.u32 128, %s280
      %s282 = smul.u32 %s281, 3
      %p283 = scmp.lt.s32.totalorder %s20, 1
      %s284 = scalar_select %p283, %s20, 1
      %p285 = scmp.lt.s32.totalorder %s277, 17
      %s286 = scalar_select %p285, %s277, 17
      %s287 = smul.addr %s286, 3
      %s288 = smul.addr %s284, 54
      %s289 = sadd.s32 %s287, %s288
      %s290 = smul.addr %s289, 8
      %s291 = scalar_lea.vmem %s0, %s290
      %p292 = pneg %p51
      %p293 = pneg %p48
      %s294 = sadd.s32 %s21, 1
      %s295 = smul.u32 %s294, 8
      %p296 = scmp.lt.s32.totalorder %s20, 1
      %s297 = scalar_select %p296, %s20, 1
      %p298 = scmp.lt.s32.totalorder %s295, 17
      %s299 = scalar_select %p298, %s295, 17
      %s300 = smul.addr %s299, 3
      %s301 = smul.addr %s297, 54
      %s302 = sadd.s32 %s300, %s301
      %s303 = smul.addr %s302, 8
      %s304 = scalar_lea.vmem %s1, %s303
      %p305 = pneg %p83
      %p306 = pneg %p80
      %s307 = sadd.s32 %s21, 1
      %s308 = smul.u32 %s307, 8
      %s309 = sadd.s32 %s308, 1
      %p310 = scmp.lt.s32.totalorder %s20, 1
      %s311 = scalar_select %p310, %s20, 1
      %p312 = scmp.lt.s32.totalorder %s309, 17
      %s313 = scalar_select %p312, %s309, 17
      %s314 = smul.addr %s313, 3
      %s315 = smul.addr %s311, 54
      %s316 = sadd.s32 %s314, %s315
      %s317 = smul.addr %s316, 8
      %s318 = scalar_lea.vmem %s2, %s317
      %p319 = pneg %p117
      %p320 = pneg %p114
      %p321 = pneg %p138
      %p322 = pneg %p135
      %p323 = pneg %p159
      %p324 = pneg %p156
      %p325 = pneg %p187
      %p326 = pneg %p184
      %s327 = smul.u32 8, %s21
      %p328 = scmp.lt.s32.totalorder %s20, 1
      %s329 = scalar_select %p328, %s20, 1
      %p330 = scmp.lt.s32.totalorder %s327, 15
      %s331 = scalar_select %p330, %s327, 15
      %s332 = smul.addr %s331, 4
      %s333 = smul.addr %s329, 64
      %s334 = sadd.s32 %s332, %s333
      %s335 = smul.addr %s334, 8
      %s336 = scalar_lea.vmem %s5, %s335
      %s337 = smul.u32 8, %s21
      %s338 = ssub.s32 18, %s337
      %p339 = scmp.lt.s32.totalorder %s338, 8
      %s340 = scalar_select %p339, %s338, 8
      %s341 = smul.u32 128, %s340
      %s342 = smul.u32 %s341, 3
      %p343 = scmp.lt.s32.totalorder %s20, 1
      %s344 = scalar_select %p343, %s20, 1
      %p345 = scmp.lt.s32.totalorder %s337, 17
      %s346 = scalar_select %p345, %s337, 17
      %s347 = smul.addr %s346, 3
      %s348 = smul.addr %s344, 54
      %s349 = sadd.s32 %s347, %s348
      %s350 = smul.addr %s349, 8
      %s351 = scalar_lea.vmem %s0, %s350
      %s352 = smul.u32 8, %s21
      %s353 = ssub.s32 18, %s352
      %p354 = scmp.lt.s32.totalorder %s353, 8
      %s355 = scalar_select %p354, %s353, 8
      %s356 = smul.u32 128, %s355
      %s357 = smul.u32 %s356, 3
      %s358 = sadd.s32 %s21, 1
      %s359 = smul.u32 %s358, 8
      %p360 = scmp.lt.s32.totalorder %s20, 1
      %s361 = scalar_select %p360, %s20, 1
      %p362 = scmp.lt.s32.totalorder %s359, 17
      %s363 = scalar_select %p362, %s359, 17
      %s364 = smul.addr %s363, 3
      %s365 = smul.addr %s361, 54
      %s366 = sadd.s32 %s364, %s365
      %s367 = smul.addr %s366, 8
      %s368 = scalar_lea.vmem %s1, %s367
      %s369 = sadd.s32 %s21, 1
      %s370 = smul.u32 %s369, 8
      %s371 = sadd.s32 %s21, 1
      %s372 = smul.u32 %s371, 8
      %s373 = sadd.s32 %s372, 1
      %p374 = scmp.lt.s32.totalorder %s20, 1
      %s375 = scalar_select %p374, %s20, 1
      %p376 = scmp.lt.s32.totalorder %s373, 17
      %s377 = scalar_select %p376, %s373, 17
      %s378 = smul.addr %s377, 3
      %s379 = smul.addr %s375, 54
      %s380 = sadd.s32 %s378, %s379
      %s381 = smul.addr %s380, 8
      %s382 = scalar_lea.vmem %s2, %s381
      %s383 = sadd.s32 %s21, 1
      %s384 = smul.u32 %s383, 8
      %s385 = sadd.s32 %s384, 1
      %s386 = smul.u32 8, %s21
      %p387 = scmp.lt.s32.totalorder %s20, 1
      %s388 = scalar_select %p387, %s20, 1
      %p389 = scmp.lt.s32.totalorder %s386, 15
      %s390 = scalar_select %p389, %s386, 15
      %s391 = smul.addr %s390, 4
      %s392 = smul.addr %s388, 64
      %s393 = sadd.s32 %s391, %s392
      %s394 = smul.addr %s393, 8
      %s395 = scalar_lea.vmem %s5, %s394
      %s396 = smul.u32 8, %s21
      %v397 = vld [vmem:[%s351] sm:$0xff]
      %v398 = vld [vmem:[%s351 + $0x8] sm:$0xff]
      %v399 = vld [vmem:[%s351 + $0x10] sm:$0x3]
      %v400 = vld [vmem:[%s351 + $0x18] sm:$0xff]
      %v401 = vld [vmem:[%s351 + $0x20] sm:$0xff]
      %v402 = vld [vmem:[%s351 + $0x28] sm:$0x3]
      %v403 = vld [vmem:[%s351 + $0x30] sm:$0xff]
      %v404 = vld [vmem:[%s351 + $0x38] sm:$0xff]
      %v405 = vld [vmem:[%s351 + $0x40] sm:$0x3]
      %v406 = vld [vmem:[%s351 + $0x48] sm:$0xff]
      %v407 = vld [vmem:[%s351 + $0x50] sm:$0xff]
      %v408 = vld [vmem:[%s351 + $0x58] sm:$0x3]
      %v409 = vld [vmem:[%s351 + $0x60] sm:$0xff]
      %v410 = vld [vmem:[%s351 + $0x68] sm:$0xff]
      %v411 = vld [vmem:[%s351 + $0x70] sm:$0x3]
      %v412 = vld [vmem:[%s351 + $0x78] sm:$0xff]
      %v413 = vld [vmem:[%s351 + $0x80] sm:$0xff]
      %v414 = vld [vmem:[%s351 + $0x88] sm:$0x3]
      %v415 = vld [vmem:[%s351 + $0x90] sm:$0xff]
      %v416 = vld [vmem:[%s351 + $0x98] sm:$0xff]
      %v417 = vld [vmem:[%s351 + $0xa0] sm:$0x3]
      %v418 = vld [vmem:[%s351 + $0xa8] sm:$0xff]
      %v419 = vld [vmem:[%s351 + $0xb0] sm:$0xff]
      %v420 = vld [vmem:[%s351 + $0xb8] sm:$0x3]
      %v421 = vld [vmem:[%s368] sm:$0xff]
      %v422 = vld [vmem:[%s368 + $0x8] sm:$0xff]
      %v423 = vld [vmem:[%s368 + $0x10] sm:$0x3]
      %v424 = vld [vmem:[%s382] sm:$0xff]
      %v425 = vld [vmem:[%s382 + $0x8] sm:$0xff]
      %v426 = vld [vmem:[%s382 + $0x10] sm:$0x3]
      %v427 = vld [vmem:[%s4] sm:$0x1]
      %vm452 = vcmask 1046528
      %v453 = vrot.slane %v397, 1
      %v454 = vrot.slane %v398, 1
      %v455 = vsel %vm452, %v453, %v454
      %v456 = vrot.slane %v399, 1
      %v457 = vsel %vm452, %v454, %v456
      %v458 = vrot.slane %v400, 1
      %v459 = vrot.slane %v401, 1
      %v460 = vsel %vm452, %v458, %v459
      %v461 = vrot.slane %v402, 1
      %v462 = vsel %vm452, %v459, %v461
      %v463 = vrot.slane %v403, 1
      %v464 = vrot.slane %v404, 1
      %v465 = vsel %vm452, %v463, %v464
      %v466 = vrot.slane %v405, 1
      %v467 = vsel %vm452, %v464, %v466
      %v468 = vrot.slane %v406, 1
      %v469 = vrot.slane %v407, 1
      %v470 = vsel %vm452, %v468, %v469
      %v471 = vrot.slane %v408, 1
      %v472 = vsel %vm452, %v469, %v471
      %v473 = vrot.slane %v409, 1
      %v474 = vrot.slane %v410, 1
      %v475 = vsel %vm452, %v473, %v474
      %v476 = vrot.slane %v411, 1
      %v477 = vsel %vm452, %v474, %v476
      %v478 = vrot.slane %v412, 1
      %v479 = vrot.slane %v413, 1
      %v480 = vsel %vm452, %v478, %v479
      %v481 = vrot.slane %v414, 1
      %v482 = vsel %vm452, %v479, %v481
      %v483 = vrot.slane %v415, 1
      %v484 = vrot.slane %v416, 1
      %v485 = vsel %vm452, %v483, %v484
      %v486 = vrot.slane %v417, 1
      %v487 = vsel %vm452, %v484, %v486
      %v488 = vrot.slane %v418, 1
      %v489 = vrot.slane %v419, 1
      %v490 = vsel %vm452, %v488, %v489
      %v491 = vrot.slane %v420, 1
      %v492 = vsel %vm452, %v489, %v491
      %vm493 = vcmask 1045504
      %v494 = vrot.slane %v397, 2
      %v495 = vrot.slane %v398, 2
      %v496 = vsel %vm493, %v494, %v495
      %v497 = vrot.slane %v399, 2
      %v498 = vsel %vm493, %v495, %v497
      %v499 = vrot.slane %v400, 2
      %v500 = vrot.slane %v401, 2
      %v501 = vsel %vm493, %v499, %v500
      %v502 = vrot.slane %v402, 2
      %v503 = vsel %vm493, %v500, %v502
      %v504 = vrot.slane %v403, 2
      %v505 = vrot.slane %v404, 2
      %v506 = vsel %vm493, %v504, %v505
      %v507 = vrot.slane %v405, 2
      %v508 = vsel %vm493, %v505, %v507
      %v509 = vrot.slane %v406, 2
      %v510 = vrot.slane %v407, 2
      %v511 = vsel %vm493, %v509, %v510
      %v512 = vrot.slane %v408, 2
      %v513 = vsel %vm493, %v510, %v512
      %v514 = vrot.slane %v409, 2
      %v515 = vrot.slane %v410, 2
      %v516 = vsel %vm493, %v514, %v515
      %v517 = vrot.slane %v411, 2
      %v518 = vsel %vm493, %v515, %v517
      %v519 = vrot.slane %v412, 2
      %v520 = vrot.slane %v413, 2
      %v521 = vsel %vm493, %v519, %v520
      %v522 = vrot.slane %v414, 2
      %v523 = vsel %vm493, %v520, %v522
      %v524 = vrot.slane %v415, 2
      %v525 = vrot.slane %v416, 2
      %v526 = vsel %vm493, %v524, %v525
      %v527 = vrot.slane %v417, 2
      %v528 = vsel %vm493, %v525, %v527
      %v529 = vrot.slane %v418, 2
      %v530 = vrot.slane %v419, 2
      %v531 = vsel %vm493, %v529, %v530
      %v532 = vrot.slane %v420, 2
      %v533 = vsel %vm493, %v530, %v532
      %v537 = vrot.slane %v421, 1
      %v538 = vrot.slane %v422, 1
      %v539 = vsel %vm452, %v537, %v538
      %v540 = vrot.slane %v423, 1
      %v541 = vsel %vm452, %v538, %v540
      %v542 = vrot.slane %v421, 2
      %v543 = vrot.slane %v422, 2
      %v544 = vsel %vm493, %v542, %v543
      %v545 = vrot.slane %v423, 2
      %v546 = vsel %vm493, %v543, %v545
      %v550 = vrot.slane %v424, 1
      %v551 = vrot.slane %v425, 1
      %v552 = vsel %vm452, %v550, %v551
      %v553 = vrot.slane %v426, 1
      %v554 = vsel %vm452, %v551, %v553
      %v555 = vrot.slane %v424, 2
      %v556 = vrot.slane %v425, 2
      %v557 = vsel %vm493, %v555, %v556
      %v558 = vrot.slane %v426, 2
      %v559 = vsel %vm493, %v556, %v558
      %v560 = vld [vmem:[%s3] sm:$0xf]
      %s561 = scalar_lea.vmem %s3, 4
      %v562 = vld [vmem:[%s561] sm:$0xf]
      %vm563 = vcmask 31744
      %v564 = vsel %vm563, %v455, 0
      %v566 = vsel %vm563, %v457, 0
      %v568 = vsel %vm563, %v460, 0
      %v570 = vsel %vm563, %v462, 0
      %v572 = vsel %vm563, %v465, 0
      %v574 = vsel %vm563, %v467, 0
      %v576 = vsel %vm563, %v470, 0
      %v578 = vsel %vm563, %v472, 0
      %v580 = vsel %vm563, %v475, 0
      %v582 = vsel %vm563, %v477, 0
      %v584 = vsel %vm563, %v480, 0
      %v586 = vsel %vm563, %v482, 0
      %v588 = vsel %vm563, %v485, 0
      %v590 = vsel %vm563, %v487, 0
      %v592 = vsel %vm563, %v490, 0
      %v594 = vsel %vm563, %v492, 0
      %vm596 = vcmask 1043456
      %v598 = vsel %vm596, %v562, 0
      %600 = vmatprep.subr.mxu0 0.0
      %601 = vmatpush1.msra.mxu0 %v598
      %602 = vmatprep.subr.mxu0 0.0
      %603 = vmatpush1.msra.mxu0 0.0
      %604 = vmatprep.subr.mxu0 0.0
      %605 = vmatpush1.msra.mxu0 0.0
      %606 = vmatprep.subr.mxu0 0.0
      %607 = vmatpush1.msra.mxu0 0.0
      %608 = vmatprep.subr.mxu0 0.0
      %609 = vmatpush1.msra.mxu0 0.0
      %610 = vmatprep.subr.mxu0 0.0
      %611 = vmatpush1.msra.mxu0 0.0
      %612 = vmatprep.subr.mxu0 0.0
      %613 = vmatpush1.msra.mxu0 0.0
      %614 = vmatprep.subr.mxu0 0.0
      %615 = vmatpush1.msra.mxu0 0.0
      %616 = vmatprep.subr.mxu0 0.0
      %617 = vmatpush1.msra.mxu0 0.0
      %618 = vmatprep.subr.mxu0 0.0
      %619 = vmatpush1.msra.mxu0 0.0
      %620 = vmatprep.subr.mxu0 0.0
      %621 = vmatpush1.msra.mxu0 0.0
      %622 = vmatprep.subr.mxu0 0.0
      %623 = vmatpush1.msra.mxu0 0.0
      %624 = vmatprep.subr.mxu0 0.0
      %625 = vmatpush1.msra.mxu0 0.0
      %626 = vmatprep.subr.mxu0 0.0
      %627 = vmatpush1.msra.mxu0 0.0
      %628 = vmatprep.subr.mxu0 0.0
      %629 = vmatpush1.msra.mxu0 0.0
      %630 = vmatprep.subr.mxu0 0.0
      %631 = vmatpush1.msra.mxu0 0.0
      %632 = vmatprep.subr.mxu0 0.0
      %633 = vmatpush1.msra.mxu0 0.0
      %634 = vmatprep.subr.mxu0 0.0
      %635 = vmatpush1.msra.mxu0 0.0
      %636 = vmatprep.subr.mxu0 0.0
      %637 = vmatpush1.msra.mxu0 0.0
      %638 = vmatprep.subr.mxu0 0.0
      %639 = vmatpush1.msra.mxu0 0.0
      %640 = vmatprep.subr.mxu0 0.0
      %641 = vmatpush1.msra.mxu0 0.0
      %642 = vmatprep.subr.mxu0 0.0
      %643 = vmatpush1.msra.mxu0 0.0
      %644 = vmatprep.subr.mxu0 0.0
      %645 = vmatpush1.msra.mxu0 0.0
      %646 = vmatprep.subr.mxu0 0.0
      %647 = vmatpush1.msra.mxu0 0.0
      %648 = vmatprep.subr.mxu0 0.0
      %649 = vmatpush1.msra.mxu0 0.0
      %650 = vmatprep.subr.mxu0 0.0
      %651 = vmatpush1.msra.mxu0 0.0
      %652 = vmatprep.subr.mxu0 0.0
      %653 = vmatpush1.msra.mxu0 0.0
      %654 = vmatprep.subr.mxu0 0.0
      %655 = vmatpush1.msra.mxu0 0.0
      %656 = vmatprep.subr.mxu0 0.0
      %657 = vmatpush1.msra.mxu0 0.0
      %658 = vmatprep.subr.mxu0 0.0
      %659 = vmatpush1.msra.mxu0 0.0
      %660 = vmatprep.subr.mxu0 0.0
      %661 = vmatpush1.msra.mxu0 0.0
      %662 = vmatprep.subr.mxu0 0.0
      %663 = vmatpush1.msra.mxu0 0.0
      %664 = vmatprep.mubr.f32.mxu0 0.0
      %665 = vmatmul.mubr.f32.gmra.mrb[0].mxu0 %v564
      %v666 = vpop.f32.mrb[0].mxu0
      %v667 = vadd.f32 0.0, %v666
      %v668 = vpop.f32.mrb[0].mxu0
      %669 = vmatprep.mubr.f32.mxu0 0.0
      %670 = vmatmul.mubr.f32.gmra.mrb[0].mxu0 %v566
      %v671 = vpop.f32.mrb[0].mxu0
      %v672 = vadd.f32 0.0, %v671
      %v673 = vpop.f32.mrb[0].mxu0
      %674 = vmatprep.mubr.f32.mxu0 0.0
      %675 = vmatmul.mubr.f32.gmra.mrb[0].mxu0 %v568
      %v676 = vpop.f32.mrb[0].mxu0
      %v677 = vadd.f32 0.0, %v676
      %v678 = vpop.f32.mrb[0].mxu0
      %679 = vmatprep.mubr.f32.mxu0 0.0
      %680 = vmatmul.mubr.f32.gmra.mrb[0].mxu0 %v570
      %v681 = vpop.f32.mrb[0].mxu0
      %v682 = vadd.f32 0.0, %v681
      %v683 = vpop.f32.mrb[0].mxu0
      %684 = vmatprep.mubr.f32.mxu0 0.0
      %685 = vmatmul.mubr.f32.gmra.mrb[0].mxu0 %v572
      %v686 = vpop.f32.mrb[0].mxu0
      %v687 = vadd.f32 0.0, %v686
      %v688 = vpop.f32.mrb[0].mxu0
      %689 = vmatprep.mubr.f32.mxu0 0.0
      %690 = vmatmul.mubr.f32.gmra.mrb[0].mxu0 %v574
      %v691 = vpop.f32.mrb[0].mxu0
      %v692 = vadd.f32 0.0, %v691
      %v693 = vpop.f32.mrb[0].mxu0
      %694 = vmatprep.mubr.f32.mxu0 0.0
      %695 = vmatmul.mubr.f32.gmra.mrb[0].mxu0 %v576
      %v696 = vpop.f32.mrb[0].mxu0
      %v697 = vadd.f32 0.0, %v696
      %v698 = vpop.f32.mrb[0].mxu0
      %699 = vmatprep.mubr.f32.mxu0 0.0
      %700 = vmatmul.mubr.f32.gmra.mrb[0].mxu0 %v578
      %v701 = vpop.f32.mrb[0].mxu0
      %v702 = vadd.f32 0.0, %v701
      %v703 = vpop.f32.mrb[0].mxu0
      %704 = vmatprep.mubr.f32.mxu0 0.0
      %705 = vmatmul.mubr.f32.gmra.mrb[0].mxu0 %v580
      %v706 = vpop.f32.mrb[0].mxu0
      %v707 = vadd.f32 0.0, %v706
      %v708 = vpop.f32.mrb[0].mxu0
      %709 = vmatprep.mubr.f32.mxu0 0.0
      %710 = vmatmul.mubr.f32.gmra.mrb[0].mxu0 %v582
      %v711 = vpop.f32.mrb[0].mxu0
      %v712 = vadd.f32 0.0, %v711
      %v713 = vpop.f32.mrb[0].mxu0
      %714 = vmatprep.mubr.f32.mxu0 0.0
      %715 = vmatmul.mubr.f32.gmra.mrb[0].mxu0 %v584
      %v716 = vpop.f32.mrb[0].mxu0
      %v717 = vadd.f32 0.0, %v716
      %v718 = vpop.f32.mrb[0].mxu0
      %719 = vmatprep.mubr.f32.mxu0 0.0
      %720 = vmatmul.mubr.f32.gmra.mrb[0].mxu0 %v586
      %v721 = vpop.f32.mrb[0].mxu0
      %v722 = vadd.f32 0.0, %v721
      %v723 = vpop.f32.mrb[0].mxu0
      %724 = vmatprep.mubr.f32.mxu0 0.0
      %725 = vmatmul.mubr.f32.gmra.mrb[0].mxu0 %v588
      %v726 = vpop.f32.mrb[0].mxu0
      %v727 = vadd.f32 0.0, %v726
      %v728 = vpop.f32.mrb[0].mxu0
      %729 = vmatprep.mubr.f32.mxu0 0.0
      %730 = vmatmul.mubr.f32.gmra.mrb[0].mxu0 %v590
      %v731 = vpop.f32.mrb[0].mxu0
      %v732 = vadd.f32 0.0, %v731
      %v733 = vpop.f32.mrb[0].mxu0
      %734 = vmatprep.mubr.f32.mxu0 0.0
      %735 = vmatmul.mubr.f32.gmra.mrb[0].mxu0 %v592
      %v736 = vpop.f32.mrb[0].mxu0
      %v737 = vadd.f32 0.0, %v736
      %v738 = vpop.f32.mrb[0].mxu0
      %739 = vmatprep.mubr.f32.mxu0 0.0
      %740 = vmatmul.mubr.f32.gmra.mrb[0].mxu0 %v594
      %v741 = vpop.f32.mrb[0].mxu0
      %v742 = vadd.f32 0.0, %v741
      %v743 = vpop.f32.mrb[0].mxu0
      %744 = vdwg.mxu0
      %v745 = vsel %vm563, %v397, 0
      %v747 = vsel %vm563, %v398, 0
      %v749 = vsel %vm563, %v400, 0
      %v751 = vsel %vm563, %v401, 0
      %v753 = vsel %vm563, %v403, 0
      %v755 = vsel %vm563, %v404, 0
      %v757 = vsel %vm563, %v406, 0
      %v759 = vsel %vm563, %v407, 0
      %v761 = vsel %vm563, %v409, 0
      %v763 = vsel %vm563, %v410, 0
      %v765 = vsel %vm563, %v412, 0
      %v767 = vsel %vm563, %v413, 0
      %v769 = vsel %vm563, %v415, 0
      %v771 = vsel %vm563, %v416, 0
      %v773 = vsel %vm563, %v418, 0
      %v775 = vsel %vm563, %v419, 0
      %v778 = vsel %vm596, %v560, 0
      %780 = vmatprep.subr.mxu0 0.0
      %781 = vmatpush1.msra.mxu0 %v778
      %782 = vmatprep.subr.mxu0 0.0
      %783 = vmatpush1.msra.mxu0 0.0
      %784 = vmatprep.subr.mxu0 0.0
      %785 = vmatpush1.msra.mxu0 0.0
      %786 = vmatprep.subr.mxu0 0.0
      %787 = vmatpush1.msra.mxu0 0.0
      %788 = vmatprep.subr.mxu0 0.0
      %789 = vmatpush1.msra.mxu0 0.0
      %790 = vmatprep.subr.mxu0 0.0
      %791 = vmatpush1.msra.mxu0 0.0
      %792 = vmatprep.subr.mxu0 0.0
      %793 = vmatpush1.msra.mxu0 0.0
      %794 = vmatprep.subr.mxu0 0.0
      %795 = vmatpush1.msra.mxu0 0.0
      %796 = vmatprep.subr.mxu0 0.0
      %797 = vmatpush1.msra.mxu0 0.0
      %798 = vmatprep.subr.mxu0 0.0
      %799 = vmatpush1.msra.mxu0 0.0
      %800 = vmatprep.subr.mxu0 0.0
      %801 = vmatpush1.msra.mxu0 0.0
      %802 = vmatprep.subr.mxu0 0.0
      %803 = vmatpush1.msra.mxu0 0.0
      %804 = vmatprep.subr.mxu0 0.0
      %805 = vmatpush1.msra.mxu0 0.0
      %806 = vmatprep.subr.mxu0 0.0
      %807 = vmatpush1.msra.mxu0 0.0
      %808 = vmatprep.subr.mxu0 0.0
      %809 = vmatpush1.msra.mxu0 0.0
      %810 = vmatprep.subr.mxu0 0.0
      %811 = vmatpush1.msra.mxu0 0.0
      %812 = vmatprep.subr.mxu0 0.0
      %813 = vmatpush1.msra.mxu0 0.0
      %814 = vmatprep.subr.mxu0 0.0
      %815 = vmatpush1.msra.mxu0 0.0
      %816 = vmatprep.subr.mxu0 0.0
      %817 = vmatpush1.msra.mxu0 0.0
      %818 = vmatprep.subr.mxu0 0.0
      %819 = vmatpush1.msra.mxu0 0.0
      %820 = vmatprep.subr.mxu0 0.0
      %821 = vmatpush1.msra.mxu0 0.0
      %822 = vmatprep.subr.mxu0 0.0
      %823 = vmatpush1.msra.mxu0 0.0
      %824 = vmatprep.subr.mxu0 0.0
      %825 = vmatpush1.msra.mxu0 0.0
      %826 = vmatprep.subr.mxu0 0.0
      %827 = vmatpush1.msra.mxu0 0.0
      %828 = vmatprep.subr.mxu0 0.0
      %829 = vmatpush1.msra.mxu0 0.0
      %830 = vmatprep.subr.mxu0 0.0
      %831 = vmatpush1.msra.mxu0 0.0
      %832 = vmatprep.subr.mxu0 0.0
      %833 = vmatpush1.msra.mxu0 0.0
      %834 = vmatprep.subr.mxu0 0.0
      %835 = vmatpush1.msra.mxu0 0.0
      %836 = vmatprep.subr.mxu0 0.0
      %837 = vmatpush1.msra.mxu0 0.0
      %838 = vmatprep.subr.mxu0 0.0
      %839 = vmatpush1.msra.mxu0 0.0
      %840 = vmatprep.subr.mxu0 0.0
      %841 = vmatpush1.msra.mxu0 0.0
      %842 = vmatprep.subr.mxu0 0.0
      %843 = vmatpush1.msra.mxu0 0.0
      %844 = vmatprep.mubr.f32.mxu0 0.0
      %845 = vmatmul.mubr.f32.gmra.mrb[0].mxu0 %v745
      %v846 = vpop.f32.mrb[0].mxu0
      %v847 = vadd.f32 %v667, %v846
      %v848 = vpop.f32.mrb[0].mxu0
      %849 = vmatprep.mubr.f32.mxu0 0.0
      %850 = vmatmul.mubr.f32.gmra.mrb[0].mxu0 %v747
      %v851 = vpop.f32.mrb[0].mxu0
      %v852 = vadd.f32 %v672, %v851
      %v853 = vpop.f32.mrb[0].mxu0
      %854 = vmatprep.mubr.f32.mxu0 0.0
      %855 = vmatmul.mubr.f32.gmra.mrb[0].mxu0 %v749
      %v856 = vpop.f32.mrb[0].mxu0
      %v857 = vadd.f32 %v677, %v856
      %v858 = vpop.f32.mrb[0].mxu0
      %859 = vmatprep.mubr.f32.mxu0 0.0
      %860 = vmatmul.mubr.f32.gmra.mrb[0].mxu0 %v751
      %v861 = vpop.f32.mrb[0].mxu0
      %v862 = vadd.f32 %v682, %v861
      %v863 = vpop.f32.mrb[0].mxu0
      %864 = vmatprep.mubr.f32.mxu0 0.0
      %865 = vmatmul.mubr.f32.gmra.mrb[0].mxu0 %v753
      %v866 = vpop.f32.mrb[0].mxu0
      %v867 = vadd.f32 %v687, %v866
      %v868 = vpop.f32.mrb[0].mxu0
      %869 = vmatprep.mubr.f32.mxu0 0.0
      %870 = vmatmul.mubr.f32.gmra.mrb[0].mxu0 %v755
      %v871 = vpop.f32.mrb[0].mxu0
      %v872 = vadd.f32 %v692, %v871
      %v873 = vpop.f32.mrb[0].mxu0
      %874 = vmatprep.mubr.f32.mxu0 0.0
      %875 = vmatmul.mubr.f32.gmra.mrb[0].mxu0 %v757
      %v876 = vpop.f32.mrb[0].mxu0
      %v877 = vadd.f32 %v697, %v876
      %v878 = vpop.f32.mrb[0].mxu0
      %879 = vmatprep.mubr.f32.mxu0 0.0
      %880 = vmatmul.mubr.f32.gmra.mrb[0].mxu0 %v759
      %v881 = vpop.f32.mrb[0].mxu0
      %v882 = vadd.f32 %v702, %v881
      %v883 = vpop.f32.mrb[0].mxu0
      %884 = vmatprep.mubr.f32.mxu0 0.0
      %885 = vmatmul.mubr.f32.gmra.mrb[0].mxu0 %v761
      %v886 = vpop.f32.mrb[0].mxu0
      %v887 = vadd.f32 %v707, %v886
      %v888 = vpop.f32.mrb[0].mxu0
      %889 = vmatprep.mubr.f32.mxu0 0.0
      %890 = vmatmul.mubr.f32.gmra.mrb[0].mxu0 %v763
      %v891 = vpop.f32.mrb[0].mxu0
      %v892 = vadd.f32 %v712, %v891
      %v893 = vpop.f32.mrb[0].mxu0
      %894 = vmatprep.mubr.f32.mxu0 0.0
      %895 = vmatmul.mubr.f32.gmra.mrb[0].mxu0 %v765
      %v896 = vpop.f32.mrb[0].mxu0
      %v897 = vadd.f32 %v717, %v896
      %v898 = vpop.f32.mrb[0].mxu0
      %899 = vmatprep.mubr.f32.mxu0 0.0
      %900 = vmatmul.mubr.f32.gmra.mrb[0].mxu0 %v767
      %v901 = vpop.f32.mrb[0].mxu0
      %v902 = vadd.f32 %v722, %v901
      %v903 = vpop.f32.mrb[0].mxu0
      %904 = vmatprep.mubr.f32.mxu0 0.0
      %905 = vmatmul.mubr.f32.gmra.mrb[0].mxu0 %v769
      %v906 = vpop.f32.mrb[0].mxu0
      %v907 = vadd.f32 %v727, %v906
      %v908 = vpop.f32.mrb[0].mxu0
      %909 = vmatprep.mubr.f32.mxu0 0.0
      %910 = vmatmul.mubr.f32.gmra.mrb[0].mxu0 %v771
      %v911 = vpop.f32.mrb[0].mxu0
      %v912 = vadd.f32 %v732, %v911
      %v913 = vpop.f32.mrb[0].mxu0
      %914 = vmatprep.mubr.f32.mxu0 0.0
      %915 = vmatmul.mubr.f32.gmra.mrb[0].mxu0 %v773
      %v916 = vpop.f32.mrb[0].mxu0
      %v917 = vadd.f32 %v737, %v916
      %v918 = vpop.f32.mrb[0].mxu0
      %919 = vmatprep.mubr.f32.mxu0 0.0
      %920 = vmatmul.mubr.f32.gmra.mrb[0].mxu0 %v775
      %v921 = vpop.f32.mrb[0].mxu0
      %v922 = vadd.f32 %v742, %v921
      %v923 = vpop.f32.mrb[0].mxu0
      %924 = vdwg.mxu0
      %s925 = scalar_lea.vmem %s3, 8
      %v926 = vld [vmem:[%s925] sm:$0xf]
      %v927 = vsel %vm563, %v421, 0
      %v929 = vsel %vm563, %v422, 0
      %v932 = vsel %vm596, %v926, 0
      %934 = vmatprep.subr.mxu0 0.0
      %935 = vmatpush1.msra.mxu0 %v932
      %936 = vmatprep.subr.mxu0 0.0
      %937 = vmatpush1.msra.mxu0 0.0
      %938 = vmatprep.subr.mxu0 0.0
      %939 = vmatpush1.msra.mxu0 0.0
      %940 = vmatprep.subr.mxu0 0.0
      %941 = vmatpush1.msra.mxu0 0.0
      %942 = vmatprep.subr.mxu0 0.0
      %943 = vmatpush1.msra.mxu0 0.0
      %944 = vmatprep.subr.mxu0 0.0
      %945 = vmatpush1.msra.mxu0 0.0
      %946 = vmatprep.subr.mxu0 0.0
      %947 = vmatpush1.msra.mxu0 0.0
      %948 = vmatprep.subr.mxu0 0.0
      %949 = vmatpush1.msra.mxu0 0.0
      %950 = vmatprep.subr.mxu0 0.0
      %951 = vmatpush1.msra.mxu0 0.0
      %952 = vmatprep.subr.mxu0 0.0
      %953 = vmatpush1.msra.mxu0 0.0
      %954 = vmatprep.subr.mxu0 0.0
      %955 = vmatpush1.msra.mxu0 0.0
      %956 = vmatprep.subr.mxu0 0.0
      %957 = vmatpush1.msra.mxu0 0.0
      %958 = vmatprep.subr.mxu0 0.0
      %959 = vmatpush1.msra.mxu0 0.0
      %960 = vmatprep.subr.mxu0 0.0
      %961 = vmatpush1.msra.mxu0 0.0
      %962 = vmatprep.subr.mxu0 0.0
      %963 = vmatpush1.msra.mxu0 0.0
      %964 = vmatprep.subr.mxu0 0.0
      %965 = vmatpush1.msra.mxu0 0.0
      %966 = vmatprep.subr.mxu0 0.0
      %967 = vmatpush1.msra.mxu0 0.0
      %968 = vmatprep.subr.mxu0 0.0
      %969 = vmatpush1.msra.mxu0 0.0
      %970 = vmatprep.subr.mxu0 0.0
      %971 = vmatpush1.msra.mxu0 0.0
      %972 = vmatprep.subr.mxu0 0.0
      %973 = vmatpush1.msra.mxu0 0.0
      %974 = vmatprep.subr.mxu0 0.0
      %975 = vmatpush1.msra.mxu0 0.0
      %976 = vmatprep.subr.mxu0 0.0
      %977 = vmatpush1.msra.mxu0 0.0
      %978 = vmatprep.subr.mxu0 0.0
      %979 = vmatpush1.msra.mxu0 0.0
      %980 = vmatprep.subr.mxu0 0.0
      %981 = vmatpush1.msra.mxu0 0.0
      %982 = vmatprep.subr.mxu0 0.0
      %983 = vmatpush1.msra.mxu0 0.0
      %984 = vmatprep.subr.mxu0 0.0
      %985 = vmatpush1.msra.mxu0 0.0
      %986 = vmatprep.subr.mxu0 0.0
      %987 = vmatpush1.msra.mxu0 0.0
      %988 = vmatprep.subr.mxu0 0.0
      %989 = vmatpush1.msra.mxu0 0.0
      %990 = vmatprep.subr.mxu0 0.0
      %991 = vmatpush1.msra.mxu0 0.0
      %992 = vmatprep.subr.mxu0 0.0
      %993 = vmatpush1.msra.mxu0 0.0
      %994 = vmatprep.subr.mxu0 0.0
      %995 = vmatpush1.msra.mxu0 0.0
      %996 = vmatprep.subr.mxu0 0.0
      %997 = vmatpush1.msra.mxu0 0.0
      %998 = vmatprep.mubr.f32.mxu0 0.0
      %999 = vmatmul.mubr.f32.gmra.mrb[0].mxu0 %v749
      %v1000 = vpop.f32.mrb[0].mxu0
      %v1001 = vadd.f32 0.0, %v1000
      %v1002 = vpop.f32.mrb[0].mxu0
      %1003 = vmatprep.mubr.f32.mxu0 0.0
      %1004 = vmatmul.mubr.f32.gmra.mrb[0].mxu0 %v751
      %v1005 = vpop.f32.mrb[0].mxu0
      %v1006 = vadd.f32 0.0, %v1005
      %v1007 = vpop.f32.mrb[0].mxu0
      %1008 = vmatprep.mubr.f32.mxu0 0.0
      %1009 = vmatmul.mubr.f32.gmra.mrb[0].mxu0 %v753
      %v1010 = vpop.f32.mrb[0].mxu0
      %v1011 = vadd.f32 0.0, %v1010
      %v1012 = vpop.f32.mrb[0].mxu0
      %1013 = vmatprep.mubr.f32.mxu0 0.0
      %1014 = vmatmul.mubr.f32.gmra.mrb[0].mxu0 %v755
      %v1015 = vpop.f32.mrb[0].mxu0
      %v1016 = vadd.f32 0.0, %v1015
      %v1017 = vpop.f32.mrb[0].mxu0
      %1018 = vmatprep.mubr.f32.mxu0 0.0
      %1019 = vmatmul.mubr.f32.gmra.mrb[0].mxu0 %v757
      %v1020 = vpop.f32.mrb[0].mxu0
      %v1021 = vadd.f32 0.0, %v1020
      %v1022 = vpop.f32.mrb[0].mxu0
      %1023 = vmatprep.mubr.f32.mxu0 0.0
      %1024 = vmatmul.mubr.f32.gmra.mrb[0].mxu0 %v759
      %v1025 = vpop.f32.mrb[0].mxu0
      %v1026 = vadd.f32 0.0, %v1025
      %v1027 = vpop.f32.mrb[0].mxu0
      %1028 = vmatprep.mubr.f32.mxu0 0.0
      %1029 = vmatmul.mubr.f32.gmra.mrb[0].mxu0 %v761
      %v1030 = vpop.f32.mrb[0].mxu0
      %v1031 = vadd.f32 0.0, %v1030
      %v1032 = vpop.f32.mrb[0].mxu0
      %1033 = vmatprep.mubr.f32.mxu0 0.0
      %1034 = vmatmul.mubr.f32.gmra.mrb[0].mxu0 %v763
      %v1035 = vpop.f32.mrb[0].mxu0
      %v1036 = vadd.f32 0.0, %v1035
      %v1037 = vpop.f32.mrb[0].mxu0
      %1038 = vmatprep.mubr.f32.mxu0 0.0
      %1039 = vmatmul.mubr.f32.gmra.mrb[0].mxu0 %v765
      %v1040 = vpop.f32.mrb[0].mxu0
      %v1041 = vadd.f32 0.0, %v1040
      %v1042 = vpop.f32.mrb[0].mxu0
      %1043 = vmatprep.mubr.f32.mxu0 0.0
      %1044 = vmatmul.mubr.f32.gmra.mrb[0].mxu0 %v767
      %v1045 = vpop.f32.mrb[0].mxu0
      %v1046 = vadd.f32 0.0, %v1045
      %v1047 = vpop.f32.mrb[0].mxu0
      %1048 = vmatprep.mubr.f32.mxu0 0.0
      %1049 = vmatmul.mubr.f32.gmra.mrb[0].mxu0 %v769
      %v1050 = vpop.f32.mrb[0].mxu0
      %v1051 = vadd.f32 0.0, %v1050
      %v1052 = vpop.f32.mrb[0].mxu0
      %1053 = vmatprep.mubr.f32.mxu0 0.0
      %1054 = vmatmul.mubr.f32.gmra.mrb[0].mxu0 %v771
      %v1055 = vpop.f32.mrb[0].mxu0
      %v1056 = vadd.f32 0.0, %v1055
      %v1057 = vpop.f32.mrb[0].mxu0
      %1058 = vmatprep.mubr.f32.mxu0 0.0
      %1059 = vmatmul.mubr.f32.gmra.mrb[0].mxu0 %v773
      %v1060 = vpop.f32.mrb[0].mxu0
      %v1061 = vadd.f32 0.0, %v1060
      %v1062 = vpop.f32.mrb[0].mxu0
      %1063 = vmatprep.mubr.f32.mxu0 0.0
      %1064 = vmatmul.mubr.f32.gmra.mrb[0].mxu0 %v775
      %v1065 = vpop.f32.mrb[0].mxu0
      %v1066 = vadd.f32 0.0, %v1065
      %v1067 = vpop.f32.mrb[0].mxu0
      %1068 = vmatprep.mubr.f32.mxu0 0.0
      %1069 = vmatmul.mubr.f32.gmra.mrb[0].mxu0 %v927
      %v1070 = vpop.f32.mrb[0].mxu0
      %v1071 = vadd.f32 0.0, %v1070
      %v1072 = vpop.f32.mrb[0].mxu0
      %1073 = vmatprep.mubr.f32.mxu0 0.0
      %1074 = vmatmul.mubr.f32.gmra.mrb[0].mxu0 %v929
      %v1075 = vpop.f32.mrb[0].mxu0
      %v1076 = vadd.f32 0.0, %v1075
      %v1077 = vpop.f32.mrb[0].mxu0
      %1078 = vdwg.mxu0
      %v1079 = vadd.f32 %v847, %v1001
      %v1080 = vadd.f32 %v852, %v1006
      %v1081 = vadd.f32 %v857, %v1011
      %v1082 = vadd.f32 %v862, %v1016
      %v1083 = vadd.f32 %v867, %v1021
      %v1084 = vadd.f32 %v872, %v1026
      %v1085 = vadd.f32 %v877, %v1031
      %v1086 = vadd.f32 %v882, %v1036
      %v1087 = vadd.f32 %v887, %v1041
      %v1088 = vadd.f32 %v892, %v1046
      %v1089 = vadd.f32 %v897, %v1051
      %v1090 = vadd.f32 %v902, %v1056
      %v1091 = vadd.f32 %v907, %v1061
      %v1092 = vadd.f32 %v912, %v1066
      %v1093 = vadd.f32 %v917, %v1071
      %v1094 = vadd.f32 %v922, %v1076
      %s1095 = scalar_lea.vmem %s3, 12
      %v1096 = vld [vmem:[%s1095] sm:$0xf]
      %v1097 = vsel %vm563, %v539, 0
      %v1099 = vsel %vm563, %v541, 0
      %v1102 = vsel %vm596, %v1096, 0
      %1104 = vmatprep.subr.mxu0 0.0
      %1105 = vmatpush1.msra.mxu0 %v1102
      %1106 = vmatprep.subr.mxu0 0.0
      %1107 = vmatpush1.msra.mxu0 0.0
      %1108 = vmatprep.subr.mxu0 0.0
      %1109 = vmatpush1.msra.mxu0 0.0
      %1110 = vmatprep.subr.mxu0 0.0
      %1111 = vmatpush1.msra.mxu0 0.0
      %1112 = vmatprep.subr.mxu0 0.0
      %1113 = vmatpush1.msra.mxu0 0.0
      %1114 = vmatprep.subr.mxu0 0.0
      %1115 = vmatpush1.msra.mxu0 0.0
      %1116 = vmatprep.subr.mxu0 0.0
      %1117 = vmatpush1.msra.mxu0 0.0
      %1118 = vmatprep.subr.mxu0 0.0
      %1119 = vmatpush1.msra.mxu0 0.0
      %1120 = vmatprep.subr.mxu0 0.0
      %1121 = vmatpush1.msra.mxu0 0.0
      %1122 = vmatprep.subr.mxu0 0.0
      %1123 = vmatpush1.msra.mxu0 0.0
      %1124 = vmatprep.subr.mxu0 0.0
      %1125 = vmatpush1.msra.mxu0 0.0
      %1126 = vmatprep.subr.mxu0 0.0
      %1127 = vmatpush1.msra.mxu0 0.0
      %1128 = vmatprep.subr.mxu0 0.0
      %1129 = vmatpush1.msra.mxu0 0.0
      %1130 = vmatprep.subr.mxu0 0.0
      %1131 = vmatpush1.msra.mxu0 0.0
      %1132 = vmatprep.subr.mxu0 0.0
      %1133 = vmatpush1.msra.mxu0 0.0
      %1134 = vmatprep.subr.mxu0 0.0
      %1135 = vmatpush1.msra.mxu0 0.0
      %1136 = vmatprep.subr.mxu0 0.0
      %1137 = vmatpush1.msra.mxu0 0.0
      %1138 = vmatprep.subr.mxu0 0.0
      %1139 = vmatpush1.msra.mxu0 0.0
      %1140 = vmatprep.subr.mxu0 0.0
      %1141 = vmatpush1.msra.mxu0 0.0
      %1142 = vmatprep.subr.mxu0 0.0
      %1143 = vmatpush1.msra.mxu0 0.0
      %1144 = vmatprep.subr.mxu0 0.0
      %1145 = vmatpush1.msra.mxu0 0.0
      %1146 = vmatprep.subr.mxu0 0.0
      %1147 = vmatpush1.msra.mxu0 0.0
      %1148 = vmatprep.subr.mxu0 0.0
      %1149 = vmatpush1.msra.mxu0 0.0
      %1150 = vmatprep.subr.mxu0 0.0
      %1151 = vmatpush1.msra.mxu0 0.0
      %1152 = vmatprep.subr.mxu0 0.0
      %1153 = vmatpush1.msra.mxu0 0.0
      %1154 = vmatprep.subr.mxu0 0.0
      %1155 = vmatpush1.msra.mxu0 0.0
      %1156 = vmatprep.subr.mxu0 0.0
      %1157 = vmatpush1.msra.mxu0 0.0
      %1158 = vmatprep.subr.mxu0 0.0
      %1159 = vmatpush1.msra.mxu0 0.0
      %1160 = vmatprep.subr.mxu0 0.0
      %1161 = vmatpush1.msra.mxu0 0.0
      %1162 = vmatprep.subr.mxu0 0.0
      %1163 = vmatpush1.msra.mxu0 0.0
      %1164 = vmatprep.subr.mxu0 0.0
      %1165 = vmatpush1.msra.mxu0 0.0
      %1166 = vmatprep.subr.mxu0 0.0
      %1167 = vmatpush1.msra.mxu0 0.0
      %1168 = vmatprep.mubr.f32.mxu0 0.0
      %1169 = vmatmul.mubr.f32.gmra.mrb[0].mxu0 %v568
      %v1170 = vpop.f32.mrb[0].mxu0
      %v1171 = vadd.f32 0.0, %v1170
      %v1172 = vpop.f32.mrb[0].mxu0
      %1173 = vmatprep.mubr.f32.mxu0 0.0
      %1174 = vmatmul.mubr.f32.gmra.mrb[0].mxu0 %v570
      %v1175 = vpop.f32.mrb[0].mxu0
      %v1176 = vadd.f32 0.0, %v1175
      %v1177 = vpop.f32.mrb[0].mxu0
      %1178 = vmatprep.mubr.f32.mxu0 0.0
      %1179 = vmatmul.mubr.f32.gmra.mrb[0].mxu0 %v572
      %v1180 = vpop.f32.mrb[0].mxu0
      %v1181 = vadd.f32 0.0, %v1180
      %v1182 = vpop.f32.mrb[0].mxu0
      %1183 = vmatprep.mubr.f32.mxu0 0.0
      %1184 = vmatmul.mubr.f32.gmra.mrb[0].mxu0 %v574
      %v1185 = vpop.f32.mrb[0].mxu0
      %v1186 = vadd.f32 0.0, %v1185
      %v1187 = vpop.f32.mrb[0].mxu0
      %1188 = vmatprep.mubr.f32.mxu0 0.0
      %1189 = vmatmul.mubr.f32.gmra.mrb[0].mxu0 %v576
      %v1190 = vpop.f32.mrb[0].mxu0
      %v1191 = vadd.f32 0.0, %v1190
      %v1192 = vpop.f32.mrb[0].mxu0
      %1193 = vmatprep.mubr.f32.mxu0 0.0
      %1194 = vmatmul.mubr.f32.gmra.mrb[0].mxu0 %v578
      %v1195 = vpop.f32.mrb[0].mxu0
      %v1196 = vadd.f32 0.0, %v1195
      %v1197 = vpop.f32.mrb[0].mxu0
      %1198 = vmatprep.mubr.f32.mxu0 0.0
      %1199 = vmatmul.mubr.f32.gmra.mrb[0].mxu0 %v580
      %v1200 = vpop.f32.mrb[0].mxu0
      %v1201 = vadd.f32 0.0, %v1200
      %v1202 = vpop.f32.mrb[0].mxu0
      %1203 = vmatprep.mubr.f32.mxu0 0.0
      %1204 = vmatmul.mubr.f32.gmra.mrb[0].mxu0 %v582
      %v1205 = vpop.f32.mrb[0].mxu0
      %v1206 = vadd.f32 0.0, %v1205
      %v1207 = vpop.f32.mrb[0].mxu0
      %1208 = vmatprep.mubr.f32.mxu0 0.0
      %1209 = vmatmul.mubr.f32.gmra.mrb[0].mxu0 %v584
      %v1210 = vpop.f32.mrb[0].mxu0
      %v1211 = vadd.f32 0.0, %v1210
      %v1212 = vpop.f32.mrb[0].mxu0
      %1213 = vmatprep.mubr.f32.mxu0 0.0
      %1214 = vmatmul.mubr.f32.gmra.mrb[0].mxu0 %v586
      %v1215 = vpop.f32.mrb[0].mxu0
      %v1216 = vadd.f32 0.0, %v1215
      %v1217 = vpop.f32.mrb[0].mxu0
      %1218 = vmatprep.mubr.f32.mxu0 0.0
      %1219 = vmatmul.mubr.f32.gmra.mrb[0].mxu0 %v588
      %v1220 = vpop.f32.mrb[0].mxu0
      %v1221 = vadd.f32 0.0, %v1220
      %v1222 = vpop.f32.mrb[0].mxu0
      %1223 = vmatprep.mubr.f32.mxu0 0.0
      %1224 = vmatmul.mubr.f32.gmra.mrb[0].mxu0 %v590
      %v1225 = vpop.f32.mrb[0].mxu0
      %v1226 = vadd.f32 0.0, %v1225
      %v1227 = vpop.f32.mrb[0].mxu0
      %1228 = vmatprep.mubr.f32.mxu0 0.0
      %1229 = vmatmul.mubr.f32.gmra.mrb[0].mxu0 %v592
      %v1230 = vpop.f32.mrb[0].mxu0
      %v1231 = vadd.f32 0.0, %v1230
      %v1232 = vpop.f32.mrb[0].mxu0
      %1233 = vmatprep.mubr.f32.mxu0 0.0
      %1234 = vmatmul.mubr.f32.gmra.mrb[0].mxu0 %v594
      %v1235 = vpop.f32.mrb[0].mxu0
      %v1236 = vadd.f32 0.0, %v1235
      %v1237 = vpop.f32.mrb[0].mxu0
      %1238 = vmatprep.mubr.f32.mxu0 0.0
      %1239 = vmatmul.mubr.f32.gmra.mrb[0].mxu0 %v1097
      %v1240 = vpop.f32.mrb[0].mxu0
      %v1241 = vadd.f32 0.0, %v1240
      %v1242 = vpop.f32.mrb[0].mxu0
      %1243 = vmatprep.mubr.f32.mxu0 0.0
      %1244 = vmatmul.mubr.f32.gmra.mrb[0].mxu0 %v1099
      %v1245 = vpop.f32.mrb[0].mxu0
      %v1246 = vadd.f32 0.0, %v1245
      %v1247 = vpop.f32.mrb[0].mxu0
      %1248 = vdwg.mxu0
      %v1249 = vadd.f32 %v1079, %v1171
      %v1250 = vadd.f32 %v1080, %v1176
      %v1251 = vadd.f32 %v1081, %v1181
      %v1252 = vadd.f32 %v1082, %v1186
      %v1253 = vadd.f32 %v1083, %v1191
      %v1254 = vadd.f32 %v1084, %v1196
      %v1255 = vadd.f32 %v1085, %v1201
      %v1256 = vadd.f32 %v1086, %v1206
      %v1257 = vadd.f32 %v1087, %v1211
      %v1258 = vadd.f32 %v1088, %v1216
      %v1259 = vadd.f32 %v1089, %v1221
      %v1260 = vadd.f32 %v1090, %v1226
      %v1261 = vadd.f32 %v1091, %v1231
      %v1262 = vadd.f32 %v1092, %v1236
      %v1263 = vadd.f32 %v1093, %v1241
      %v1264 = vadd.f32 %v1094, %v1246
      %v1266 = vlaneseq
      %v1267 = vshrl.u32 %v1266, 7
      %v1268 = vsub.s32 0, %v1267
      %v1269 = vrot.slane %v427, %v1268
      %v1271 = vadd.f32 %v1249, %v1269
      %v1272 = vadd.f32 %v1250, %v1269
      %v1273 = vadd.f32 %v1251, %v1269
      %v1274 = vadd.f32 %v1252, %v1269
      %v1275 = vadd.f32 %v1253, %v1269
      %v1276 = vadd.f32 %v1254, %v1269
      %v1277 = vadd.f32 %v1255, %v1269
      %v1278 = vadd.f32 %v1256, %v1269
      %v1279 = vadd.f32 %v1257, %v1269
      %v1280 = vadd.f32 %v1258, %v1269
      %v1281 = vadd.f32 %v1259, %v1269
      %v1282 = vadd.f32 %v1260, %v1269
      %v1283 = vadd.f32 %v1261, %v1269
      %v1284 = vadd.f32 %v1262, %v1269
      %v1285 = vadd.f32 %v1263, %v1269
      %v1286 = vadd.f32 %v1264, %v1269
      %s1287 = scalar_lea.vmem %s3, 16
      %v1288 = vld [vmem:[%s1287] sm:$0xf]
      %s1289 = scalar_lea.vmem %s3, 20
      %v1290 = vld [vmem:[%s1289] sm:$0xf]
      %v1291 = vsel %vm563, %v496, 0
      %v1293 = vsel %vm563, %v498, 0
      %v1295 = vsel %vm563, %v501, 0
      %v1297 = vsel %vm563, %v503, 0
      %v1299 = vsel %vm563, %v506, 0
      %v1301 = vsel %vm563, %v508, 0
      %v1303 = vsel %vm563, %v511, 0
      %v1305 = vsel %vm563, %v513, 0
      %v1307 = vsel %vm563, %v516, 0
      %v1309 = vsel %vm563, %v518, 0
      %v1311 = vsel %vm563, %v521, 0
      %v1313 = vsel %vm563, %v523, 0
      %v1315 = vsel %vm563, %v526, 0
      %v1317 = vsel %vm563, %v528, 0
      %v1319 = vsel %vm563, %v531, 0
      %v1321 = vsel %vm563, %v533, 0
      %v1324 = vsel %vm596, %v1290, 0
      %1326 = vmatprep.subr.mxu0 0.0
      %1327 = vmatpush1.msra.mxu0 %v1324
      %1328 = vmatprep.subr.mxu0 0.0
      %1329 = vmatpush1.msra.mxu0 0.0
      %1330 = vmatprep.subr.mxu0 0.0
      %1331 = vmatpush1.msra.mxu0 0.0
      %1332 = vmatprep.subr.mxu0 0.0
      %1333 = vmatpush1.msra.mxu0 0.0
      %1334 = vmatprep.subr.mxu0 0.0
      %1335 = vmatpush1.msra.mxu0 0.0
      %1336 = vmatprep.subr.mxu0 0.0
      %1337 = vmatpush1.msra.mxu0 0.0
      %1338 = vmatprep.subr.mxu0 0.0
      %1339 = vmatpush1.msra.mxu0 0.0
      %1340 = vmatprep.subr.mxu0 0.0
      %1341 = vmatpush1.msra.mxu0 0.0
      %1342 = vmatprep.subr.mxu0 0.0
      %1343 = vmatpush1.msra.mxu0 0.0
      %1344 = vmatprep.subr.mxu0 0.0
      %1345 = vmatpush1.msra.mxu0 0.0
      %1346 = vmatprep.subr.mxu0 0.0
      %1347 = vmatpush1.msra.mxu0 0.0
      %1348 = vmatprep.subr.mxu0 0.0
      %1349 = vmatpush1.msra.mxu0 0.0
      %1350 = vmatprep.subr.mxu0 0.0
      %1351 = vmatpush1.msra.mxu0 0.0
      %1352 = vmatprep.subr.mxu0 0.0
      %1353 = vmatpush1.msra.mxu0 0.0
      %1354 = vmatprep.subr.mxu0 0.0
      %1355 = vmatpush1.msra.mxu0 0.0
      %1356 = vmatprep.subr.mxu0 0.0
      %1357 = vmatpush1.msra.mxu0 0.0
      %1358 = vmatprep.subr.mxu0 0.0
      %1359 = vmatpush1.msra.mxu0 0.0
      %1360 = vmatprep.subr.mxu0 0.0
      %1361 = vmatpush1.msra.mxu0 0.0
      %1362 = vmatprep.subr.mxu0 0.0
      %1363 = vmatpush1.msra.mxu0 0.0
      %1364 = vmatprep.subr.mxu0 0.0
      %1365 = vmatpush1.msra.mxu0 0.0
      %1366 = vmatprep.subr.mxu0 0.0
      %1367 = vmatpush1.msra.mxu0 0.0
      %1368 = vmatprep.subr.mxu0 0.0
      %1369 = vmatpush1.msra.mxu0 0.0
      %1370 = vmatprep.subr.mxu0 0.0
      %1371 = vmatpush1.msra.mxu0 0.0
      %1372 = vmatprep.subr.mxu0 0.0
      %1373 = vmatpush1.msra.mxu0 0.0
      %1374 = vmatprep.subr.mxu0 0.0
      %1375 = vmatpush1.msra.mxu0 0.0
      %1376 = vmatprep.subr.mxu0 0.0
      %1377 = vmatpush1.msra.mxu0 0.0
      %1378 = vmatprep.subr.mxu0 0.0
      %1379 = vmatpush1.msra.mxu0 0.0
      %1380 = vmatprep.subr.mxu0 0.0
      %1381 = vmatpush1.msra.mxu0 0.0
      %1382 = vmatprep.subr.mxu0 0.0
      %1383 = vmatpush1.msra.mxu0 0.0
      %1384 = vmatprep.subr.mxu0 0.0
      %1385 = vmatpush1.msra.mxu0 0.0
      %1386 = vmatprep.subr.mxu0 0.0
      %1387 = vmatpush1.msra.mxu0 0.0
      %1388 = vmatprep.subr.mxu0 0.0
      %1389 = vmatpush1.msra.mxu0 0.0
      %1390 = vmatprep.mubr.f32.mxu0 0.0
      %1391 = vmatmul.mubr.f32.gmra.mrb[0].mxu0 %v1291
      %v1392 = vpop.f32.mrb[0].mxu0
      %v1393 = vadd.f32 0.0, %v1392
      %v1394 = vpop.f32.mrb[0].mxu0
      %1395 = vmatprep.mubr.f32.mxu0 0.0
      %1396 = vmatmul.mubr.f32.gmra.mrb[0].mxu0 %v1293
      %v1397 = vpop.f32.mrb[0].mxu0
      %v1398 = vadd.f32 0.0, %v1397
      %v1399 = vpop.f32.mrb[0].mxu0
      %1400 = vmatprep.mubr.f32.mxu0 0.0
      %1401 = vmatmul.mubr.f32.gmra.mrb[0].mxu0 %v1295
      %v1402 = vpop.f32.mrb[0].mxu0
      %v1403 = vadd.f32 0.0, %v1402
      %v1404 = vpop.f32.mrb[0].mxu0
      %1405 = vmatprep.mubr.f32.mxu0 0.0
      %1406 = vmatmul.mubr.f32.gmra.mrb[0].mxu0 %v1297
      %v1407 = vpop.f32.mrb[0].mxu0
      %v1408 = vadd.f32 0.0, %v1407
      %v1409 = vpop.f32.mrb[0].mxu0
      %1410 = vmatprep.mubr.f32.mxu0 0.0
      %1411 = vmatmul.mubr.f32.gmra.mrb[0].mxu0 %v1299
      %v1412 = vpop.f32.mrb[0].mxu0
      %v1413 = vadd.f32 0.0, %v1412
      %v1414 = vpop.f32.mrb[0].mxu0
      %1415 = vmatprep.mubr.f32.mxu0 0.0
      %1416 = vmatmul.mubr.f32.gmra.mrb[0].mxu0 %v1301
      %v1417 = vpop.f32.mrb[0].mxu0
      %v1418 = vadd.f32 0.0, %v1417
      %v1419 = vpop.f32.mrb[0].mxu0
      %1420 = vmatprep.mubr.f32.mxu0 0.0
      %1421 = vmatmul.mubr.f32.gmra.mrb[0].mxu0 %v1303
      %v1422 = vpop.f32.mrb[0].mxu0
      %v1423 = vadd.f32 0.0, %v1422
      %v1424 = vpop.f32.mrb[0].mxu0
      %1425 = vmatprep.mubr.f32.mxu0 0.0
      %1426 = vmatmul.mubr.f32.gmra.mrb[0].mxu0 %v1305
      %v1427 = vpop.f32.mrb[0].mxu0
      %v1428 = vadd.f32 0.0, %v1427
      %v1429 = vpop.f32.mrb[0].mxu0
      %1430 = vmatprep.mubr.f32.mxu0 0.0
      %1431 = vmatmul.mubr.f32.gmra.mrb[0].mxu0 %v1307
      %v1432 = vpop.f32.mrb[0].mxu0
      %v1433 = vadd.f32 0.0, %v1432
      %v1434 = vpop.f32.mrb[0].mxu0
      %1435 = vmatprep.mubr.f32.mxu0 0.0
      %1436 = vmatmul.mubr.f32.gmra.mrb[0].mxu0 %v1309
      %v1437 = vpop.f32.mrb[0].mxu0
      %v1438 = vadd.f32 0.0, %v1437
      %v1439 = vpop.f32.mrb[0].mxu0
      %1440 = vmatprep.mubr.f32.mxu0 0.0
      %1441 = vmatmul.mubr.f32.gmra.mrb[0].mxu0 %v1311
      %v1442 = vpop.f32.mrb[0].mxu0
      %v1443 = vadd.f32 0.0, %v1442
      %v1444 = vpop.f32.mrb[0].mxu0
      %1445 = vmatprep.mubr.f32.mxu0 0.0
      %1446 = vmatmul.mubr.f32.gmra.mrb[0].mxu0 %v1313
      %v1447 = vpop.f32.mrb[0].mxu0
      %v1448 = vadd.f32 0.0, %v1447
      %v1449 = vpop.f32.mrb[0].mxu0
      %1450 = vmatprep.mubr.f32.mxu0 0.0
      %1451 = vmatmul.mubr.f32.gmra.mrb[0].mxu0 %v1315
      %v1452 = vpop.f32.mrb[0].mxu0
      %v1453 = vadd.f32 0.0, %v1452
      %v1454 = vpop.f32.mrb[0].mxu0
      %1455 = vmatprep.mubr.f32.mxu0 0.0
      %1456 = vmatmul.mubr.f32.gmra.mrb[0].mxu0 %v1317
      %v1457 = vpop.f32.mrb[0].mxu0
      %v1458 = vadd.f32 0.0, %v1457
      %v1459 = vpop.f32.mrb[0].mxu0
      %1460 = vmatprep.mubr.f32.mxu0 0.0
      %1461 = vmatmul.mubr.f32.gmra.mrb[0].mxu0 %v1319
      %v1462 = vpop.f32.mrb[0].mxu0
      %v1463 = vadd.f32 0.0, %v1462
      %v1464 = vpop.f32.mrb[0].mxu0
      %1465 = vmatprep.mubr.f32.mxu0 0.0
      %1466 = vmatmul.mubr.f32.gmra.mrb[0].mxu0 %v1321
      %v1467 = vpop.f32.mrb[0].mxu0
      %v1468 = vadd.f32 0.0, %v1467
      %v1469 = vpop.f32.mrb[0].mxu0
      %1470 = vdwg.mxu0
      %v1472 = vsel %vm596, %v1288, 0
      %1474 = vmatprep.subr.mxu0 0.0
      %1475 = vmatpush1.msra.mxu0 %v1472
      %1476 = vmatprep.subr.mxu0 0.0
      %1477 = vmatpush1.msra.mxu0 0.0
      %1478 = vmatprep.subr.mxu0 0.0
      %1479 = vmatpush1.msra.mxu0 0.0
      %1480 = vmatprep.subr.mxu0 0.0
      %1481 = vmatpush1.msra.mxu0 0.0
      %1482 = vmatprep.subr.mxu0 0.0
      %1483 = vmatpush1.msra.mxu0 0.0
      %1484 = vmatprep.subr.mxu0 0.0
      %1485 = vmatpush1.msra.mxu0 0.0
      %1486 = vmatprep.subr.mxu0 0.0
      %1487 = vmatpush1.msra.mxu0 0.0
      %1488 = vmatprep.subr.mxu0 0.0
      %1489 = vmatpush1.msra.mxu0 0.0
      %1490 = vmatprep.subr.mxu0 0.0
      %1491 = vmatpush1.msra.mxu0 0.0
      %1492 = vmatprep.subr.mxu0 0.0
      %1493 = vmatpush1.msra.mxu0 0.0
      %1494 = vmatprep.subr.mxu0 0.0
      %1495 = vmatpush1.msra.mxu0 0.0
      %1496 = vmatprep.subr.mxu0 0.0
      %1497 = vmatpush1.msra.mxu0 0.0
      %1498 = vmatprep.subr.mxu0 0.0
      %1499 = vmatpush1.msra.mxu0 0.0
      %1500 = vmatprep.subr.mxu0 0.0
      %1501 = vmatpush1.msra.mxu0 0.0
      %1502 = vmatprep.subr.mxu0 0.0
      %1503 = vmatpush1.msra.mxu0 0.0
      %1504 = vmatprep.subr.mxu0 0.0
      %1505 = vmatpush1.msra.mxu0 0.0
      %1506 = vmatprep.subr.mxu0 0.0
      %1507 = vmatpush1.msra.mxu0 0.0
      %1508 = vmatprep.subr.mxu0 0.0
      %1509 = vmatpush1.msra.mxu0 0.0
      %1510 = vmatprep.subr.mxu0 0.0
      %1511 = vmatpush1.msra.mxu0 0.0
      %1512 = vmatprep.subr.mxu0 0.0
      %1513 = vmatpush1.msra.mxu0 0.0
      %1514 = vmatprep.subr.mxu0 0.0
      %1515 = vmatpush1.msra.mxu0 0.0
      %1516 = vmatprep.subr.mxu0 0.0
      %1517 = vmatpush1.msra.mxu0 0.0
      %1518 = vmatprep.subr.mxu0 0.0
      %1519 = vmatpush1.msra.mxu0 0.0
      %1520 = vmatprep.subr.mxu0 0.0
      %1521 = vmatpush1.msra.mxu0 0.0
      %1522 = vmatprep.subr.mxu0 0.0
      %1523 = vmatpush1.msra.mxu0 0.0
      %1524 = vmatprep.subr.mxu0 0.0
      %1525 = vmatpush1.msra.mxu0 0.0
      %1526 = vmatprep.subr.mxu0 0.0
      %1527 = vmatpush1.msra.mxu0 0.0
      %1528 = vmatprep.subr.mxu0 0.0
      %1529 = vmatpush1.msra.mxu0 0.0
      %1530 = vmatprep.subr.mxu0 0.0
      %1531 = vmatpush1.msra.mxu0 0.0
      %1532 = vmatprep.subr.mxu0 0.0
      %1533 = vmatpush1.msra.mxu0 0.0
      %1534 = vmatprep.subr.mxu0 0.0
      %1535 = vmatpush1.msra.mxu0 0.0
      %1536 = vmatprep.subr.mxu0 0.0
      %1537 = vmatpush1.msra.mxu0 0.0
      %1538 = vmatprep.mubr.f32.mxu0 0.0
      %1539 = vmatmul.mubr.f32.gmra.mrb[0].mxu0 %v564
      %v1540 = vpop.f32.mrb[0].mxu0
      %v1541 = vadd.f32 %v1393, %v1540
      %v1542 = vpop.f32.mrb[0].mxu0
      %1543 = vmatprep.mubr.f32.mxu0 0.0
      %1544 = vmatmul.mubr.f32.gmra.mrb[0].mxu0 %v566
      %v1545 = vpop.f32.mrb[0].mxu0
      %v1546 = vadd.f32 %v1398, %v1545
      %v1547 = vpop.f32.mrb[0].mxu0
      %1548 = vmatprep.mubr.f32.mxu0 0.0
      %1549 = vmatmul.mubr.f32.gmra.mrb[0].mxu0 %v568
      %v1550 = vpop.f32.mrb[0].mxu0
      %v1551 = vadd.f32 %v1403, %v1550
      %v1552 = vpop.f32.mrb[0].mxu0
      %1553 = vmatprep.mubr.f32.mxu0 0.0
      %1554 = vmatmul.mubr.f32.gmra.mrb[0].mxu0 %v570
      %v1555 = vpop.f32.mrb[0].mxu0
      %v1556 = vadd.f32 %v1408, %v1555
      %v1557 = vpop.f32.mrb[0].mxu0
      %1558 = vmatprep.mubr.f32.mxu0 0.0
      %1559 = vmatmul.mubr.f32.gmra.mrb[0].mxu0 %v572
      %v1560 = vpop.f32.mrb[0].mxu0
      %v1561 = vadd.f32 %v1413, %v1560
      %v1562 = vpop.f32.mrb[0].mxu0
      %1563 = vmatprep.mubr.f32.mxu0 0.0
      %1564 = vmatmul.mubr.f32.gmra.mrb[0].mxu0 %v574
      %v1565 = vpop.f32.mrb[0].mxu0
      %v1566 = vadd.f32 %v1418, %v1565
      %v1567 = vpop.f32.mrb[0].mxu0
      %1568 = vmatprep.mubr.f32.mxu0 0.0
      %1569 = vmatmul.mubr.f32.gmra.mrb[0].mxu0 %v576
      %v1570 = vpop.f32.mrb[0].mxu0
      %v1571 = vadd.f32 %v1423, %v1570
      %v1572 = vpop.f32.mrb[0].mxu0
      %1573 = vmatprep.mubr.f32.mxu0 0.0
      %1574 = vmatmul.mubr.f32.gmra.mrb[0].mxu0 %v578
      %v1575 = vpop.f32.mrb[0].mxu0
      %v1576 = vadd.f32 %v1428, %v1575
      %v1577 = vpop.f32.mrb[0].mxu0
      %1578 = vmatprep.mubr.f32.mxu0 0.0
      %1579 = vmatmul.mubr.f32.gmra.mrb[0].mxu0 %v580
      %v1580 = vpop.f32.mrb[0].mxu0
      %v1581 = vadd.f32 %v1433, %v1580
      %v1582 = vpop.f32.mrb[0].mxu0
      %1583 = vmatprep.mubr.f32.mxu0 0.0
      %1584 = vmatmul.mubr.f32.gmra.mrb[0].mxu0 %v582
      %v1585 = vpop.f32.mrb[0].mxu0
      %v1586 = vadd.f32 %v1438, %v1585
      %v1587 = vpop.f32.mrb[0].mxu0
      %1588 = vmatprep.mubr.f32.mxu0 0.0
      %1589 = vmatmul.mubr.f32.gmra.mrb[0].mxu0 %v584
      %v1590 = vpop.f32.mrb[0].mxu0
      %v1591 = vadd.f32 %v1443, %v1590
      %v1592 = vpop.f32.mrb[0].mxu0
      %1593 = vmatprep.mubr.f32.mxu0 0.0
      %1594 = vmatmul.mubr.f32.gmra.mrb[0].mxu0 %v586
      %v1595 = vpop.f32.mrb[0].mxu0
      %v1596 = vadd.f32 %v1448, %v1595
      %v1597 = vpop.f32.mrb[0].mxu0
      %1598 = vmatprep.mubr.f32.mxu0 0.0
      %1599 = vmatmul.mubr.f32.gmra.mrb[0].mxu0 %v588
      %v1600 = vpop.f32.mrb[0].mxu0
      %v1601 = vadd.f32 %v1453, %v1600
      %v1602 = vpop.f32.mrb[0].mxu0
      %1603 = vmatprep.mubr.f32.mxu0 0.0
      %1604 = vmatmul.mubr.f32.gmra.mrb[0].mxu0 %v590
      %v1605 = vpop.f32.mrb[0].mxu0
      %v1606 = vadd.f32 %v1458, %v1605
      %v1607 = vpop.f32.mrb[0].mxu0
      %1608 = vmatprep.mubr.f32.mxu0 0.0
      %1609 = vmatmul.mubr.f32.gmra.mrb[0].mxu0 %v592
      %v1610 = vpop.f32.mrb[0].mxu0
      %v1611 = vadd.f32 %v1463, %v1610
      %v1612 = vpop.f32.mrb[0].mxu0
      %1613 = vmatprep.mubr.f32.mxu0 0.0
      %1614 = vmatmul.mubr.f32.gmra.mrb[0].mxu0 %v594
      %v1615 = vpop.f32.mrb[0].mxu0
      %v1616 = vadd.f32 %v1468, %v1615
      %v1617 = vpop.f32.mrb[0].mxu0
      %1618 = vdwg.mxu0
      %s1619 = scalar_lea.vmem %s3, 24
      %v1620 = vld [vmem:[%s1619] sm:$0xf]
      %v1622 = vsel %vm596, %v1620, 0
      %1624 = vmatprep.subr.mxu0 0.0
      %1625 = vmatpush1.msra.mxu0 %v1622
      %1626 = vmatprep.subr.mxu0 0.0
      %1627 = vmatpush1.msra.mxu0 0.0
      %1628 = vmatprep.subr.mxu0 0.0
      %1629 = vmatpush1.msra.mxu0 0.0
      %1630 = vmatprep.subr.mxu0 0.0
      %1631 = vmatpush1.msra.mxu0 0.0
      %1632 = vmatprep.subr.mxu0 0.0
      %1633 = vmatpush1.msra.mxu0 0.0
      %1634 = vmatprep.subr.mxu0 0.0
      %1635 = vmatpush1.msra.mxu0 0.0
      %1636 = vmatprep.subr.mxu0 0.0
      %1637 = vmatpush1.msra.mxu0 0.0
      %1638 = vmatprep.subr.mxu0 0.0
      %1639 = vmatpush1.msra.mxu0 0.0
      %1640 = vmatprep.subr.mxu0 0.0
      %1641 = vmatpush1.msra.mxu0 0.0
      %1642 = vmatprep.subr.mxu0 0.0
      %1643 = vmatpush1.msra.mxu0 0.0
      %1644 = vmatprep.subr.mxu0 0.0
      %1645 = vmatpush1.msra.mxu0 0.0
      %1646 = vmatprep.subr.mxu0 0.0
      %1647 = vmatpush1.msra.mxu0 0.0
      %1648 = vmatprep.subr.mxu0 0.0
      %1649 = vmatpush1.msra.mxu0 0.0
      %1650 = vmatprep.subr.mxu0 0.0
      %1651 = vmatpush1.msra.mxu0 0.0
      %1652 = vmatprep.subr.mxu0 0.0
      %1653 = vmatpush1.msra.mxu0 0.0
      %1654 = vmatprep.subr.mxu0 0.0
      %1655 = vmatpush1.msra.mxu0 0.0
      %1656 = vmatprep.subr.mxu0 0.0
      %1657 = vmatpush1.msra.mxu0 0.0
      %1658 = vmatprep.subr.mxu0 0.0
      %1659 = vmatpush1.msra.mxu0 0.0
      %1660 = vmatprep.subr.mxu0 0.0
      %1661 = vmatpush1.msra.mxu0 0.0
      %1662 = vmatprep.subr.mxu0 0.0
      %1663 = vmatpush1.msra.mxu0 0.0
      %1664 = vmatprep.subr.mxu0 0.0
      %1665 = vmatpush1.msra.mxu0 0.0
      %1666 = vmatprep.subr.mxu0 0.0
      %1667 = vmatpush1.msra.mxu0 0.0
      %1668 = vmatprep.subr.mxu0 0.0
      %1669 = vmatpush1.msra.mxu0 0.0
      %1670 = vmatprep.subr.mxu0 0.0
      %1671 = vmatpush1.msra.mxu0 0.0
      %1672 = vmatprep.subr.mxu0 0.0
      %1673 = vmatpush1.msra.mxu0 0.0
      %1674 = vmatprep.subr.mxu0 0.0
      %1675 = vmatpush1.msra.mxu0 0.0
      %1676 = vmatprep.subr.mxu0 0.0
      %1677 = vmatpush1.msra.mxu0 0.0
      %1678 = vmatprep.subr.mxu0 0.0
      %1679 = vmatpush1.msra.mxu0 0.0
      %1680 = vmatprep.subr.mxu0 0.0
      %1681 = vmatpush1.msra.mxu0 0.0
      %1682 = vmatprep.subr.mxu0 0.0
      %1683 = vmatpush1.msra.mxu0 0.0
      %1684 = vmatprep.subr.mxu0 0.0
      %1685 = vmatpush1.msra.mxu0 0.0
      %1686 = vmatprep.subr.mxu0 0.0
      %1687 = vmatpush1.msra.mxu0 0.0
      %1688 = vmatprep.mubr.f32.mxu0 0.0
      %1689 = vmatmul.mubr.f32.gmra.mrb[0].mxu0 %v568
      %v1690 = vpop.f32.mrb[0].mxu0
      %v1691 = vadd.f32 0.0, %v1690
      %v1692 = vpop.f32.mrb[0].mxu0
      %1693 = vmatprep.mubr.f32.mxu0 0.0
      %1694 = vmatmul.mubr.f32.gmra.mrb[0].mxu0 %v570
      %v1695 = vpop.f32.mrb[0].mxu0
      %v1696 = vadd.f32 0.0, %v1695
      %v1697 = vpop.f32.mrb[0].mxu0
      %1698 = vmatprep.mubr.f32.mxu0 0.0
      %1699 = vmatmul.mubr.f32.gmra.mrb[0].mxu0 %v572
      %v1700 = vpop.f32.mrb[0].mxu0
      %v1701 = vadd.f32 0.0, %v1700
      %v1702 = vpop.f32.mrb[0].mxu0
      %1703 = vmatprep.mubr.f32.mxu0 0.0
      %1704 = vmatmul.mubr.f32.gmra.mrb[0].mxu0 %v574
      %v1705 = vpop.f32.mrb[0].mxu0
      %v1706 = vadd.f32 0.0, %v1705
      %v1707 = vpop.f32.mrb[0].mxu0
      %1708 = vmatprep.mubr.f32.mxu0 0.0
      %1709 = vmatmul.mubr.f32.gmra.mrb[0].mxu0 %v576
      %v1710 = vpop.f32.mrb[0].mxu0
      %v1711 = vadd.f32 0.0, %v1710
      %v1712 = vpop.f32.mrb[0].mxu0
      %1713 = vmatprep.mubr.f32.mxu0 0.0
      %1714 = vmatmul.mubr.f32.gmra.mrb[0].mxu0 %v578
      %v1715 = vpop.f32.mrb[0].mxu0
      %v1716 = vadd.f32 0.0, %v1715
      %v1717 = vpop.f32.mrb[0].mxu0
      %1718 = vmatprep.mubr.f32.mxu0 0.0
      %1719 = vmatmul.mubr.f32.gmra.mrb[0].mxu0 %v580
      %v1720 = vpop.f32.mrb[0].mxu0
      %v1721 = vadd.f32 0.0, %v1720
      %v1722 = vpop.f32.mrb[0].mxu0
      %1723 = vmatprep.mubr.f32.mxu0 0.0
      %1724 = vmatmul.mubr.f32.gmra.mrb[0].mxu0 %v582
      %v1725 = vpop.f32.mrb[0].mxu0
      %v1726 = vadd.f32 0.0, %v1725
      %v1727 = vpop.f32.mrb[0].mxu0
      %1728 = vmatprep.mubr.f32.mxu0 0.0
      %1729 = vmatmul.mubr.f32.gmra.mrb[0].mxu0 %v584
      %v1730 = vpop.f32.mrb[0].mxu0
      %v1731 = vadd.f32 0.0, %v1730
      %v1732 = vpop.f32.mrb[0].mxu0
      %1733 = vmatprep.mubr.f32.mxu0 0.0
      %1734 = vmatmul.mubr.f32.gmra.mrb[0].mxu0 %v586
      %v1735 = vpop.f32.mrb[0].mxu0
      %v1736 = vadd.f32 0.0, %v1735
      %v1737 = vpop.f32.mrb[0].mxu0
      %1738 = vmatprep.mubr.f32.mxu0 0.0
      %1739 = vmatmul.mubr.f32.gmra.mrb[0].mxu0 %v588
      %v1740 = vpop.f32.mrb[0].mxu0
      %v1741 = vadd.f32 0.0, %v1740
      %v1742 = vpop.f32.mrb[0].mxu0
      %1743 = vmatprep.mubr.f32.mxu0 0.0
      %1744 = vmatmul.mubr.f32.gmra.mrb[0].mxu0 %v590
      %v1745 = vpop.f32.mrb[0].mxu0
      %v1746 = vadd.f32 0.0, %v1745
      %v1747 = vpop.f32.mrb[0].mxu0
      %1748 = vmatprep.mubr.f32.mxu0 0.0
      %1749 = vmatmul.mubr.f32.gmra.mrb[0].mxu0 %v592
      %v1750 = vpop.f32.mrb[0].mxu0
      %v1751 = vadd.f32 0.0, %v1750
      %v1752 = vpop.f32.mrb[0].mxu0
      %1753 = vmatprep.mubr.f32.mxu0 0.0
      %1754 = vmatmul.mubr.f32.gmra.mrb[0].mxu0 %v594
      %v1755 = vpop.f32.mrb[0].mxu0
      %v1756 = vadd.f32 0.0, %v1755
      %v1757 = vpop.f32.mrb[0].mxu0
      %1758 = vmatprep.mubr.f32.mxu0 0.0
      %1759 = vmatmul.mubr.f32.gmra.mrb[0].mxu0 %v1097
      %v1760 = vpop.f32.mrb[0].mxu0
      %v1761 = vadd.f32 0.0, %v1760
      %v1762 = vpop.f32.mrb[0].mxu0
      %1763 = vmatprep.mubr.f32.mxu0 0.0
      %1764 = vmatmul.mubr.f32.gmra.mrb[0].mxu0 %v1099
      %v1765 = vpop.f32.mrb[0].mxu0
      %v1766 = vadd.f32 0.0, %v1765
      %v1767 = vpop.f32.mrb[0].mxu0
      %1768 = vdwg.mxu0
      %v1769 = vadd.f32 %v1541, %v1691
      %v1770 = vadd.f32 %v1546, %v1696
      %v1771 = vadd.f32 %v1551, %v1701
      %v1772 = vadd.f32 %v1556, %v1706
      %v1773 = vadd.f32 %v1561, %v1711
      %v1774 = vadd.f32 %v1566, %v1716
      %v1775 = vadd.f32 %v1571, %v1721
      %v1776 = vadd.f32 %v1576, %v1726
      %v1777 = vadd.f32 %v1581, %v1731
      %v1778 = vadd.f32 %v1586, %v1736
      %v1779 = vadd.f32 %v1591, %v1741
      %v1780 = vadd.f32 %v1596, %v1746
      %v1781 = vadd.f32 %v1601, %v1751
      %v1782 = vadd.f32 %v1606, %v1756
      %v1783 = vadd.f32 %v1611, %v1761
      %v1784 = vadd.f32 %v1616, %v1766
      %s1785 = scalar_lea.vmem %s3, 28
      %v1786 = vld [vmem:[%s1785] sm:$0xf]
      %v1787 = vsel %vm563, %v544, 0
      %v1789 = vsel %vm563, %v546, 0
      %v1792 = vsel %vm596, %v1786, 0
      %1794 = vmatprep.subr.mxu0 0.0
      %1795 = vmatpush1.msra.mxu0 %v1792
      %1796 = vmatprep.subr.mxu0 0.0
      %1797 = vmatpush1.msra.mxu0 0.0
      %1798 = vmatprep.subr.mxu0 0.0
      %1799 = vmatpush1.msra.mxu0 0.0
      %1800 = vmatprep.subr.mxu0 0.0
      %1801 = vmatpush1.msra.mxu0 0.0
      %1802 = vmatprep.subr.mxu0 0.0
      %1803 = vmatpush1.msra.mxu0 0.0
      %1804 = vmatprep.subr.mxu0 0.0
      %1805 = vmatpush1.msra.mxu0 0.0
      %1806 = vmatprep.subr.mxu0 0.0
      %1807 = vmatpush1.msra.mxu0 0.0
      %1808 = vmatprep.subr.mxu0 0.0
      %1809 = vmatpush1.msra.mxu0 0.0
      %1810 = vmatprep.subr.mxu0 0.0
      %1811 = vmatpush1.msra.mxu0 0.0
      %1812 = vmatprep.subr.mxu0 0.0
      %1813 = vmatpush1.msra.mxu0 0.0
      %1814 = vmatprep.subr.mxu0 0.0
      %1815 = vmatpush1.msra.mxu0 0.0
      %1816 = vmatprep.subr.mxu0 0.0
      %1817 = vmatpush1.msra.mxu0 0.0
      %1818 = vmatprep.subr.mxu0 0.0
      %1819 = vmatpush1.msra.mxu0 0.0
      %1820 = vmatprep.subr.mxu0 0.0
      %1821 = vmatpush1.msra.mxu0 0.0
      %1822 = vmatprep.subr.mxu0 0.0
      %1823 = vmatpush1.msra.mxu0 0.0
      %1824 = vmatprep.subr.mxu0 0.0
      %1825 = vmatpush1.msra.mxu0 0.0
      %1826 = vmatprep.subr.mxu0 0.0
      %1827 = vmatpush1.msra.mxu0 0.0
      %1828 = vmatprep.subr.mxu0 0.0
      %1829 = vmatpush1.msra.mxu0 0.0
      %1830 = vmatprep.subr.mxu0 0.0
      %1831 = vmatpush1.msra.mxu0 0.0
      %1832 = vmatprep.subr.mxu0 0.0
      %1833 = vmatpush1.msra.mxu0 0.0
      %1834 = vmatprep.subr.mxu0 0.0
      %1835 = vmatpush1.msra.mxu0 0.0
      %1836 = vmatprep.subr.mxu0 0.0
      %1837 = vmatpush1.msra.mxu0 0.0
      %1838 = vmatprep.subr.mxu0 0.0
      %1839 = vmatpush1.msra.mxu0 0.0
      %1840 = vmatprep.subr.mxu0 0.0
      %1841 = vmatpush1.msra.mxu0 0.0
      %1842 = vmatprep.subr.mxu0 0.0
      %1843 = vmatpush1.msra.mxu0 0.0
      %1844 = vmatprep.subr.mxu0 0.0
      %1845 = vmatpush1.msra.mxu0 0.0
      %1846 = vmatprep.subr.mxu0 0.0
      %1847 = vmatpush1.msra.mxu0 0.0
      %1848 = vmatprep.subr.mxu0 0.0
      %1849 = vmatpush1.msra.mxu0 0.0
      %1850 = vmatprep.subr.mxu0 0.0
      %1851 = vmatpush1.msra.mxu0 0.0
      %1852 = vmatprep.subr.mxu0 0.0
      %1853 = vmatpush1.msra.mxu0 0.0
      %1854 = vmatprep.subr.mxu0 0.0
      %1855 = vmatpush1.msra.mxu0 0.0
      %1856 = vmatprep.subr.mxu0 0.0
      %1857 = vmatpush1.msra.mxu0 0.0
      %1858 = vmatprep.mubr.f32.mxu0 0.0
      %1859 = vmatmul.mubr.f32.gmra.mrb[0].mxu0 %v1295
      %v1860 = vpop.f32.mrb[0].mxu0
      %v1861 = vadd.f32 0.0, %v1860
      %v1862 = vpop.f32.mrb[0].mxu0
      %1863 = vmatprep.mubr.f32.mxu0 0.0
      %1864 = vmatmul.mubr.f32.gmra.mrb[0].mxu0 %v1297
      %v1865 = vpop.f32.mrb[0].mxu0
      %v1866 = vadd.f32 0.0, %v1865
      %v1867 = vpop.f32.mrb[0].mxu0
      %1868 = vmatprep.mubr.f32.mxu0 0.0
      %1869 = vmatmul.mubr.f32.gmra.mrb[0].mxu0 %v1299
      %v1870 = vpop.f32.mrb[0].mxu0
      %v1871 = vadd.f32 0.0, %v1870
      %v1872 = vpop.f32.mrb[0].mxu0
      %1873 = vmatprep.mubr.f32.mxu0 0.0
      %1874 = vmatmul.mubr.f32.gmra.mrb[0].mxu0 %v1301
      %v1875 = vpop.f32.mrb[0].mxu0
      %v1876 = vadd.f32 0.0, %v1875
      %v1877 = vpop.f32.mrb[0].mxu0
      %1878 = vmatprep.mubr.f32.mxu0 0.0
      %1879 = vmatmul.mubr.f32.gmra.mrb[0].mxu0 %v1303
      %v1880 = vpop.f32.mrb[0].mxu0
      %v1881 = vadd.f32 0.0, %v1880
      %v1882 = vpop.f32.mrb[0].mxu0
      %1883 = vmatprep.mubr.f32.mxu0 0.0
      %1884 = vmatmul.mubr.f32.gmra.mrb[0].mxu0 %v1305
      %v1885 = vpop.f32.mrb[0].mxu0
      %v1886 = vadd.f32 0.0, %v1885
      %v1887 = vpop.f32.mrb[0].mxu0
      %1888 = vmatprep.mubr.f32.mxu0 0.0
      %1889 = vmatmul.mubr.f32.gmra.mrb[0].mxu0 %v1307
      %v1890 = vpop.f32.mrb[0].mxu0
      %v1891 = vadd.f32 0.0, %v1890
      %v1892 = vpop.f32.mrb[0].mxu0
      %1893 = vmatprep.mubr.f32.mxu0 0.0
      %1894 = vmatmul.mubr.f32.gmra.mrb[0].mxu0 %v1309
      %v1895 = vpop.f32.mrb[0].mxu0
      %v1896 = vadd.f32 0.0, %v1895
      %v1897 = vpop.f32.mrb[0].mxu0
      %1898 = vmatprep.mubr.f32.mxu0 0.0
      %1899 = vmatmul.mubr.f32.gmra.mrb[0].mxu0 %v1311
      %v1900 = vpop.f32.mrb[0].mxu0
      %v1901 = vadd.f32 0.0, %v1900
      %v1902 = vpop.f32.mrb[0].mxu0
      %1903 = vmatprep.mubr.f32.mxu0 0.0
      %1904 = vmatmul.mubr.f32.gmra.mrb[0].mxu0 %v1313
      %v1905 = vpop.f32.mrb[0].mxu0
      %v1906 = vadd.f32 0.0, %v1905
      %v1907 = vpop.f32.mrb[0].mxu0
      %1908 = vmatprep.mubr.f32.mxu0 0.0
      %1909 = vmatmul.mubr.f32.gmra.mrb[0].mxu0 %v1315
      %v1910 = vpop.f32.mrb[0].mxu0
      %v1911 = vadd.f32 0.0, %v1910
      %v1912 = vpop.f32.mrb[0].mxu0
      %1913 = vmatprep.mubr.f32.mxu0 0.0
      %1914 = vmatmul.mubr.f32.gmra.mrb[0].mxu0 %v1317
      %v1915 = vpop.f32.mrb[0].mxu0
      %v1916 = vadd.f32 0.0, %v1915
      %v1917 = vpop.f32.mrb[0].mxu0
      %1918 = vmatprep.mubr.f32.mxu0 0.0
      %1919 = vmatmul.mubr.f32.gmra.mrb[0].mxu0 %v1319
      %v1920 = vpop.f32.mrb[0].mxu0
      %v1921 = vadd.f32 0.0, %v1920
      %v1922 = vpop.f32.mrb[0].mxu0
      %1923 = vmatprep.mubr.f32.mxu0 0.0
      %1924 = vmatmul.mubr.f32.gmra.mrb[0].mxu0 %v1321
      %v1925 = vpop.f32.mrb[0].mxu0
      %v1926 = vadd.f32 0.0, %v1925
      %v1927 = vpop.f32.mrb[0].mxu0
      %1928 = vmatprep.mubr.f32.mxu0 0.0
      %1929 = vmatmul.mubr.f32.gmra.mrb[0].mxu0 %v1787
      %v1930 = vpop.f32.mrb[0].mxu0
      %v1931 = vadd.f32 0.0, %v1930
      %v1932 = vpop.f32.mrb[0].mxu0
      %1933 = vmatprep.mubr.f32.mxu0 0.0
      %1934 = vmatmul.mubr.f32.gmra.mrb[0].mxu0 %v1789
      %v1935 = vpop.f32.mrb[0].mxu0
      %v1936 = vadd.f32 0.0, %v1935
      %v1937 = vpop.f32.mrb[0].mxu0
      %1938 = vdwg.mxu0
      %v1939 = vadd.f32 %v1769, %v1861
      %v1940 = vadd.f32 %v1770, %v1866
      %v1941 = vadd.f32 %v1771, %v1871
      %v1942 = vadd.f32 %v1772, %v1876
      %v1943 = vadd.f32 %v1773, %v1881
      %v1944 = vadd.f32 %v1774, %v1886
      %v1945 = vadd.f32 %v1775, %v1891
      %v1946 = vadd.f32 %v1776, %v1896
      %v1947 = vadd.f32 %v1777, %v1901
      %v1948 = vadd.f32 %v1778, %v1906
      %v1949 = vadd.f32 %v1779, %v1911
      %v1950 = vadd.f32 %v1780, %v1916
      %v1951 = vadd.f32 %v1781, %v1921
      %v1952 = vadd.f32 %v1782, %v1926
      %v1953 = vadd.f32 %v1783, %v1931
      %v1954 = vadd.f32 %v1784, %v1936
      %v1955 = vadd.f32 %v1939, %v1269
      %v1956 = vadd.f32 %v1940, %v1269
      %v1957 = vadd.f32 %v1941, %v1269
      %v1958 = vadd.f32 %v1942, %v1269
      %v1959 = vadd.f32 %v1943, %v1269
      %v1960 = vadd.f32 %v1944, %v1269
      %v1961 = vadd.f32 %v1945, %v1269
      %v1962 = vadd.f32 %v1946, %v1269
      %v1963 = vadd.f32 %v1947, %v1269
      %v1964 = vadd.f32 %v1948, %v1269
      %v1965 = vadd.f32 %v1949, %v1269
      %v1966 = vadd.f32 %v1950, %v1269
      %v1967 = vadd.f32 %v1951, %v1269
      %v1968 = vadd.f32 %v1952, %v1269
      %v1969 = vadd.f32 %v1953, %v1269
      %v1970 = vadd.f32 %v1954, %v1269
      %1987 = vrot.lane.b32.xlu0 %v1955, 4
      %v1988 = vpop.permute.xlu0 %1987
      %1989 = vrot.lane.b32.xlu0 %v1956, 4
      %v1990 = vpop.permute.xlu0 %1989
      %1991 = vrot.lane.b32.xlu0 %v1957, 4
      %v1992 = vpop.permute.xlu0 %1991
      %1993 = vrot.lane.b32.xlu0 %v1958, 4
      %v1994 = vpop.permute.xlu0 %1993
      %1995 = vrot.lane.b32.xlu0 %v1959, 4
      %v1996 = vpop.permute.xlu0 %1995
      %1997 = vrot.lane.b32.xlu0 %v1960, 4
      %v1998 = vpop.permute.xlu0 %1997
      %1999 = vrot.lane.b32.xlu0 %v1961, 4
      %v2000 = vpop.permute.xlu0 %1999
      %2001 = vrot.lane.b32.xlu0 %v1962, 4
      %v2002 = vpop.permute.xlu0 %2001
      %2003 = vrot.lane.b32.xlu0 %v1963, 4
      %v2004 = vpop.permute.xlu0 %2003
      %2005 = vrot.lane.b32.xlu0 %v1964, 4
      %v2006 = vpop.permute.xlu0 %2005
      %2007 = vrot.lane.b32.xlu0 %v1965, 4
      %v2008 = vpop.permute.xlu0 %2007
      %2009 = vrot.lane.b32.xlu0 %v1966, 4
      %v2010 = vpop.permute.xlu0 %2009
      %2011 = vrot.lane.b32.xlu0 %v1967, 4
      %v2012 = vpop.permute.xlu0 %2011
      %2013 = vrot.lane.b32.xlu0 %v1968, 4
      %v2014 = vpop.permute.xlu0 %2013
      %2015 = vrot.lane.b32.xlu0 %v1969, 4
      %v2016 = vpop.permute.xlu0 %2015
      %2017 = vrot.lane.b32.xlu0 %v1970, 4
      %v2018 = vpop.permute.xlu0 %2017
      %v2035 = vsel %vm563, %v1271, %v1988
      %v2036 = vsel %vm563, %v1272, %v1990
      %v2037 = vsel %vm563, %v1273, %v1992
      %v2038 = vsel %vm563, %v1274, %v1994
      %v2039 = vsel %vm563, %v1275, %v1996
      %v2040 = vsel %vm563, %v1276, %v1998
      %v2041 = vsel %vm563, %v1277, %v2000
      %v2042 = vsel %vm563, %v1278, %v2002
      %v2043 = vsel %vm563, %v1279, %v2004
      %v2044 = vsel %vm563, %v1280, %v2006
      %v2045 = vsel %vm563, %v1281, %v2008
      %v2046 = vsel %vm563, %v1282, %v2010
      %v2047 = vsel %vm563, %v1283, %v2012
      %v2048 = vsel %vm563, %v1284, %v2014
      %v2049 = vsel %vm563, %v1285, %v2016
      %v2050 = vsel %vm563, %v1286, %v2018
      %vm2051 = vcmask 64512
      %2052 = vst.msk [vmem:[%s395] sm:$0xff] %vm2051, %v2035
      %2053 = vst.msk [vmem:[%s395 + $0x8] sm:$0xff] %vm2051, %v2036
      %2054 = vst.msk [vmem:[%s395 + $0x20] sm:$0xff] %vm2051, %v2037
      %2055 = vst.msk [vmem:[%s395 + $0x28] sm:$0xff] %vm2051, %v2038
      %2056 = vst.msk [vmem:[%s395 + $0x40] sm:$0xff] %vm2051, %v2039
      %2057 = vst.msk [vmem:[%s395 + $0x48] sm:$0xff] %vm2051, %v2040
      %2058 = vst.msk [vmem:[%s395 + $0x60] sm:$0xff] %vm2051, %v2041
      %2059 = vst.msk [vmem:[%s395 + $0x68] sm:$0xff] %vm2051, %v2042
      %2060 = vst.msk [vmem:[%s395 + $0x80] sm:$0xff] %vm2051, %v2043
      %2061 = vst.msk [vmem:[%s395 + $0x88] sm:$0xff] %vm2051, %v2044
      %2062 = vst.msk [vmem:[%s395 + $0xa0] sm:$0xff] %vm2051, %v2045
      %2063 = vst.msk [vmem:[%s395 + $0xa8] sm:$0xff] %vm2051, %v2046
      %2064 = vst.msk [vmem:[%s395 + $0xc0] sm:$0xff] %vm2051, %v2047
      %2065 = vst.msk [vmem:[%s395 + $0xc8] sm:$0xff] %vm2051, %v2048
      %2066 = vst.msk [vmem:[%s395 + $0xe0] sm:$0xff] %vm2051, %v2049
      %2067 = vst.msk [vmem:[%s395 + $0xe8] sm:$0xff] %vm2051, %v2050
      %s2068 = scalar_lea.vmem %s3, 32
      %v2069 = vld [vmem:[%s2068] sm:$0xf]
      %s2070 = scalar_lea.vmem %s3, 36
      %v2071 = vld [vmem:[%s2070] sm:$0xf]
      %v2073 = vsel %vm596, %v2071, 0
      %2075 = vmatprep.subr.mxu0 0.0
      %2076 = vmatpush1.msra.mxu0 %v2073
      %2077 = vmatprep.subr.mxu0 0.0
      %2078 = vmatpush1.msra.mxu0 0.0
      %2079 = vmatprep.subr.mxu0 0.0
      %2080 = vmatpush1.msra.mxu0 0.0
      %2081 = vmatprep.subr.mxu0 0.0
      %2082 = vmatpush1.msra.mxu0 0.0
      %2083 = vmatprep.subr.mxu0 0.0
      %2084 = vmatpush1.msra.mxu0 0.0
      %2085 = vmatprep.subr.mxu0 0.0
      %2086 = vmatpush1.msra.mxu0 0.0
      %2087 = vmatprep.subr.mxu0 0.0
      %2088 = vmatpush1.msra.mxu0 0.0
      %2089 = vmatprep.subr.mxu0 0.0
      %2090 = vmatpush1.msra.mxu0 0.0
      %2091 = vmatprep.subr.mxu0 0.0
      %2092 = vmatpush1.msra.mxu0 0.0
      %2093 = vmatprep.subr.mxu0 0.0
      %2094 = vmatpush1.msra.mxu0 0.0
      %2095 = vmatprep.subr.mxu0 0.0
      %2096 = vmatpush1.msra.mxu0 0.0
      %2097 = vmatprep.subr.mxu0 0.0
      %2098 = vmatpush1.msra.mxu0 0.0
      %2099 = vmatprep.subr.mxu0 0.0
      %2100 = vmatpush1.msra.mxu0 0.0
      %2101 = vmatprep.subr.mxu0 0.0
      %2102 = vmatpush1.msra.mxu0 0.0
      %2103 = vmatprep.subr.mxu0 0.0
      %2104 = vmatpush1.msra.mxu0 0.0
      %2105 = vmatprep.subr.mxu0 0.0
      %2106 = vmatpush1.msra.mxu0 0.0
      %2107 = vmatprep.subr.mxu0 0.0
      %2108 = vmatpush1.msra.mxu0 0.0
      %2109 = vmatprep.subr.mxu0 0.0
      %2110 = vmatpush1.msra.mxu0 0.0
      %2111 = vmatprep.subr.mxu0 0.0
      %2112 = vmatpush1.msra.mxu0 0.0
      %2113 = vmatprep.subr.mxu0 0.0
      %2114 = vmatpush1.msra.mxu0 0.0
      %2115 = vmatprep.subr.mxu0 0.0
      %2116 = vmatpush1.msra.mxu0 0.0
      %2117 = vmatprep.subr.mxu0 0.0
      %2118 = vmatpush1.msra.mxu0 0.0
      %2119 = vmatprep.subr.mxu0 0.0
      %2120 = vmatpush1.msra.mxu0 0.0
      %2121 = vmatprep.subr.mxu0 0.0
      %2122 = vmatpush1.msra.mxu0 0.0
      %2123 = vmatprep.subr.mxu0 0.0
      %2124 = vmatpush1.msra.mxu0 0.0
      %2125 = vmatprep.subr.mxu0 0.0
      %2126 = vmatpush1.msra.mxu0 0.0
      %2127 = vmatprep.subr.mxu0 0.0
      %2128 = vmatpush1.msra.mxu0 0.0
      %2129 = vmatprep.subr.mxu0 0.0
      %2130 = vmatpush1.msra.mxu0 0.0
      %2131 = vmatprep.subr.mxu0 0.0
      %2132 = vmatpush1.msra.mxu0 0.0
      %2133 = vmatprep.subr.mxu0 0.0
      %2134 = vmatpush1.msra.mxu0 0.0
      %2135 = vmatprep.subr.mxu0 0.0
      %2136 = vmatpush1.msra.mxu0 0.0
      %2137 = vmatprep.subr.mxu0 0.0
      %2138 = vmatpush1.msra.mxu0 0.0
      %2139 = vmatprep.mubr.f32.mxu0 0.0
      %2140 = vmatmul.mubr.f32.gmra.mrb[0].mxu0 %v568
      %v2141 = vpop.f32.mrb[0].mxu0
      %v2142 = vadd.f32 0.0, %v2141
      %v2143 = vpop.f32.mrb[0].mxu0
      %2144 = vmatprep.mubr.f32.mxu0 0.0
      %2145 = vmatmul.mubr.f32.gmra.mrb[0].mxu0 %v570
      %v2146 = vpop.f32.mrb[0].mxu0
      %v2147 = vadd.f32 0.0, %v2146
      %v2148 = vpop.f32.mrb[0].mxu0
      %2149 = vmatprep.mubr.f32.mxu0 0.0
      %2150 = vmatmul.mubr.f32.gmra.mrb[0].mxu0 %v572
      %v2151 = vpop.f32.mrb[0].mxu0
      %v2152 = vadd.f32 0.0, %v2151
      %v2153 = vpop.f32.mrb[0].mxu0
      %2154 = vmatprep.mubr.f32.mxu0 0.0
      %2155 = vmatmul.mubr.f32.gmra.mrb[0].mxu0 %v574
      %v2156 = vpop.f32.mrb[0].mxu0
      %v2157 = vadd.f32 0.0, %v2156
      %v2158 = vpop.f32.mrb[0].mxu0
      %2159 = vmatprep.mubr.f32.mxu0 0.0
      %2160 = vmatmul.mubr.f32.gmra.mrb[0].mxu0 %v576
      %v2161 = vpop.f32.mrb[0].mxu0
      %v2162 = vadd.f32 0.0, %v2161
      %v2163 = vpop.f32.mrb[0].mxu0
      %2164 = vmatprep.mubr.f32.mxu0 0.0
      %2165 = vmatmul.mubr.f32.gmra.mrb[0].mxu0 %v578
      %v2166 = vpop.f32.mrb[0].mxu0
      %v2167 = vadd.f32 0.0, %v2166
      %v2168 = vpop.f32.mrb[0].mxu0
      %2169 = vmatprep.mubr.f32.mxu0 0.0
      %2170 = vmatmul.mubr.f32.gmra.mrb[0].mxu0 %v580
      %v2171 = vpop.f32.mrb[0].mxu0
      %v2172 = vadd.f32 0.0, %v2171
      %v2173 = vpop.f32.mrb[0].mxu0
      %2174 = vmatprep.mubr.f32.mxu0 0.0
      %2175 = vmatmul.mubr.f32.gmra.mrb[0].mxu0 %v582
      %v2176 = vpop.f32.mrb[0].mxu0
      %v2177 = vadd.f32 0.0, %v2176
      %v2178 = vpop.f32.mrb[0].mxu0
      %2179 = vmatprep.mubr.f32.mxu0 0.0
      %2180 = vmatmul.mubr.f32.gmra.mrb[0].mxu0 %v584
      %v2181 = vpop.f32.mrb[0].mxu0
      %v2182 = vadd.f32 0.0, %v2181
      %v2183 = vpop.f32.mrb[0].mxu0
      %2184 = vmatprep.mubr.f32.mxu0 0.0
      %2185 = vmatmul.mubr.f32.gmra.mrb[0].mxu0 %v586
      %v2186 = vpop.f32.mrb[0].mxu0
      %v2187 = vadd.f32 0.0, %v2186
      %v2188 = vpop.f32.mrb[0].mxu0
      %2189 = vmatprep.mubr.f32.mxu0 0.0
      %2190 = vmatmul.mubr.f32.gmra.mrb[0].mxu0 %v588
      %v2191 = vpop.f32.mrb[0].mxu0
      %v2192 = vadd.f32 0.0, %v2191
      %v2193 = vpop.f32.mrb[0].mxu0
      %2194 = vmatprep.mubr.f32.mxu0 0.0
      %2195 = vmatmul.mubr.f32.gmra.mrb[0].mxu0 %v590
      %v2196 = vpop.f32.mrb[0].mxu0
      %v2197 = vadd.f32 0.0, %v2196
      %v2198 = vpop.f32.mrb[0].mxu0
      %2199 = vmatprep.mubr.f32.mxu0 0.0
      %2200 = vmatmul.mubr.f32.gmra.mrb[0].mxu0 %v592
      %v2201 = vpop.f32.mrb[0].mxu0
      %v2202 = vadd.f32 0.0, %v2201
      %v2203 = vpop.f32.mrb[0].mxu0
      %2204 = vmatprep.mubr.f32.mxu0 0.0
      %2205 = vmatmul.mubr.f32.gmra.mrb[0].mxu0 %v594
      %v2206 = vpop.f32.mrb[0].mxu0
      %v2207 = vadd.f32 0.0, %v2206
      %v2208 = vpop.f32.mrb[0].mxu0
      %2209 = vmatprep.mubr.f32.mxu0 0.0
      %2210 = vmatmul.mubr.f32.gmra.mrb[0].mxu0 %v1097
      %v2211 = vpop.f32.mrb[0].mxu0
      %v2212 = vadd.f32 0.0, %v2211
      %v2213 = vpop.f32.mrb[0].mxu0
      %2214 = vmatprep.mubr.f32.mxu0 0.0
      %2215 = vmatmul.mubr.f32.gmra.mrb[0].mxu0 %v1099
      %v2216 = vpop.f32.mrb[0].mxu0
      %v2217 = vadd.f32 0.0, %v2216
      %v2218 = vpop.f32.mrb[0].mxu0
      %2219 = vdwg.mxu0
      %v2221 = vsel %vm596, %v2069, 0
      %2223 = vmatprep.subr.mxu0 0.0
      %2224 = vmatpush1.msra.mxu0 %v2221
      %2225 = vmatprep.subr.mxu0 0.0
      %2226 = vmatpush1.msra.mxu0 0.0
      %2227 = vmatprep.subr.mxu0 0.0
      %2228 = vmatpush1.msra.mxu0 0.0
      %2229 = vmatprep.subr.mxu0 0.0
      %2230 = vmatpush1.msra.mxu0 0.0
      %2231 = vmatprep.subr.mxu0 0.0
      %2232 = vmatpush1.msra.mxu0 0.0
      %2233 = vmatprep.subr.mxu0 0.0
      %2234 = vmatpush1.msra.mxu0 0.0
      %2235 = vmatprep.subr.mxu0 0.0
      %2236 = vmatpush1.msra.mxu0 0.0
      %2237 = vmatprep.subr.mxu0 0.0
      %2238 = vmatpush1.msra.mxu0 0.0
      %2239 = vmatprep.subr.mxu0 0.0
      %2240 = vmatpush1.msra.mxu0 0.0
      %2241 = vmatprep.subr.mxu0 0.0
      %2242 = vmatpush1.msra.mxu0 0.0
      %2243 = vmatprep.subr.mxu0 0.0
      %2244 = vmatpush1.msra.mxu0 0.0
      %2245 = vmatprep.subr.mxu0 0.0
      %2246 = vmatpush1.msra.mxu0 0.0
      %2247 = vmatprep.subr.mxu0 0.0
      %2248 = vmatpush1.msra.mxu0 0.0
      %2249 = vmatprep.subr.mxu0 0.0
      %2250 = vmatpush1.msra.mxu0 0.0
      %2251 = vmatprep.subr.mxu0 0.0
      %2252 = vmatpush1.msra.mxu0 0.0
      %2253 = vmatprep.subr.mxu0 0.0
      %2254 = vmatpush1.msra.mxu0 0.0
      %2255 = vmatprep.subr.mxu0 0.0
      %2256 = vmatpush1.msra.mxu0 0.0
      %2257 = vmatprep.subr.mxu0 0.0
      %2258 = vmatpush1.msra.mxu0 0.0
      %2259 = vmatprep.subr.mxu0 0.0
      %2260 = vmatpush1.msra.mxu0 0.0
      %2261 = vmatprep.subr.mxu0 0.0
      %2262 = vmatpush1.msra.mxu0 0.0
      %2263 = vmatprep.subr.mxu0 0.0
      %2264 = vmatpush1.msra.mxu0 0.0
      %2265 = vmatprep.subr.mxu0 0.0
      %2266 = vmatpush1.msra.mxu0 0.0
      %2267 = vmatprep.subr.mxu0 0.0
      %2268 = vmatpush1.msra.mxu0 0.0
      %2269 = vmatprep.subr.mxu0 0.0
      %2270 = vmatpush1.msra.mxu0 0.0
      %2271 = vmatprep.subr.mxu0 0.0
      %2272 = vmatpush1.msra.mxu0 0.0
      %2273 = vmatprep.subr.mxu0 0.0
      %2274 = vmatpush1.msra.mxu0 0.0
      %2275 = vmatprep.subr.mxu0 0.0
      %2276 = vmatpush1.msra.mxu0 0.0
      %2277 = vmatprep.subr.mxu0 0.0
      %2278 = vmatpush1.msra.mxu0 0.0
      %2279 = vmatprep.subr.mxu0 0.0
      %2280 = vmatpush1.msra.mxu0 0.0
      %2281 = vmatprep.subr.mxu0 0.0
      %2282 = vmatpush1.msra.mxu0 0.0
      %2283 = vmatprep.subr.mxu0 0.0
      %2284 = vmatpush1.msra.mxu0 0.0
      %2285 = vmatprep.subr.mxu0 0.0
      %2286 = vmatpush1.msra.mxu0 0.0
      %2287 = vmatprep.mubr.f32.mxu0 0.0
      %2288 = vmatmul.mubr.f32.gmra.mrb[0].mxu0 %v749
      %v2289 = vpop.f32.mrb[0].mxu0
      %v2290 = vadd.f32 %v2142, %v2289
      %v2291 = vpop.f32.mrb[0].mxu0
      %2292 = vmatprep.mubr.f32.mxu0 0.0
      %2293 = vmatmul.mubr.f32.gmra.mrb[0].mxu0 %v751
      %v2294 = vpop.f32.mrb[0].mxu0
      %v2295 = vadd.f32 %v2147, %v2294
      %v2296 = vpop.f32.mrb[0].mxu0
      %2297 = vmatprep.mubr.f32.mxu0 0.0
      %2298 = vmatmul.mubr.f32.gmra.mrb[0].mxu0 %v753
      %v2299 = vpop.f32.mrb[0].mxu0
      %v2300 = vadd.f32 %v2152, %v2299
      %v2301 = vpop.f32.mrb[0].mxu0
      %2302 = vmatprep.mubr.f32.mxu0 0.0
      %2303 = vmatmul.mubr.f32.gmra.mrb[0].mxu0 %v755
      %v2304 = vpop.f32.mrb[0].mxu0
      %v2305 = vadd.f32 %v2157, %v2304
      %v2306 = vpop.f32.mrb[0].mxu0
      %2307 = vmatprep.mubr.f32.mxu0 0.0
      %2308 = vmatmul.mubr.f32.gmra.mrb[0].mxu0 %v757
      %v2309 = vpop.f32.mrb[0].mxu0
      %v2310 = vadd.f32 %v2162, %v2309
      %v2311 = vpop.f32.mrb[0].mxu0
      %2312 = vmatprep.mubr.f32.mxu0 0.0
      %2313 = vmatmul.mubr.f32.gmra.mrb[0].mxu0 %v759
      %v2314 = vpop.f32.mrb[0].mxu0
      %v2315 = vadd.f32 %v2167, %v2314
      %v2316 = vpop.f32.mrb[0].mxu0
      %2317 = vmatprep.mubr.f32.mxu0 0.0
      %2318 = vmatmul.mubr.f32.gmra.mrb[0].mxu0 %v761
      %v2319 = vpop.f32.mrb[0].mxu0
      %v2320 = vadd.f32 %v2172, %v2319
      %v2321 = vpop.f32.mrb[0].mxu0
      %2322 = vmatprep.mubr.f32.mxu0 0.0
      %2323 = vmatmul.mubr.f32.gmra.mrb[0].mxu0 %v763
      %v2324 = vpop.f32.mrb[0].mxu0
      %v2325 = vadd.f32 %v2177, %v2324
      %v2326 = vpop.f32.mrb[0].mxu0
      %2327 = vmatprep.mubr.f32.mxu0 0.0
      %2328 = vmatmul.mubr.f32.gmra.mrb[0].mxu0 %v765
      %v2329 = vpop.f32.mrb[0].mxu0
      %v2330 = vadd.f32 %v2182, %v2329
      %v2331 = vpop.f32.mrb[0].mxu0
      %2332 = vmatprep.mubr.f32.mxu0 0.0
      %2333 = vmatmul.mubr.f32.gmra.mrb[0].mxu0 %v767
      %v2334 = vpop.f32.mrb[0].mxu0
      %v2335 = vadd.f32 %v2187, %v2334
      %v2336 = vpop.f32.mrb[0].mxu0
      %2337 = vmatprep.mubr.f32.mxu0 0.0
      %2338 = vmatmul.mubr.f32.gmra.mrb[0].mxu0 %v769
      %v2339 = vpop.f32.mrb[0].mxu0
      %v2340 = vadd.f32 %v2192, %v2339
      %v2341 = vpop.f32.mrb[0].mxu0
      %2342 = vmatprep.mubr.f32.mxu0 0.0
      %2343 = vmatmul.mubr.f32.gmra.mrb[0].mxu0 %v771
      %v2344 = vpop.f32.mrb[0].mxu0
      %v2345 = vadd.f32 %v2197, %v2344
      %v2346 = vpop.f32.mrb[0].mxu0
      %2347 = vmatprep.mubr.f32.mxu0 0.0
      %2348 = vmatmul.mubr.f32.gmra.mrb[0].mxu0 %v773
      %v2349 = vpop.f32.mrb[0].mxu0
      %v2350 = vadd.f32 %v2202, %v2349
      %v2351 = vpop.f32.mrb[0].mxu0
      %2352 = vmatprep.mubr.f32.mxu0 0.0
      %2353 = vmatmul.mubr.f32.gmra.mrb[0].mxu0 %v775
      %v2354 = vpop.f32.mrb[0].mxu0
      %v2355 = vadd.f32 %v2207, %v2354
      %v2356 = vpop.f32.mrb[0].mxu0
      %2357 = vmatprep.mubr.f32.mxu0 0.0
      %2358 = vmatmul.mubr.f32.gmra.mrb[0].mxu0 %v927
      %v2359 = vpop.f32.mrb[0].mxu0
      %v2360 = vadd.f32 %v2212, %v2359
      %v2361 = vpop.f32.mrb[0].mxu0
      %2362 = vmatprep.mubr.f32.mxu0 0.0
      %2363 = vmatmul.mubr.f32.gmra.mrb[0].mxu0 %v929
      %v2364 = vpop.f32.mrb[0].mxu0
      %v2365 = vadd.f32 %v2217, %v2364
      %v2366 = vpop.f32.mrb[0].mxu0
      %2367 = vdwg.mxu0
      %s2368 = scalar_lea.vmem %s3, 40
      %v2369 = vld [vmem:[%s2368] sm:$0xf]
      %v2370 = vsel %vm563, %v424, 0
      %v2372 = vsel %vm563, %v425, 0
      %v2375 = vsel %vm596, %v2369, 0
      %2377 = vmatprep.subr.mxu0 0.0
      %2378 = vmatpush1.msra.mxu0 %v2375
      %2379 = vmatprep.subr.mxu0 0.0
      %2380 = vmatpush1.msra.mxu0 0.0
      %2381 = vmatprep.subr.mxu0 0.0
      %2382 = vmatpush1.msra.mxu0 0.0
      %2383 = vmatprep.subr.mxu0 0.0
      %2384 = vmatpush1.msra.mxu0 0.0
      %2385 = vmatprep.subr.mxu0 0.0
      %2386 = vmatpush1.msra.mxu0 0.0
      %2387 = vmatprep.subr.mxu0 0.0
      %2388 = vmatpush1.msra.mxu0 0.0
      %2389 = vmatprep.subr.mxu0 0.0
      %2390 = vmatpush1.msra.mxu0 0.0
      %2391 = vmatprep.subr.mxu0 0.0
      %2392 = vmatpush1.msra.mxu0 0.0
      %2393 = vmatprep.subr.mxu0 0.0
      %2394 = vmatpush1.msra.mxu0 0.0
      %2395 = vmatprep.subr.mxu0 0.0
      %2396 = vmatpush1.msra.mxu0 0.0
      %2397 = vmatprep.subr.mxu0 0.0
      %2398 = vmatpush1.msra.mxu0 0.0
      %2399 = vmatprep.subr.mxu0 0.0
      %2400 = vmatpush1.msra.mxu0 0.0
      %2401 = vmatprep.subr.mxu0 0.0
      %2402 = vmatpush1.msra.mxu0 0.0
      %2403 = vmatprep.subr.mxu0 0.0
      %2404 = vmatpush1.msra.mxu0 0.0
      %2405 = vmatprep.subr.mxu0 0.0
      %2406 = vmatpush1.msra.mxu0 0.0
      %2407 = vmatprep.subr.mxu0 0.0
      %2408 = vmatpush1.msra.mxu0 0.0
      %2409 = vmatprep.subr.mxu0 0.0
      %2410 = vmatpush1.msra.mxu0 0.0
      %2411 = vmatprep.subr.mxu0 0.0
      %2412 = vmatpush1.msra.mxu0 0.0
      %2413 = vmatprep.subr.mxu0 0.0
      %2414 = vmatpush1.msra.mxu0 0.0
      %2415 = vmatprep.subr.mxu0 0.0
      %2416 = vmatpush1.msra.mxu0 0.0
      %2417 = vmatprep.subr.mxu0 0.0
      %2418 = vmatpush1.msra.mxu0 0.0
      %2419 = vmatprep.subr.mxu0 0.0
      %2420 = vmatpush1.msra.mxu0 0.0
      %2421 = vmatprep.subr.mxu0 0.0
      %2422 = vmatpush1.msra.mxu0 0.0
      %2423 = vmatprep.subr.mxu0 0.0
      %2424 = vmatpush1.msra.mxu0 0.0
      %2425 = vmatprep.subr.mxu0 0.0
      %2426 = vmatpush1.msra.mxu0 0.0
      %2427 = vmatprep.subr.mxu0 0.0
      %2428 = vmatpush1.msra.mxu0 0.0
      %2429 = vmatprep.subr.mxu0 0.0
      %2430 = vmatpush1.msra.mxu0 0.0
      %2431 = vmatprep.subr.mxu0 0.0
      %2432 = vmatpush1.msra.mxu0 0.0
      %2433 = vmatprep.subr.mxu0 0.0
      %2434 = vmatpush1.msra.mxu0 0.0
      %2435 = vmatprep.subr.mxu0 0.0
      %2436 = vmatpush1.msra.mxu0 0.0
      %2437 = vmatprep.subr.mxu0 0.0
      %2438 = vmatpush1.msra.mxu0 0.0
      %2439 = vmatprep.subr.mxu0 0.0
      %2440 = vmatpush1.msra.mxu0 0.0
      %2441 = vmatprep.mubr.f32.mxu0 0.0
      %2442 = vmatmul.mubr.f32.gmra.mrb[0].mxu0 %v753
      %v2443 = vpop.f32.mrb[0].mxu0
      %v2444 = vadd.f32 0.0, %v2443
      %v2445 = vpop.f32.mrb[0].mxu0
      %2446 = vmatprep.mubr.f32.mxu0 0.0
      %2447 = vmatmul.mubr.f32.gmra.mrb[0].mxu0 %v755
      %v2448 = vpop.f32.mrb[0].mxu0
      %v2449 = vadd.f32 0.0, %v2448
      %v2450 = vpop.f32.mrb[0].mxu0
      %2451 = vmatprep.mubr.f32.mxu0 0.0
      %2452 = vmatmul.mubr.f32.gmra.mrb[0].mxu0 %v757
      %v2453 = vpop.f32.mrb[0].mxu0
      %v2454 = vadd.f32 0.0, %v2453
      %v2455 = vpop.f32.mrb[0].mxu0
      %2456 = vmatprep.mubr.f32.mxu0 0.0
      %2457 = vmatmul.mubr.f32.gmra.mrb[0].mxu0 %v759
      %v2458 = vpop.f32.mrb[0].mxu0
      %v2459 = vadd.f32 0.0, %v2458
      %v2460 = vpop.f32.mrb[0].mxu0
      %2461 = vmatprep.mubr.f32.mxu0 0.0
      %2462 = vmatmul.mubr.f32.gmra.mrb[0].mxu0 %v761
      %v2463 = vpop.f32.mrb[0].mxu0
      %v2464 = vadd.f32 0.0, %v2463
      %v2465 = vpop.f32.mrb[0].mxu0
      %2466 = vmatprep.mubr.f32.mxu0 0.0
      %2467 = vmatmul.mubr.f32.gmra.mrb[0].mxu0 %v763
      %v2468 = vpop.f32.mrb[0].mxu0
      %v2469 = vadd.f32 0.0, %v2468
      %v2470 = vpop.f32.mrb[0].mxu0
      %2471 = vmatprep.mubr.f32.mxu0 0.0
      %2472 = vmatmul.mubr.f32.gmra.mrb[0].mxu0 %v765
      %v2473 = vpop.f32.mrb[0].mxu0
      %v2474 = vadd.f32 0.0, %v2473
      %v2475 = vpop.f32.mrb[0].mxu0
      %2476 = vmatprep.mubr.f32.mxu0 0.0
      %2477 = vmatmul.mubr.f32.gmra.mrb[0].mxu0 %v767
      %v2478 = vpop.f32.mrb[0].mxu0
      %v2479 = vadd.f32 0.0, %v2478
      %v2480 = vpop.f32.mrb[0].mxu0
      %2481 = vmatprep.mubr.f32.mxu0 0.0
      %2482 = vmatmul.mubr.f32.gmra.mrb[0].mxu0 %v769
      %v2483 = vpop.f32.mrb[0].mxu0
      %v2484 = vadd.f32 0.0, %v2483
      %v2485 = vpop.f32.mrb[0].mxu0
      %2486 = vmatprep.mubr.f32.mxu0 0.0
      %2487 = vmatmul.mubr.f32.gmra.mrb[0].mxu0 %v771
      %v2488 = vpop.f32.mrb[0].mxu0
      %v2489 = vadd.f32 0.0, %v2488
      %v2490 = vpop.f32.mrb[0].mxu0
      %2491 = vmatprep.mubr.f32.mxu0 0.0
      %2492 = vmatmul.mubr.f32.gmra.mrb[0].mxu0 %v773
      %v2493 = vpop.f32.mrb[0].mxu0
      %v2494 = vadd.f32 0.0, %v2493
      %v2495 = vpop.f32.mrb[0].mxu0
      %2496 = vmatprep.mubr.f32.mxu0 0.0
      %2497 = vmatmul.mubr.f32.gmra.mrb[0].mxu0 %v775
      %v2498 = vpop.f32.mrb[0].mxu0
      %v2499 = vadd.f32 0.0, %v2498
      %v2500 = vpop.f32.mrb[0].mxu0
      %2501 = vmatprep.mubr.f32.mxu0 0.0
      %2502 = vmatmul.mubr.f32.gmra.mrb[0].mxu0 %v927
      %v2503 = vpop.f32.mrb[0].mxu0
      %v2504 = vadd.f32 0.0, %v2503
      %v2505 = vpop.f32.mrb[0].mxu0
      %2506 = vmatprep.mubr.f32.mxu0 0.0
      %2507 = vmatmul.mubr.f32.gmra.mrb[0].mxu0 %v929
      %v2508 = vpop.f32.mrb[0].mxu0
      %v2509 = vadd.f32 0.0, %v2508
      %v2510 = vpop.f32.mrb[0].mxu0
      %2511 = vmatprep.mubr.f32.mxu0 0.0
      %2512 = vmatmul.mubr.f32.gmra.mrb[0].mxu0 %v2370
      %v2513 = vpop.f32.mrb[0].mxu0
      %v2514 = vadd.f32 0.0, %v2513
      %v2515 = vpop.f32.mrb[0].mxu0
      %2516 = vmatprep.mubr.f32.mxu0 0.0
      %2517 = vmatmul.mubr.f32.gmra.mrb[0].mxu0 %v2372
      %v2518 = vpop.f32.mrb[0].mxu0
      %v2519 = vadd.f32 0.0, %v2518
      %v2520 = vpop.f32.mrb[0].mxu0
      %2521 = vdwg.mxu0
      %v2522 = vadd.f32 %v2290, %v2444
      %v2523 = vadd.f32 %v2295, %v2449
      %v2524 = vadd.f32 %v2300, %v2454
      %v2525 = vadd.f32 %v2305, %v2459
      %v2526 = vadd.f32 %v2310, %v2464
      %v2527 = vadd.f32 %v2315, %v2469
      %v2528 = vadd.f32 %v2320, %v2474
      %v2529 = vadd.f32 %v2325, %v2479
      %v2530 = vadd.f32 %v2330, %v2484
      %v2531 = vadd.f32 %v2335, %v2489
      %v2532 = vadd.f32 %v2340, %v2494
      %v2533 = vadd.f32 %v2345, %v2499
      %v2534 = vadd.f32 %v2350, %v2504
      %v2535 = vadd.f32 %v2355, %v2509
      %v2536 = vadd.f32 %v2360, %v2514
      %v2537 = vadd.f32 %v2365, %v2519
      %s2538 = scalar_lea.vmem %s3, 44
      %v2539 = vld [vmem:[%s2538] sm:$0xf]
      %v2540 = vsel %vm563, %v552, 0
      %v2542 = vsel %vm563, %v554, 0
      %v2545 = vsel %vm596, %v2539, 0
      %2547 = vmatprep.subr.mxu0 0.0
      %2548 = vmatpush1.msra.mxu0 %v2545
      %2549 = vmatprep.subr.mxu0 0.0
      %2550 = vmatpush1.msra.mxu0 0.0
      %2551 = vmatprep.subr.mxu0 0.0
      %2552 = vmatpush1.msra.mxu0 0.0
      %2553 = vmatprep.subr.mxu0 0.0
      %2554 = vmatpush1.msra.mxu0 0.0
      %2555 = vmatprep.subr.mxu0 0.0
      %2556 = vmatpush1.msra.mxu0 0.0
      %2557 = vmatprep.subr.mxu0 0.0
      %2558 = vmatpush1.msra.mxu0 0.0
      %2559 = vmatprep.subr.mxu0 0.0
      %2560 = vmatpush1.msra.mxu0 0.0
      %2561 = vmatprep.subr.mxu0 0.0
      %2562 = vmatpush1.msra.mxu0 0.0
      %2563 = vmatprep.subr.mxu0 0.0
      %2564 = vmatpush1.msra.mxu0 0.0
      %2565 = vmatprep.subr.mxu0 0.0
      %2566 = vmatpush1.msra.mxu0 0.0
      %2567 = vmatprep.subr.mxu0 0.0
      %2568 = vmatpush1.msra.mxu0 0.0
      %2569 = vmatprep.subr.mxu0 0.0
      %2570 = vmatpush1.msra.mxu0 0.0
      %2571 = vmatprep.subr.mxu0 0.0
      %2572 = vmatpush1.msra.mxu0 0.0
      %2573 = vmatprep.subr.mxu0 0.0
      %2574 = vmatpush1.msra.mxu0 0.0
      %2575 = vmatprep.subr.mxu0 0.0
      %2576 = vmatpush1.msra.mxu0 0.0
      %2577 = vmatprep.subr.mxu0 0.0
      %2578 = vmatpush1.msra.mxu0 0.0
      %2579 = vmatprep.subr.mxu0 0.0
      %2580 = vmatpush1.msra.mxu0 0.0
      %2581 = vmatprep.subr.mxu0 0.0
      %2582 = vmatpush1.msra.mxu0 0.0
      %2583 = vmatprep.subr.mxu0 0.0
      %2584 = vmatpush1.msra.mxu0 0.0
      %2585 = vmatprep.subr.mxu0 0.0
      %2586 = vmatpush1.msra.mxu0 0.0
      %2587 = vmatprep.subr.mxu0 0.0
      %2588 = vmatpush1.msra.mxu0 0.0
      %2589 = vmatprep.subr.mxu0 0.0
      %2590 = vmatpush1.msra.mxu0 0.0
      %2591 = vmatprep.subr.mxu0 0.0
      %2592 = vmatpush1.msra.mxu0 0.0
      %2593 = vmatprep.subr.mxu0 0.0
      %2594 = vmatpush1.msra.mxu0 0.0
      %2595 = vmatprep.subr.mxu0 0.0
      %2596 = vmatpush1.msra.mxu0 0.0
      %2597 = vmatprep.subr.mxu0 0.0
      %2598 = vmatpush1.msra.mxu0 0.0
      %2599 = vmatprep.subr.mxu0 0.0
      %2600 = vmatpush1.msra.mxu0 0.0
      %2601 = vmatprep.subr.mxu0 0.0
      %2602 = vmatpush1.msra.mxu0 0.0
      %2603 = vmatprep.subr.mxu0 0.0
      %2604 = vmatpush1.msra.mxu0 0.0
      %2605 = vmatprep.subr.mxu0 0.0
      %2606 = vmatpush1.msra.mxu0 0.0
      %2607 = vmatprep.subr.mxu0 0.0
      %2608 = vmatpush1.msra.mxu0 0.0
      %2609 = vmatprep.subr.mxu0 0.0
      %2610 = vmatpush1.msra.mxu0 0.0
      %2611 = vmatprep.mubr.f32.mxu0 0.0
      %2612 = vmatmul.mubr.f32.gmra.mrb[0].mxu0 %v572
      %v2613 = vpop.f32.mrb[0].mxu0
      %v2614 = vadd.f32 0.0, %v2613
      %v2615 = vpop.f32.mrb[0].mxu0
      %2616 = vmatprep.mubr.f32.mxu0 0.0
      %2617 = vmatmul.mubr.f32.gmra.mrb[0].mxu0 %v574
      %v2618 = vpop.f32.mrb[0].mxu0
      %v2619 = vadd.f32 0.0, %v2618
      %v2620 = vpop.f32.mrb[0].mxu0
      %2621 = vmatprep.mubr.f32.mxu0 0.0
      %2622 = vmatmul.mubr.f32.gmra.mrb[0].mxu0 %v576
      %v2623 = vpop.f32.mrb[0].mxu0
      %v2624 = vadd.f32 0.0, %v2623
      %v2625 = vpop.f32.mrb[0].mxu0
      %2626 = vmatprep.mubr.f32.mxu0 0.0
      %2627 = vmatmul.mubr.f32.gmra.mrb[0].mxu0 %v578
      %v2628 = vpop.f32.mrb[0].mxu0
      %v2629 = vadd.f32 0.0, %v2628
      %v2630 = vpop.f32.mrb[0].mxu0
      %2631 = vmatprep.mubr.f32.mxu0 0.0
      %2632 = vmatmul.mubr.f32.gmra.mrb[0].mxu0 %v580
      %v2633 = vpop.f32.mrb[0].mxu0
      %v2634 = vadd.f32 0.0, %v2633
      %v2635 = vpop.f32.mrb[0].mxu0
      %2636 = vmatprep.mubr.f32.mxu0 0.0
      %2637 = vmatmul.mubr.f32.gmra.mrb[0].mxu0 %v582
      %v2638 = vpop.f32.mrb[0].mxu0
      %v2639 = vadd.f32 0.0, %v2638
      %v2640 = vpop.f32.mrb[0].mxu0
      %2641 = vmatprep.mubr.f32.mxu0 0.0
      %2642 = vmatmul.mubr.f32.gmra.mrb[0].mxu0 %v584
      %v2643 = vpop.f32.mrb[0].mxu0
      %v2644 = vadd.f32 0.0, %v2643
      %v2645 = vpop.f32.mrb[0].mxu0
      %2646 = vmatprep.mubr.f32.mxu0 0.0
      %2647 = vmatmul.mubr.f32.gmra.mrb[0].mxu0 %v586
      %v2648 = vpop.f32.mrb[0].mxu0
      %v2649 = vadd.f32 0.0, %v2648
      %v2650 = vpop.f32.mrb[0].mxu0
      %2651 = vmatprep.mubr.f32.mxu0 0.0
      %2652 = vmatmul.mubr.f32.gmra.mrb[0].mxu0 %v588
      %v2653 = vpop.f32.mrb[0].mxu0
      %v2654 = vadd.f32 0.0, %v2653
      %v2655 = vpop.f32.mrb[0].mxu0
      %2656 = vmatprep.mubr.f32.mxu0 0.0
      %2657 = vmatmul.mubr.f32.gmra.mrb[0].mxu0 %v590
      %v2658 = vpop.f32.mrb[0].mxu0
      %v2659 = vadd.f32 0.0, %v2658
      %v2660 = vpop.f32.mrb[0].mxu0
      %2661 = vmatprep.mubr.f32.mxu0 0.0
      %2662 = vmatmul.mubr.f32.gmra.mrb[0].mxu0 %v592
      %v2663 = vpop.f32.mrb[0].mxu0
      %v2664 = vadd.f32 0.0, %v2663
      %v2665 = vpop.f32.mrb[0].mxu0
      %2666 = vmatprep.mubr.f32.mxu0 0.0
      %2667 = vmatmul.mubr.f32.gmra.mrb[0].mxu0 %v594
      %v2668 = vpop.f32.mrb[0].mxu0
      %v2669 = vadd.f32 0.0, %v2668
      %v2670 = vpop.f32.mrb[0].mxu0
      %2671 = vmatprep.mubr.f32.mxu0 0.0
      %2672 = vmatmul.mubr.f32.gmra.mrb[0].mxu0 %v1097
      %v2673 = vpop.f32.mrb[0].mxu0
      %v2674 = vadd.f32 0.0, %v2673
      %v2675 = vpop.f32.mrb[0].mxu0
      %2676 = vmatprep.mubr.f32.mxu0 0.0
      %2677 = vmatmul.mubr.f32.gmra.mrb[0].mxu0 %v1099
      %v2678 = vpop.f32.mrb[0].mxu0
      %v2679 = vadd.f32 0.0, %v2678
      %v2680 = vpop.f32.mrb[0].mxu0
      %2681 = vmatprep.mubr.f32.mxu0 0.0
      %2682 = vmatmul.mubr.f32.gmra.mrb[0].mxu0 %v2540
      %v2683 = vpop.f32.mrb[0].mxu0
      %v2684 = vadd.f32 0.0, %v2683
      %v2685 = vpop.f32.mrb[0].mxu0
      %2686 = vmatprep.mubr.f32.mxu0 0.0
      %2687 = vmatmul.mubr.f32.gmra.mrb[0].mxu0 %v2542
      %v2688 = vpop.f32.mrb[0].mxu0
      %v2689 = vadd.f32 0.0, %v2688
      %v2690 = vpop.f32.mrb[0].mxu0
      %2691 = vdwg.mxu0
      %v2692 = vadd.f32 %v2522, %v2614
      %v2693 = vadd.f32 %v2523, %v2619
      %v2694 = vadd.f32 %v2524, %v2624
      %v2695 = vadd.f32 %v2525, %v2629
      %v2696 = vadd.f32 %v2526, %v2634
      %v2697 = vadd.f32 %v2527, %v2639
      %v2698 = vadd.f32 %v2528, %v2644
      %v2699 = vadd.f32 %v2529, %v2649
      %v2700 = vadd.f32 %v2530, %v2654
      %v2701 = vadd.f32 %v2531, %v2659
      %v2702 = vadd.f32 %v2532, %v2664
      %v2703 = vadd.f32 %v2533, %v2669
      %v2704 = vadd.f32 %v2534, %v2674
      %v2705 = vadd.f32 %v2535, %v2679
      %v2706 = vadd.f32 %v2536, %v2684
      %v2707 = vadd.f32 %v2537, %v2689
      %v2708 = vadd.f32 %v2692, %v1269
      %v2709 = vadd.f32 %v2693, %v1269
      %v2710 = vadd.f32 %v2694, %v1269
      %v2711 = vadd.f32 %v2695, %v1269
      %v2712 = vadd.f32 %v2696, %v1269
      %v2713 = vadd.f32 %v2697, %v1269
      %v2714 = vadd.f32 %v2698, %v1269
      %v2715 = vadd.f32 %v2699, %v1269
      %v2716 = vadd.f32 %v2700, %v1269
      %v2717 = vadd.f32 %v2701, %v1269
      %v2718 = vadd.f32 %v2702, %v1269
      %v2719 = vadd.f32 %v2703, %v1269
      %v2720 = vadd.f32 %v2704, %v1269
      %v2721 = vadd.f32 %v2705, %v1269
      %v2722 = vadd.f32 %v2706, %v1269
      %v2723 = vadd.f32 %v2707, %v1269
      %s2724 = scalar_lea.vmem %s3, 48
      %v2725 = vld [vmem:[%s2724] sm:$0xf]
      %s2726 = scalar_lea.vmem %s3, 52
      %v2727 = vld [vmem:[%s2726] sm:$0xf]
      %v2729 = vsel %vm596, %v2727, 0
      %2731 = vmatprep.subr.mxu0 0.0
      %2732 = vmatpush1.msra.mxu0 %v2729
      %2733 = vmatprep.subr.mxu0 0.0
      %2734 = vmatpush1.msra.mxu0 0.0
      %2735 = vmatprep.subr.mxu0 0.0
      %2736 = vmatpush1.msra.mxu0 0.0
      %2737 = vmatprep.subr.mxu0 0.0
      %2738 = vmatpush1.msra.mxu0 0.0
      %2739 = vmatprep.subr.mxu0 0.0
      %2740 = vmatpush1.msra.mxu0 0.0
      %2741 = vmatprep.subr.mxu0 0.0
      %2742 = vmatpush1.msra.mxu0 0.0
      %2743 = vmatprep.subr.mxu0 0.0
      %2744 = vmatpush1.msra.mxu0 0.0
      %2745 = vmatprep.subr.mxu0 0.0
      %2746 = vmatpush1.msra.mxu0 0.0
      %2747 = vmatprep.subr.mxu0 0.0
      %2748 = vmatpush1.msra.mxu0 0.0
      %2749 = vmatprep.subr.mxu0 0.0
      %2750 = vmatpush1.msra.mxu0 0.0
      %2751 = vmatprep.subr.mxu0 0.0
      %2752 = vmatpush1.msra.mxu0 0.0
      %2753 = vmatprep.subr.mxu0 0.0
      %2754 = vmatpush1.msra.mxu0 0.0
      %2755 = vmatprep.subr.mxu0 0.0
      %2756 = vmatpush1.msra.mxu0 0.0
      %2757 = vmatprep.subr.mxu0 0.0
      %2758 = vmatpush1.msra.mxu0 0.0
      %2759 = vmatprep.subr.mxu0 0.0
      %2760 = vmatpush1.msra.mxu0 0.0
      %2761 = vmatprep.subr.mxu0 0.0
      %2762 = vmatpush1.msra.mxu0 0.0
      %2763 = vmatprep.subr.mxu0 0.0
      %2764 = vmatpush1.msra.mxu0 0.0
      %2765 = vmatprep.subr.mxu0 0.0
      %2766 = vmatpush1.msra.mxu0 0.0
      %2767 = vmatprep.subr.mxu0 0.0
      %2768 = vmatpush1.msra.mxu0 0.0
      %2769 = vmatprep.subr.mxu0 0.0
      %2770 = vmatpush1.msra.mxu0 0.0
      %2771 = vmatprep.subr.mxu0 0.0
      %2772 = vmatpush1.msra.mxu0 0.0
      %2773 = vmatprep.subr.mxu0 0.0
      %2774 = vmatpush1.msra.mxu0 0.0
      %2775 = vmatprep.subr.mxu0 0.0
      %2776 = vmatpush1.msra.mxu0 0.0
      %2777 = vmatprep.subr.mxu0 0.0
      %2778 = vmatpush1.msra.mxu0 0.0
      %2779 = vmatprep.subr.mxu0 0.0
      %2780 = vmatpush1.msra.mxu0 0.0
      %2781 = vmatprep.subr.mxu0 0.0
      %2782 = vmatpush1.msra.mxu0 0.0
      %2783 = vmatprep.subr.mxu0 0.0
      %2784 = vmatpush1.msra.mxu0 0.0
      %2785 = vmatprep.subr.mxu0 0.0
      %2786 = vmatpush1.msra.mxu0 0.0
      %2787 = vmatprep.subr.mxu0 0.0
      %2788 = vmatpush1.msra.mxu0 0.0
      %2789 = vmatprep.subr.mxu0 0.0
      %2790 = vmatpush1.msra.mxu0 0.0
      %2791 = vmatprep.subr.mxu0 0.0
      %2792 = vmatpush1.msra.mxu0 0.0
      %2793 = vmatprep.subr.mxu0 0.0
      %2794 = vmatpush1.msra.mxu0 0.0
      %2795 = vmatprep.mubr.f32.mxu0 0.0
      %2796 = vmatmul.mubr.f32.gmra.mrb[0].mxu0 %v1295
      %v2797 = vpop.f32.mrb[0].mxu0
      %v2798 = vadd.f32 0.0, %v2797
      %v2799 = vpop.f32.mrb[0].mxu0
      %2800 = vmatprep.mubr.f32.mxu0 0.0
      %2801 = vmatmul.mubr.f32.gmra.mrb[0].mxu0 %v1297
      %v2802 = vpop.f32.mrb[0].mxu0
      %v2803 = vadd.f32 0.0, %v2802
      %v2804 = vpop.f32.mrb[0].mxu0
      %2805 = vmatprep.mubr.f32.mxu0 0.0
      %2806 = vmatmul.mubr.f32.gmra.mrb[0].mxu0 %v1299
      %v2807 = vpop.f32.mrb[0].mxu0
      %v2808 = vadd.f32 0.0, %v2807
      %v2809 = vpop.f32.mrb[0].mxu0
      %2810 = vmatprep.mubr.f32.mxu0 0.0
      %2811 = vmatmul.mubr.f32.gmra.mrb[0].mxu0 %v1301
      %v2812 = vpop.f32.mrb[0].mxu0
      %v2813 = vadd.f32 0.0, %v2812
      %v2814 = vpop.f32.mrb[0].mxu0
      %2815 = vmatprep.mubr.f32.mxu0 0.0
      %2816 = vmatmul.mubr.f32.gmra.mrb[0].mxu0 %v1303
      %v2817 = vpop.f32.mrb[0].mxu0
      %v2818 = vadd.f32 0.0, %v2817
      %v2819 = vpop.f32.mrb[0].mxu0
      %2820 = vmatprep.mubr.f32.mxu0 0.0
      %2821 = vmatmul.mubr.f32.gmra.mrb[0].mxu0 %v1305
      %v2822 = vpop.f32.mrb[0].mxu0
      %v2823 = vadd.f32 0.0, %v2822
      %v2824 = vpop.f32.mrb[0].mxu0
      %2825 = vmatprep.mubr.f32.mxu0 0.0
      %2826 = vmatmul.mubr.f32.gmra.mrb[0].mxu0 %v1307
      %v2827 = vpop.f32.mrb[0].mxu0
      %v2828 = vadd.f32 0.0, %v2827
      %v2829 = vpop.f32.mrb[0].mxu0
      %2830 = vmatprep.mubr.f32.mxu0 0.0
      %2831 = vmatmul.mubr.f32.gmra.mrb[0].mxu0 %v1309
      %v2832 = vpop.f32.mrb[0].mxu0
      %v2833 = vadd.f32 0.0, %v2832
      %v2834 = vpop.f32.mrb[0].mxu0
      %2835 = vmatprep.mubr.f32.mxu0 0.0
      %2836 = vmatmul.mubr.f32.gmra.mrb[0].mxu0 %v1311
      %v2837 = vpop.f32.mrb[0].mxu0
      %v2838 = vadd.f32 0.0, %v2837
      %v2839 = vpop.f32.mrb[0].mxu0
      %2840 = vmatprep.mubr.f32.mxu0 0.0
      %2841 = vmatmul.mubr.f32.gmra.mrb[0].mxu0 %v1313
      %v2842 = vpop.f32.mrb[0].mxu0
      %v2843 = vadd.f32 0.0, %v2842
      %v2844 = vpop.f32.mrb[0].mxu0
      %2845 = vmatprep.mubr.f32.mxu0 0.0
      %2846 = vmatmul.mubr.f32.gmra.mrb[0].mxu0 %v1315
      %v2847 = vpop.f32.mrb[0].mxu0
      %v2848 = vadd.f32 0.0, %v2847
      %v2849 = vpop.f32.mrb[0].mxu0
      %2850 = vmatprep.mubr.f32.mxu0 0.0
      %2851 = vmatmul.mubr.f32.gmra.mrb[0].mxu0 %v1317
      %v2852 = vpop.f32.mrb[0].mxu0
      %v2853 = vadd.f32 0.0, %v2852
      %v2854 = vpop.f32.mrb[0].mxu0
      %2855 = vmatprep.mubr.f32.mxu0 0.0
      %2856 = vmatmul.mubr.f32.gmra.mrb[0].mxu0 %v1319
      %v2857 = vpop.f32.mrb[0].mxu0
      %v2858 = vadd.f32 0.0, %v2857
      %v2859 = vpop.f32.mrb[0].mxu0
      %2860 = vmatprep.mubr.f32.mxu0 0.0
      %2861 = vmatmul.mubr.f32.gmra.mrb[0].mxu0 %v1321
      %v2862 = vpop.f32.mrb[0].mxu0
      %v2863 = vadd.f32 0.0, %v2862
      %v2864 = vpop.f32.mrb[0].mxu0
      %2865 = vmatprep.mubr.f32.mxu0 0.0
      %2866 = vmatmul.mubr.f32.gmra.mrb[0].mxu0 %v1787
      %v2867 = vpop.f32.mrb[0].mxu0
      %v2868 = vadd.f32 0.0, %v2867
      %v2869 = vpop.f32.mrb[0].mxu0
      %2870 = vmatprep.mubr.f32.mxu0 0.0
      %2871 = vmatmul.mubr.f32.gmra.mrb[0].mxu0 %v1789
      %v2872 = vpop.f32.mrb[0].mxu0
      %v2873 = vadd.f32 0.0, %v2872
      %v2874 = vpop.f32.mrb[0].mxu0
      %2875 = vdwg.mxu0
      %v2877 = vsel %vm596, %v2725, 0
      %2879 = vmatprep.subr.mxu0 0.0
      %2880 = vmatpush1.msra.mxu0 %v2877
      %2881 = vmatprep.subr.mxu0 0.0
      %2882 = vmatpush1.msra.mxu0 0.0
      %2883 = vmatprep.subr.mxu0 0.0
      %2884 = vmatpush1.msra.mxu0 0.0
      %2885 = vmatprep.subr.mxu0 0.0
      %2886 = vmatpush1.msra.mxu0 0.0
      %2887 = vmatprep.subr.mxu0 0.0
      %2888 = vmatpush1.msra.mxu0 0.0
      %2889 = vmatprep.subr.mxu0 0.0
      %2890 = vmatpush1.msra.mxu0 0.0
      %2891 = vmatprep.subr.mxu0 0.0
      %2892 = vmatpush1.msra.mxu0 0.0
      %2893 = vmatprep.subr.mxu0 0.0
      %2894 = vmatpush1.msra.mxu0 0.0
      %2895 = vmatprep.subr.mxu0 0.0
      %2896 = vmatpush1.msra.mxu0 0.0
      %2897 = vmatprep.subr.mxu0 0.0
      %2898 = vmatpush1.msra.mxu0 0.0
      %2899 = vmatprep.subr.mxu0 0.0
      %2900 = vmatpush1.msra.mxu0 0.0
      %2901 = vmatprep.subr.mxu0 0.0
      %2902 = vmatpush1.msra.mxu0 0.0
      %2903 = vmatprep.subr.mxu0 0.0
      %2904 = vmatpush1.msra.mxu0 0.0
      %2905 = vmatprep.subr.mxu0 0.0
      %2906 = vmatpush1.msra.mxu0 0.0
      %2907 = vmatprep.subr.mxu0 0.0
      %2908 = vmatpush1.msra.mxu0 0.0
      %2909 = vmatprep.subr.mxu0 0.0
      %2910 = vmatpush1.msra.mxu0 0.0
      %2911 = vmatprep.subr.mxu0 0.0
      %2912 = vmatpush1.msra.mxu0 0.0
      %2913 = vmatprep.subr.mxu0 0.0
      %2914 = vmatpush1.msra.mxu0 0.0
      %2915 = vmatprep.subr.mxu0 0.0
      %2916 = vmatpush1.msra.mxu0 0.0
      %2917 = vmatprep.subr.mxu0 0.0
      %2918 = vmatpush1.msra.mxu0 0.0
      %2919 = vmatprep.subr.mxu0 0.0
      %2920 = vmatpush1.msra.mxu0 0.0
      %2921 = vmatprep.subr.mxu0 0.0
      %2922 = vmatpush1.msra.mxu0 0.0
      %2923 = vmatprep.subr.mxu0 0.0
      %2924 = vmatpush1.msra.mxu0 0.0
      %2925 = vmatprep.subr.mxu0 0.0
      %2926 = vmatpush1.msra.mxu0 0.0
      %2927 = vmatprep.subr.mxu0 0.0
      %2928 = vmatpush1.msra.mxu0 0.0
      %2929 = vmatprep.subr.mxu0 0.0
      %2930 = vmatpush1.msra.mxu0 0.0
      %2931 = vmatprep.subr.mxu0 0.0
      %2932 = vmatpush1.msra.mxu0 0.0
      %2933 = vmatprep.subr.mxu0 0.0
      %2934 = vmatpush1.msra.mxu0 0.0
      %2935 = vmatprep.subr.mxu0 0.0
      %2936 = vmatpush1.msra.mxu0 0.0
      %2937 = vmatprep.subr.mxu0 0.0
      %2938 = vmatpush1.msra.mxu0 0.0
      %2939 = vmatprep.subr.mxu0 0.0
      %2940 = vmatpush1.msra.mxu0 0.0
      %2941 = vmatprep.subr.mxu0 0.0
      %2942 = vmatpush1.msra.mxu0 0.0
      %2943 = vmatprep.mubr.f32.mxu0 0.0
      %2944 = vmatmul.mubr.f32.gmra.mrb[0].mxu0 %v568
      %v2945 = vpop.f32.mrb[0].mxu0
      %v2946 = vadd.f32 %v2798, %v2945
      %v2947 = vpop.f32.mrb[0].mxu0
      %2948 = vmatprep.mubr.f32.mxu0 0.0
      %2949 = vmatmul.mubr.f32.gmra.mrb[0].mxu0 %v570
      %v2950 = vpop.f32.mrb[0].mxu0
      %v2951 = vadd.f32 %v2803, %v2950
      %v2952 = vpop.f32.mrb[0].mxu0
      %2953 = vmatprep.mubr.f32.mxu0 0.0
      %2954 = vmatmul.mubr.f32.gmra.mrb[0].mxu0 %v572
      %v2955 = vpop.f32.mrb[0].mxu0
      %v2956 = vadd.f32 %v2808, %v2955
      %v2957 = vpop.f32.mrb[0].mxu0
      %2958 = vmatprep.mubr.f32.mxu0 0.0
      %2959 = vmatmul.mubr.f32.gmra.mrb[0].mxu0 %v574
      %v2960 = vpop.f32.mrb[0].mxu0
      %v2961 = vadd.f32 %v2813, %v2960
      %v2962 = vpop.f32.mrb[0].mxu0
      %2963 = vmatprep.mubr.f32.mxu0 0.0
      %2964 = vmatmul.mubr.f32.gmra.mrb[0].mxu0 %v576
      %v2965 = vpop.f32.mrb[0].mxu0
      %v2966 = vadd.f32 %v2818, %v2965
      %v2967 = vpop.f32.mrb[0].mxu0
      %2968 = vmatprep.mubr.f32.mxu0 0.0
      %2969 = vmatmul.mubr.f32.gmra.mrb[0].mxu0 %v578
      %v2970 = vpop.f32.mrb[0].mxu0
      %v2971 = vadd.f32 %v2823, %v2970
      %v2972 = vpop.f32.mrb[0].mxu0
      %2973 = vmatprep.mubr.f32.mxu0 0.0
      %2974 = vmatmul.mubr.f32.gmra.mrb[0].mxu0 %v580
      %v2975 = vpop.f32.mrb[0].mxu0
      %v2976 = vadd.f32 %v2828, %v2975
      %v2977 = vpop.f32.mrb[0].mxu0
      %2978 = vmatprep.mubr.f32.mxu0 0.0
      %2979 = vmatmul.mubr.f32.gmra.mrb[0].mxu0 %v582
      %v2980 = vpop.f32.mrb[0].mxu0
      %v2981 = vadd.f32 %v2833, %v2980
      %v2982 = vpop.f32.mrb[0].mxu0
      %2983 = vmatprep.mubr.f32.mxu0 0.0
      %2984 = vmatmul.mubr.f32.gmra.mrb[0].mxu0 %v584
      %v2985 = vpop.f32.mrb[0].mxu0
      %v2986 = vadd.f32 %v2838, %v2985
      %v2987 = vpop.f32.mrb[0].mxu0
      %2988 = vmatprep.mubr.f32.mxu0 0.0
      %2989 = vmatmul.mubr.f32.gmra.mrb[0].mxu0 %v586
      %v2990 = vpop.f32.mrb[0].mxu0
      %v2991 = vadd.f32 %v2843, %v2990
      %v2992 = vpop.f32.mrb[0].mxu0
      %2993 = vmatprep.mubr.f32.mxu0 0.0
      %2994 = vmatmul.mubr.f32.gmra.mrb[0].mxu0 %v588
      %v2995 = vpop.f32.mrb[0].mxu0
      %v2996 = vadd.f32 %v2848, %v2995
      %v2997 = vpop.f32.mrb[0].mxu0
      %2998 = vmatprep.mubr.f32.mxu0 0.0
      %2999 = vmatmul.mubr.f32.gmra.mrb[0].mxu0 %v590
      %v3000 = vpop.f32.mrb[0].mxu0
      %v3001 = vadd.f32 %v2853, %v3000
      %v3002 = vpop.f32.mrb[0].mxu0
      %3003 = vmatprep.mubr.f32.mxu0 0.0
      %3004 = vmatmul.mubr.f32.gmra.mrb[0].mxu0 %v592
      %v3005 = vpop.f32.mrb[0].mxu0
      %v3006 = vadd.f32 %v2858, %v3005
      %v3007 = vpop.f32.mrb[0].mxu0
      %3008 = vmatprep.mubr.f32.mxu0 0.0
      %3009 = vmatmul.mubr.f32.gmra.mrb[0].mxu0 %v594
      %v3010 = vpop.f32.mrb[0].mxu0
      %v3011 = vadd.f32 %v2863, %v3010
      %v3012 = vpop.f32.mrb[0].mxu0
      %3013 = vmatprep.mubr.f32.mxu0 0.0
      %3014 = vmatmul.mubr.f32.gmra.mrb[0].mxu0 %v1097
      %v3015 = vpop.f32.mrb[0].mxu0
      %v3016 = vadd.f32 %v2868, %v3015
      %v3017 = vpop.f32.mrb[0].mxu0
      %3018 = vmatprep.mubr.f32.mxu0 0.0
      %3019 = vmatmul.mubr.f32.gmra.mrb[0].mxu0 %v1099
      %v3020 = vpop.f32.mrb[0].mxu0
      %v3021 = vadd.f32 %v2873, %v3020
      %v3022 = vpop.f32.mrb[0].mxu0
      %3023 = vdwg.mxu0
      %s3024 = scalar_lea.vmem %s3, 56
      %v3025 = vld [vmem:[%s3024] sm:$0xf]
      %v3027 = vsel %vm596, %v3025, 0
      %3029 = vmatprep.subr.mxu0 0.0
      %3030 = vmatpush1.msra.mxu0 %v3027
      %3031 = vmatprep.subr.mxu0 0.0
      %3032 = vmatpush1.msra.mxu0 0.0
      %3033 = vmatprep.subr.mxu0 0.0
      %3034 = vmatpush1.msra.mxu0 0.0
      %3035 = vmatprep.subr.mxu0 0.0
      %3036 = vmatpush1.msra.mxu0 0.0
      %3037 = vmatprep.subr.mxu0 0.0
      %3038 = vmatpush1.msra.mxu0 0.0
      %3039 = vmatprep.subr.mxu0 0.0
      %3040 = vmatpush1.msra.mxu0 0.0
      %3041 = vmatprep.subr.mxu0 0.0
      %3042 = vmatpush1.msra.mxu0 0.0
      %3043 = vmatprep.subr.mxu0 0.0
      %3044 = vmatpush1.msra.mxu0 0.0
      %3045 = vmatprep.subr.mxu0 0.0
      %3046 = vmatpush1.msra.mxu0 0.0
      %3047 = vmatprep.subr.mxu0 0.0
      %3048 = vmatpush1.msra.mxu0 0.0
      %3049 = vmatprep.subr.mxu0 0.0
      %3050 = vmatpush1.msra.mxu0 0.0
      %3051 = vmatprep.subr.mxu0 0.0
      %3052 = vmatpush1.msra.mxu0 0.0
      %3053 = vmatprep.subr.mxu0 0.0
      %3054 = vmatpush1.msra.mxu0 0.0
      %3055 = vmatprep.subr.mxu0 0.0
      %3056 = vmatpush1.msra.mxu0 0.0
      %3057 = vmatprep.subr.mxu0 0.0
      %3058 = vmatpush1.msra.mxu0 0.0
      %3059 = vmatprep.subr.mxu0 0.0
      %3060 = vmatpush1.msra.mxu0 0.0
      %3061 = vmatprep.subr.mxu0 0.0
      %3062 = vmatpush1.msra.mxu0 0.0
      %3063 = vmatprep.subr.mxu0 0.0
      %3064 = vmatpush1.msra.mxu0 0.0
      %3065 = vmatprep.subr.mxu0 0.0
      %3066 = vmatpush1.msra.mxu0 0.0
      %3067 = vmatprep.subr.mxu0 0.0
      %3068 = vmatpush1.msra.mxu0 0.0
      %3069 = vmatprep.subr.mxu0 0.0
      %3070 = vmatpush1.msra.mxu0 0.0
      %3071 = vmatprep.subr.mxu0 0.0
      %3072 = vmatpush1.msra.mxu0 0.0
      %3073 = vmatprep.subr.mxu0 0.0
      %3074 = vmatpush1.msra.mxu0 0.0
      %3075 = vmatprep.subr.mxu0 0.0
      %3076 = vmatpush1.msra.mxu0 0.0
      %3077 = vmatprep.subr.mxu0 0.0
      %3078 = vmatpush1.msra.mxu0 0.0
      %3079 = vmatprep.subr.mxu0 0.0
      %3080 = vmatpush1.msra.mxu0 0.0
      %3081 = vmatprep.subr.mxu0 0.0
      %3082 = vmatpush1.msra.mxu0 0.0
      %3083 = vmatprep.subr.mxu0 0.0
      %3084 = vmatpush1.msra.mxu0 0.0
      %3085 = vmatprep.subr.mxu0 0.0
      %3086 = vmatpush1.msra.mxu0 0.0
      %3087 = vmatprep.subr.mxu0 0.0
      %3088 = vmatpush1.msra.mxu0 0.0
      %3089 = vmatprep.subr.mxu0 0.0
      %3090 = vmatpush1.msra.mxu0 0.0
      %3091 = vmatprep.subr.mxu0 0.0
      %3092 = vmatpush1.msra.mxu0 0.0
      %3093 = vmatprep.mubr.f32.mxu0 0.0
      %3094 = vmatmul.mubr.f32.gmra.mrb[0].mxu0 %v572
      %v3095 = vpop.f32.mrb[0].mxu0
      %v3096 = vadd.f32 0.0, %v3095
      %v3097 = vpop.f32.mrb[0].mxu0
      %3098 = vmatprep.mubr.f32.mxu0 0.0
      %3099 = vmatmul.mubr.f32.gmra.mrb[0].mxu0 %v574
      %v3100 = vpop.f32.mrb[0].mxu0
      %v3101 = vadd.f32 0.0, %v3100
      %v3102 = vpop.f32.mrb[0].mxu0
      %3103 = vmatprep.mubr.f32.mxu0 0.0
      %3104 = vmatmul.mubr.f32.gmra.mrb[0].mxu0 %v576
      %v3105 = vpop.f32.mrb[0].mxu0
      %v3106 = vadd.f32 0.0, %v3105
      %v3107 = vpop.f32.mrb[0].mxu0
      %3108 = vmatprep.mubr.f32.mxu0 0.0
      %3109 = vmatmul.mubr.f32.gmra.mrb[0].mxu0 %v578
      %v3110 = vpop.f32.mrb[0].mxu0
      %v3111 = vadd.f32 0.0, %v3110
      %v3112 = vpop.f32.mrb[0].mxu0
      %3113 = vmatprep.mubr.f32.mxu0 0.0
      %3114 = vmatmul.mubr.f32.gmra.mrb[0].mxu0 %v580
      %v3115 = vpop.f32.mrb[0].mxu0
      %v3116 = vadd.f32 0.0, %v3115
      %v3117 = vpop.f32.mrb[0].mxu0
      %3118 = vmatprep.mubr.f32.mxu0 0.0
      %3119 = vmatmul.mubr.f32.gmra.mrb[0].mxu0 %v582
      %v3120 = vpop.f32.mrb[0].mxu0
      %v3121 = vadd.f32 0.0, %v3120
      %v3122 = vpop.f32.mrb[0].mxu0
      %3123 = vmatprep.mubr.f32.mxu0 0.0
      %3124 = vmatmul.mubr.f32.gmra.mrb[0].mxu0 %v584
      %v3125 = vpop.f32.mrb[0].mxu0
      %v3126 = vadd.f32 0.0, %v3125
      %v3127 = vpop.f32.mrb[0].mxu0
      %3128 = vmatprep.mubr.f32.mxu0 0.0
      %3129 = vmatmul.mubr.f32.gmra.mrb[0].mxu0 %v586
      %v3130 = vpop.f32.mrb[0].mxu0
      %v3131 = vadd.f32 0.0, %v3130
      %v3132 = vpop.f32.mrb[0].mxu0
      %3133 = vmatprep.mubr.f32.mxu0 0.0
      %3134 = vmatmul.mubr.f32.gmra.mrb[0].mxu0 %v588
      %v3135 = vpop.f32.mrb[0].mxu0
      %v3136 = vadd.f32 0.0, %v3135
      %v3137 = vpop.f32.mrb[0].mxu0
      %3138 = vmatprep.mubr.f32.mxu0 0.0
      %3139 = vmatmul.mubr.f32.gmra.mrb[0].mxu0 %v590
      %v3140 = vpop.f32.mrb[0].mxu0
      %v3141 = vadd.f32 0.0, %v3140
      %v3142 = vpop.f32.mrb[0].mxu0
      %3143 = vmatprep.mubr.f32.mxu0 0.0
      %3144 = vmatmul.mubr.f32.gmra.mrb[0].mxu0 %v592
      %v3145 = vpop.f32.mrb[0].mxu0
      %v3146 = vadd.f32 0.0, %v3145
      %v3147 = vpop.f32.mrb[0].mxu0
      %3148 = vmatprep.mubr.f32.mxu0 0.0
      %3149 = vmatmul.mubr.f32.gmra.mrb[0].mxu0 %v594
      %v3150 = vpop.f32.mrb[0].mxu0
      %v3151 = vadd.f32 0.0, %v3150
      %v3152 = vpop.f32.mrb[0].mxu0
      %3153 = vmatprep.mubr.f32.mxu0 0.0
      %3154 = vmatmul.mubr.f32.gmra.mrb[0].mxu0 %v1097
      %v3155 = vpop.f32.mrb[0].mxu0
      %v3156 = vadd.f32 0.0, %v3155
      %v3157 = vpop.f32.mrb[0].mxu0
      %3158 = vmatprep.mubr.f32.mxu0 0.0
      %3159 = vmatmul.mubr.f32.gmra.mrb[0].mxu0 %v1099
      %v3160 = vpop.f32.mrb[0].mxu0
      %v3161 = vadd.f32 0.0, %v3160
      %v3162 = vpop.f32.mrb[0].mxu0
      %3163 = vmatprep.mubr.f32.mxu0 0.0
      %3164 = vmatmul.mubr.f32.gmra.mrb[0].mxu0 %v2540
      %v3165 = vpop.f32.mrb[0].mxu0
      %v3166 = vadd.f32 0.0, %v3165
      %v3167 = vpop.f32.mrb[0].mxu0
      %3168 = vmatprep.mubr.f32.mxu0 0.0
      %3169 = vmatmul.mubr.f32.gmra.mrb[0].mxu0 %v2542
      %v3170 = vpop.f32.mrb[0].mxu0
      %v3171 = vadd.f32 0.0, %v3170
      %v3172 = vpop.f32.mrb[0].mxu0
      %3173 = vdwg.mxu0
      %v3174 = vadd.f32 %v2946, %v3096
      %v3175 = vadd.f32 %v2951, %v3101
      %v3176 = vadd.f32 %v2956, %v3106
      %v3177 = vadd.f32 %v2961, %v3111
      %v3178 = vadd.f32 %v2966, %v3116
      %v3179 = vadd.f32 %v2971, %v3121
      %v3180 = vadd.f32 %v2976, %v3126
      %v3181 = vadd.f32 %v2981, %v3131
      %v3182 = vadd.f32 %v2986, %v3136
      %v3183 = vadd.f32 %v2991, %v3141
      %v3184 = vadd.f32 %v2996, %v3146
      %v3185 = vadd.f32 %v3001, %v3151
      %v3186 = vadd.f32 %v3006, %v3156
      %v3187 = vadd.f32 %v3011, %v3161
      %v3188 = vadd.f32 %v3016, %v3166
      %v3189 = vadd.f32 %v3021, %v3171
      %s3190 = scalar_lea.vmem %s3, 60
      %v3191 = vld [vmem:[%s3190] sm:$0xf]
      %v3192 = vsel %vm563, %v557, 0
      %v3194 = vsel %vm563, %v559, 0
      %v3197 = vsel %vm596, %v3191, 0
      %3199 = vmatprep.subr.mxu0 0.0
      %3200 = vmatpush1.msra.mxu0 %v3197
      %3201 = vmatprep.subr.mxu0 0.0
      %3202 = vmatpush1.msra.mxu0 0.0
      %3203 = vmatprep.subr.mxu0 0.0
      %3204 = vmatpush1.msra.mxu0 0.0
      %3205 = vmatprep.subr.mxu0 0.0
      %3206 = vmatpush1.msra.mxu0 0.0
      %3207 = vmatprep.subr.mxu0 0.0
      %3208 = vmatpush1.msra.mxu0 0.0
      %3209 = vmatprep.subr.mxu0 0.0
      %3210 = vmatpush1.msra.mxu0 0.0
      %3211 = vmatprep.subr.mxu0 0.0
      %3212 = vmatpush1.msra.mxu0 0.0
      %3213 = vmatprep.subr.mxu0 0.0
      %3214 = vmatpush1.msra.mxu0 0.0
      %3215 = vmatprep.subr.mxu0 0.0
      %3216 = vmatpush1.msra.mxu0 0.0
      %3217 = vmatprep.subr.mxu0 0.0
      %3218 = vmatpush1.msra.mxu0 0.0
      %3219 = vmatprep.subr.mxu0 0.0
      %3220 = vmatpush1.msra.mxu0 0.0
      %3221 = vmatprep.subr.mxu0 0.0
      %3222 = vmatpush1.msra.mxu0 0.0
      %3223 = vmatprep.subr.mxu0 0.0
      %3224 = vmatpush1.msra.mxu0 0.0
      %3225 = vmatprep.subr.mxu0 0.0
      %3226 = vmatpush1.msra.mxu0 0.0
      %3227 = vmatprep.subr.mxu0 0.0
      %3228 = vmatpush1.msra.mxu0 0.0
      %3229 = vmatprep.subr.mxu0 0.0
      %3230 = vmatpush1.msra.mxu0 0.0
      %3231 = vmatprep.subr.mxu0 0.0
      %3232 = vmatpush1.msra.mxu0 0.0
      %3233 = vmatprep.subr.mxu0 0.0
      %3234 = vmatpush1.msra.mxu0 0.0
      %3235 = vmatprep.subr.mxu0 0.0
      %3236 = vmatpush1.msra.mxu0 0.0
      %3237 = vmatprep.subr.mxu0 0.0
      %3238 = vmatpush1.msra.mxu0 0.0
      %3239 = vmatprep.subr.mxu0 0.0
      %3240 = vmatpush1.msra.mxu0 0.0
      %3241 = vmatprep.subr.mxu0 0.0
      %3242 = vmatpush1.msra.mxu0 0.0
      %3243 = vmatprep.subr.mxu0 0.0
      %3244 = vmatpush1.msra.mxu0 0.0
      %3245 = vmatprep.subr.mxu0 0.0
      %3246 = vmatpush1.msra.mxu0 0.0
      %3247 = vmatprep.subr.mxu0 0.0
      %3248 = vmatpush1.msra.mxu0 0.0
      %3249 = vmatprep.subr.mxu0 0.0
      %3250 = vmatpush1.msra.mxu0 0.0
      %3251 = vmatprep.subr.mxu0 0.0
      %3252 = vmatpush1.msra.mxu0 0.0
      %3253 = vmatprep.subr.mxu0 0.0
      %3254 = vmatpush1.msra.mxu0 0.0
      %3255 = vmatprep.subr.mxu0 0.0
      %3256 = vmatpush1.msra.mxu0 0.0
      %3257 = vmatprep.subr.mxu0 0.0
      %3258 = vmatpush1.msra.mxu0 0.0
      %3259 = vmatprep.subr.mxu0 0.0
      %3260 = vmatpush1.msra.mxu0 0.0
      %3261 = vmatprep.subr.mxu0 0.0
      %3262 = vmatpush1.msra.mxu0 0.0
      %3263 = vmatprep.mubr.f32.mxu0 0.0
      %3264 = vmatmul.mubr.f32.gmra.mrb[0].mxu0 %v1299
      %v3265 = vpop.f32.mrb[0].mxu0
      %v3266 = vadd.f32 0.0, %v3265
      %v3267 = vpop.f32.mrb[0].mxu0
      %3268 = vmatprep.mubr.f32.mxu0 0.0
      %3269 = vmatmul.mubr.f32.gmra.mrb[0].mxu0 %v1301
      %v3270 = vpop.f32.mrb[0].mxu0
      %v3271 = vadd.f32 0.0, %v3270
      %v3272 = vpop.f32.mrb[0].mxu0
      %3273 = vmatprep.mubr.f32.mxu0 0.0
      %3274 = vmatmul.mubr.f32.gmra.mrb[0].mxu0 %v1303
      %v3275 = vpop.f32.mrb[0].mxu0
      %v3276 = vadd.f32 0.0, %v3275
      %v3277 = vpop.f32.mrb[0].mxu0
      %3278 = vmatprep.mubr.f32.mxu0 0.0
      %3279 = vmatmul.mubr.f32.gmra.mrb[0].mxu0 %v1305
      %v3280 = vpop.f32.mrb[0].mxu0
      %v3281 = vadd.f32 0.0, %v3280
      %v3282 = vpop.f32.mrb[0].mxu0
      %3283 = vmatprep.mubr.f32.mxu0 0.0
      %3284 = vmatmul.mubr.f32.gmra.mrb[0].mxu0 %v1307
      %v3285 = vpop.f32.mrb[0].mxu0
      %v3286 = vadd.f32 0.0, %v3285
      %v3287 = vpop.f32.mrb[0].mxu0
      %3288 = vmatprep.mubr.f32.mxu0 0.0
      %3289 = vmatmul.mubr.f32.gmra.mrb[0].mxu0 %v1309
      %v3290 = vpop.f32.mrb[0].mxu0
      %v3291 = vadd.f32 0.0, %v3290
      %v3292 = vpop.f32.mrb[0].mxu0
      %3293 = vmatprep.mubr.f32.mxu0 0.0
      %3294 = vmatmul.mubr.f32.gmra.mrb[0].mxu0 %v1311
      %v3295 = vpop.f32.mrb[0].mxu0
      %v3296 = vadd.f32 0.0, %v3295
      %v3297 = vpop.f32.mrb[0].mxu0
      %3298 = vmatprep.mubr.f32.mxu0 0.0
      %3299 = vmatmul.mubr.f32.gmra.mrb[0].mxu0 %v1313
      %v3300 = vpop.f32.mrb[0].mxu0
      %v3301 = vadd.f32 0.0, %v3300
      %v3302 = vpop.f32.mrb[0].mxu0
      %3303 = vmatprep.mubr.f32.mxu0 0.0
      %3304 = vmatmul.mubr.f32.gmra.mrb[0].mxu0 %v1315
      %v3305 = vpop.f32.mrb[0].mxu0
      %v3306 = vadd.f32 0.0, %v3305
      %v3307 = vpop.f32.mrb[0].mxu0
      %3308 = vmatprep.mubr.f32.mxu0 0.0
      %3309 = vmatmul.mubr.f32.gmra.mrb[0].mxu0 %v1317
      %v3310 = vpop.f32.mrb[0].mxu0
      %v3311 = vadd.f32 0.0, %v3310
      %v3312 = vpop.f32.mrb[0].mxu0
      %3313 = vmatprep.mubr.f32.mxu0 0.0
      %3314 = vmatmul.mubr.f32.gmra.mrb[0].mxu0 %v1319
      %v3315 = vpop.f32.mrb[0].mxu0
      %v3316 = vadd.f32 0.0, %v3315
      %v3317 = vpop.f32.mrb[0].mxu0
      %3318 = vmatprep.mubr.f32.mxu0 0.0
      %3319 = vmatmul.mubr.f32.gmra.mrb[0].mxu0 %v1321
      %v3320 = vpop.f32.mrb[0].mxu0
      %v3321 = vadd.f32 0.0, %v3320
      %v3322 = vpop.f32.mrb[0].mxu0
      %3323 = vmatprep.mubr.f32.mxu0 0.0
      %3324 = vmatmul.mubr.f32.gmra.mrb[0].mxu0 %v1787
      %v3325 = vpop.f32.mrb[0].mxu0
      %v3326 = vadd.f32 0.0, %v3325
      %v3327 = vpop.f32.mrb[0].mxu0
      %3328 = vmatprep.mubr.f32.mxu0 0.0
      %3329 = vmatmul.mubr.f32.gmra.mrb[0].mxu0 %v1789
      %v3330 = vpop.f32.mrb[0].mxu0
      %v3331 = vadd.f32 0.0, %v3330
      %v3332 = vpop.f32.mrb[0].mxu0
      %3333 = vmatprep.mubr.f32.mxu0 0.0
      %3334 = vmatmul.mubr.f32.gmra.mrb[0].mxu0 %v3192
      %v3335 = vpop.f32.mrb[0].mxu0
      %v3336 = vadd.f32 0.0, %v3335
      %v3337 = vpop.f32.mrb[0].mxu0
      %3338 = vmatprep.mubr.f32.mxu0 0.0
      %3339 = vmatmul.mubr.f32.gmra.mrb[0].mxu0 %v3194
      %v3340 = vpop.f32.mrb[0].mxu0
      %v3341 = vadd.f32 0.0, %v3340
      %v3342 = vpop.f32.mrb[0].mxu0
      %3343 = vdwg.mxu0
      %v3344 = vadd.f32 %v3174, %v3266
      %v3345 = vadd.f32 %v3175, %v3271
      %v3346 = vadd.f32 %v3176, %v3276
      %v3347 = vadd.f32 %v3177, %v3281
      %v3348 = vadd.f32 %v3178, %v3286
      %v3349 = vadd.f32 %v3179, %v3291
      %v3350 = vadd.f32 %v3180, %v3296
      %v3351 = vadd.f32 %v3181, %v3301
      %v3352 = vadd.f32 %v3182, %v3306
      %v3353 = vadd.f32 %v3183, %v3311
      %v3354 = vadd.f32 %v3184, %v3316
      %v3355 = vadd.f32 %v3185, %v3321
      %v3356 = vadd.f32 %v3186, %v3326
      %v3357 = vadd.f32 %v3187, %v3331
      %v3358 = vadd.f32 %v3188, %v3336
      %v3359 = vadd.f32 %v3189, %v3341
      %v3360 = vadd.f32 %v3344, %v1269
      %v3361 = vadd.f32 %v3345, %v1269
      %v3362 = vadd.f32 %v3346, %v1269
      %v3363 = vadd.f32 %v3347, %v1269
      %v3364 = vadd.f32 %v3348, %v1269
      %v3365 = vadd.f32 %v3349, %v1269
      %v3366 = vadd.f32 %v3350, %v1269
      %v3367 = vadd.f32 %v3351, %v1269
      %v3368 = vadd.f32 %v3352, %v1269
      %v3369 = vadd.f32 %v3353, %v1269
      %v3370 = vadd.f32 %v3354, %v1269
      %v3371 = vadd.f32 %v3355, %v1269
      %v3372 = vadd.f32 %v3356, %v1269
      %v3373 = vadd.f32 %v3357, %v1269
      %v3374 = vadd.f32 %v3358, %v1269
      %v3375 = vadd.f32 %v3359, %v1269
      %3392 = vrot.lane.b32.xlu0 %v3360, 4
      %v3393 = vpop.permute.xlu0 %3392
      %3394 = vrot.lane.b32.xlu0 %v3361, 4
      %v3395 = vpop.permute.xlu0 %3394
      %3396 = vrot.lane.b32.xlu0 %v3362, 4
      %v3397 = vpop.permute.xlu0 %3396
      %3398 = vrot.lane.b32.xlu0 %v3363, 4
      %v3399 = vpop.permute.xlu0 %3398
      %3400 = vrot.lane.b32.xlu0 %v3364, 4
      %v3401 = vpop.permute.xlu0 %3400
      %3402 = vrot.lane.b32.xlu0 %v3365, 4
      %v3403 = vpop.permute.xlu0 %3402
      %3404 = vrot.lane.b32.xlu0 %v3366, 4
      %v3405 = vpop.permute.xlu0 %3404
      %3406 = vrot.lane.b32.xlu0 %v3367, 4
      %v3407 = vpop.permute.xlu0 %3406
      %3408 = vrot.lane.b32.xlu0 %v3368, 4
      %v3409 = vpop.permute.xlu0 %3408
      %3410 = vrot.lane.b32.xlu0 %v3369, 4
      %v3411 = vpop.permute.xlu0 %3410
      %3412 = vrot.lane.b32.xlu0 %v3370, 4
      %v3413 = vpop.permute.xlu0 %3412
      %3414 = vrot.lane.b32.xlu0 %v3371, 4
      %v3415 = vpop.permute.xlu0 %3414
      %3416 = vrot.lane.b32.xlu0 %v3372, 4
      %v3417 = vpop.permute.xlu0 %3416
      %3418 = vrot.lane.b32.xlu0 %v3373, 4
      %v3419 = vpop.permute.xlu0 %3418
      %3420 = vrot.lane.b32.xlu0 %v3374, 4
      %v3421 = vpop.permute.xlu0 %3420
      %3422 = vrot.lane.b32.xlu0 %v3375, 4
      %v3423 = vpop.permute.xlu0 %3422
      %v3440 = vsel %vm563, %v2708, %v3393
      %v3441 = vsel %vm563, %v2709, %v3395
      %v3442 = vsel %vm563, %v2710, %v3397
      %v3443 = vsel %vm563, %v2711, %v3399
      %v3444 = vsel %vm563, %v2712, %v3401
      %v3445 = vsel %vm563, %v2713, %v3403
      %v3446 = vsel %vm563, %v2714, %v3405
      %v3447 = vsel %vm563, %v2715, %v3407
      %v3448 = vsel %vm563, %v2716, %v3409
      %v3449 = vsel %vm563, %v2717, %v3411
      %v3450 = vsel %vm563, %v2718, %v3413
      %v3451 = vsel %vm563, %v2719, %v3415
      %v3452 = vsel %vm563, %v2720, %v3417
      %v3453 = vsel %vm563, %v2721, %v3419
      %v3454 = vsel %vm563, %v2722, %v3421
      %v3455 = vsel %vm563, %v2723, %v3423
      %s3456 = scalar_lea.vmem %s395, 16
      %3457 = vst.msk [vmem:[%s3456] sm:$0xff] %vm2051, %v3440
      %3458 = vst.msk [vmem:[%s3456 + $0x8] sm:$0xff] %vm2051, %v3441
      %3459 = vst.msk [vmem:[%s3456 + $0x20] sm:$0xff] %vm2051, %v3442
      %3460 = vst.msk [vmem:[%s3456 + $0x28] sm:$0xff] %vm2051, %v3443
      %3461 = vst.msk [vmem:[%s3456 + $0x40] sm:$0xff] %vm2051, %v3444
      %3462 = vst.msk [vmem:[%s3456 + $0x48] sm:$0xff] %vm2051, %v3445
      %3463 = vst.msk [vmem:[%s3456 + $0x60] sm:$0xff] %vm2051, %v3446
      %3464 = vst.msk [vmem:[%s3456 + $0x68] sm:$0xff] %vm2051, %v3447
      %3465 = vst.msk [vmem:[%s3456 + $0x80] sm:$0xff] %vm2051, %v3448
      %3466 = vst.msk [vmem:[%s3456 + $0x88] sm:$0xff] %vm2051, %v3449
      %3467 = vst.msk [vmem:[%s3456 + $0xa0] sm:$0xff] %vm2051, %v3450
      %3468 = vst.msk [vmem:[%s3456 + $0xa8] sm:$0xff] %vm2051, %v3451
      %3469 = vst.msk [vmem:[%s3456 + $0xc0] sm:$0xff] %vm2051, %v3452
      %3470 = vst.msk [vmem:[%s3456 + $0xc8] sm:$0xff] %vm2051, %v3453
      %3471 = vst.msk [vmem:[%s3456 + $0xe0] sm:$0xff] %vm2051, %v3454
      %3472 = vst.msk [vmem:[%s3456 + $0xe8] sm:$0xff] %vm2051, %v3455
      %s3473 = smul.u32 8, %s21
      %p3474 = scmp.lt.s32.totalorder %s20, 1
      %s3475 = scalar_select %p3474, %s20, 1
      %p3476 = scmp.lt.s32.totalorder %s3473, 15
      %s3477 = scalar_select %p3476, %s3473, 15
      %s3478 = smul.addr %s3477, 4
      %s3479 = smul.addr %s3475, 64
      %s3480 = sadd.s32 %s3478, %s3479
      %s3481 = smul.addr %s3480, 8
      %s3482 = scalar_lea.vmem %s5, %s3481
      // Predicated region
      $region41: #{tpu_custom_call.1} parent=39 // pred_check
        %p3483 = pneg %p184
      $region42: #{tpu_custom_call.1} parent=39 // pred_check_branch
        %3485 = sbr.rel (%p3483) target = $region44
      $region43: #{tpu_custom_call.1} parent=39 // pred_region
        %s3486 = smul.u32 8, %s21
      $region44: #{tpu_custom_call.1} parent=39 // pred_fallthru
        _
    $region40: #{tpu_custom_call.1} parent=5 // pred_fallthru
      _
    %p3487 = scmp.le.s32.totalorder 2, %s11
    // Predicated region
    $region45: #{tpu_custom_call.1} parent=5 // pred_check
      %p3488 = pneg %p3487
    $region46: #{tpu_custom_call.1} parent=5 // pred_check_branch
      %3490 = sbr.rel (%p3488) target = $region48
    $region47: #{tpu_custom_call.1} parent=5 // pred_region
      %s3491 = ssub.s32 %s11, 2
      // Predicated region
      $region49: #{tpu_custom_call.1} parent=47 // pred_check
        %p3492 = pneg %p190
      $region50: #{tpu_custom_call.1} parent=47 // pred_check_branch
        %3494 = sbr.rel (%p3492) target = $region52
      $region51: #{tpu_custom_call.1} parent=47 // pred_region
        %s3495 = smul.u32 8, %s23
        %p3496 = scmp.lt.s32.totalorder %s22, 1
        %s3497 = scalar_select %p3496, %s22, 1
        %p3498 = scmp.lt.s32.totalorder %s3495, 15
        %s3499 = scalar_select %p3498, %s3495, 15
        %s3500 = smul.addr %s3499, 4
        %s3501 = smul.addr %s3497, 64
        %s3502 = sadd.s32 %s3500, %s3501
        %s3503 = smul.addr %s3502, 8
        %s3504 = scalar_lea.vmem %s5, %s3503
      $region52: #{tpu_custom_call.1} parent=47 // pred_fallthru
        _
    $region48: #{tpu_custom_call.1} parent=5 // pred_fallthru
      _
  $region6: #{tpu_custom_call.1} parent=0 // loop_footer
    %s15 = sadd.s32 1, %s11
  $region7: #{tpu_custom_call.1} parent=0 // loop_footer_branch
    %10 = sbr.rel target = $region3
  $region8: #{tpu_custom_call.1} parent=0 // loop_exit
    _

</llo_original>
